<compile_context>
chip_gen: v7x
topology: tpu7x:2x2x1
jax: 0.10.0
libtpu: 0.0.40
codegen_flags: <defaults>
</compile_context>

<pallas_src>
import functools

import jax
import jax.numpy as jnp
from jax.experimental import pallas as pl
from jax.experimental.pallas import tpu as pltpu


# 3x3 neighbourhood offsets, row-major over (kh, kw) -- must match the weight
# flattening order used in the wrapper.
_OFFSETS = tuple((dy, dx) for dy in (-1, 0, 1) for dx in (-1, 0, 1))
_K1 = 16  # conv1 contraction rows: 9 taps + 1 bias row + 6 zero-pad rows


def _make_aux_masks(H, W, N):
    """[9+N, N*H*W]: rows 0..8 = 3x3 zero-padding boundary masks tiled across
    the N modality chunks of the lane axis; rows 9..9+N-1 = per-modality
    segment masks (used for the per-image normalization)."""
    S = H * W
    pix = jnp.arange(S, dtype=jnp.int32)
    row = pix // W
    col = pix % W
    rows = []
    for dy, dx in _OFFSETS:
        valid = ((row + dy >= 0) & (row + dy < H) &
                 (col + dx >= 0) & (col + dx < W))
        rows.append(jnp.tile(valid.astype(jnp.float32), N))
    chunk = jnp.arange(N * S, dtype=jnp.int32) // S
    for n in range(N):
        rows.append((chunk == n).astype(jnp.float32))
    return jnp.stack(rows, axis=0)


# ----------------------------------------------------------------------------
# Fused Pallas kernel: normalize -> conv3x3+ReLU (MXU) -> fused flow/seg head
# (MXU) -> flow centering + seg softmax.  One batch element per grid step.
# ----------------------------------------------------------------------------
def _fused_dcc_kernel(x_ref, mask_ref, w1_ref, wh_ref, bh_ref,
                      flow_ref, seg_ref, t1_ref, *, H, W, N, C, K1):
    S = H * W
    NS = N * S
    x = x_ref[0]                                        # [1, NS], lane-dense

    # --- per-modality spatial normalization (unbiased std, no eps: torch) ---
    xn = jnp.zeros_like(x)
    for n in range(N):
        seg = mask_ref[9 + n]                           # [NS] segment mask
        xm = x * seg
        mu = jnp.sum(xm, axis=1, keepdims=True) * (1.0 / S)
        d = xm - mu * seg                               # zero off-segment
        var = jnp.sum(d * d, axis=1, keepdims=True) * (1.0 / (S - 1))
        xn = xn + d * jax.lax.rsqrt(var)

    # --- conv1 input taps -> VMEM scratch [K1, NS] ---------------------------
    # Circular lane rolls + per-pixel boundary masks == per-modality zero-padded
    # 3x3 neighbourhoods (all cross-chunk leaks are masked positions).
    for k, (dy, dx) in enumerate(_OFFSETS):
        off = dy * W + dx
        t = xn if off == 0 else pltpu.roll(xn, shift=(-off) % NS, axis=1)
        t1_ref[pl.ds(k, 1), :] = t * mask_ref[k]
    t1_ref[pl.ds(9, 1), :] = jnp.ones((1, NS), jnp.float32)          # bias row
    t1_ref[pl.ds(10, K1 - 10), :] = jnp.zeros((K1 - 10, NS), jnp.float32)

    # --- conv1 (1 -> F) + bias + ReLU: one MXU matmul ------------------------
    h = jnp.maximum(
        jnp.dot(w1_ref[...], t1_ref[...], preferred_element_type=jnp.float32),
        0.0)                                            # [F, NS]

    # --- fused flow + seg head (F -> 2+C, padded to 8 rows): 9 accumulating
    #     MXU matmuls; roll -> mask -> matmul -> drop keeps the live set small.
    bh = bh_ref[...]                                    # [8, 1]
    acc = jnp.broadcast_to(bh, (bh.shape[0], NS))       # bias-initialized [8, NS]
    for k, (dy, dx) in enumerate(_OFFSETS):
        off = dy * W + dx
        th = h if off == 0 else pltpu.roll(h, shift=(-off) % NS, axis=1)
        th = th * mask_ref[k]                           # [F, NS]
        acc = acc + jnp.dot(wh_ref[k], th, preferred_element_type=jnp.float32)

    # --- flow centering across the N modality chunks (circular rolls by n*S) -
    flow = acc[0:2]                                     # [2, NS]
    fsum = flow
    for n in range(1, N):
        fsum = fsum + pltpu.roll(flow, shift=n * S, axis=1)
    flow_ref[0] = flow - fsum * (1.0 / N)               # full-block lane-dense store

    # --- seg softmax over classes (exact division, parity with torch) --------
    logits = acc[2:2 + C]                               # [C, NS]
    m = jnp.max(logits, axis=0, keepdims=True)
    p = jnp.exp(logits - m)
    seg_ref[0] = p / jnp.sum(p, axis=0, keepdims=True)  # full-block store


def fused_dcc_forward(x_flat, aux_masks, w1p, whp, bh8, *, H, W, N, C):
    """x_flat: [B, 1, N*H*W] f32 -> (flows [B,2,N*S], seg_probs [B,C,N*S])."""
    B = x_flat.shape[0]
    NS = N * H * W
    F, K1 = w1p.shape
    OUT8 = whp.shape[1]
    kernel = functools.partial(_fused_dcc_kernel, H=H, W=W, N=N, C=C, K1=K1)
    flows, segs = pl.pallas_call(
        kernel,
        out_shape=(jax.ShapeDtypeStruct((B, 2, NS), jnp.float32),
                   jax.ShapeDtypeStruct((B, C, NS), jnp.float32)),
        grid=(B,),
        in_specs=[
            pl.BlockSpec((1, 1, NS), lambda b: (b, 0, 0)),        # x
            pl.BlockSpec((9 + N, NS), lambda b: (0, 0)),          # boundary+segment masks
            pl.BlockSpec((F, K1), lambda b: (0, 0)),              # conv1 weights (+bias col)
            pl.BlockSpec((9, OUT8, F), lambda b: (0, 0, 0)),      # head weights per tap
            pl.BlockSpec((OUT8, 1), lambda b: (0, 0)),            # head biases
        ],
        out_specs=(pl.BlockSpec((1, 2, NS), lambda b: (b, 0, 0)),
                   pl.BlockSpec((1, C, NS), lambda b: (b, 0, 0))),
        scratch_shapes=[pltpu.VMEM((K1, NS), jnp.float32)],       # conv1 tap stack
        compiler_params=pltpu.CompilerParams(
            dimension_semantics=("parallel",)),                   # B=2 -> both v7x TCs
    )(x_flat, aux_masks, w1p, whp, bh8)
    return flows, segs


# ----------------------------------------------------------------------------
# SpatialTransformer (bilinear, padding_mode='zeros', pixel-unit displacement).
# TODO(synk): data-dependent bilinear gather has no clean Pallas TPU equivalent
# at this size; kept in plain JAX but under the same jit as the kernel.
# TODO(synk): flow channel convention assumed flow[:,0]=dH, flow[:,1]=dW; the
# original SpatialTransformer source is unavailable to verify (x,y) ordering.
# ----------------------------------------------------------------------------
def bilinear_warp(img, flow):
    """img: [B, C, H, W]; flow: [B, 2, H, W]."""
    B, C, H, W = img.shape
    gy, gx = jnp.meshgrid(jnp.arange(H, dtype=flow.dtype),
                          jnp.arange(W, dtype=flow.dtype), indexing="ij")
    y = gy[None] + flow[:, 0]
    x = gx[None] + flow[:, 1]
    y0 = jnp.floor(y)
    x0 = jnp.floor(x)
    flat = img.reshape(B, C, H * W)

    def gather(yc, xc):
        valid = ((yc >= 0) & (yc <= H - 1) & (xc >= 0) & (xc <= W - 1)).astype(img.dtype)
        yi = jnp.clip(yc, 0, H - 1).astype(jnp.int32)
        xi = jnp.clip(xc, 0, W - 1).astype(jnp.int32)
        idx = (yi * W + xi).reshape(B, 1, H * W)
        g = jnp.take_along_axis(flat, jnp.broadcast_to(idx, (B, C, H * W)), axis=-1)
        return g.reshape(B, C, H, W) * valid[:, None]

    wy1 = (y - y0)[:, None]
    wy0 = 1.0 - wy1
    wx1 = (x - x0)[:, None]
    wx0 = 1.0 - wx1
    return (wy0 * wx0 * gather(y0, x0)
            + wy0 * wx1 * gather(y0, x0 + 1.0)
            + wy1 * wx0 * gather(y0 + 1.0, x0)
            + wy1 * wx1 * gather(y0 + 1.0, x0 + 1.0))


# ----------------------------------------------------------------------------
# Model
# ----------------------------------------------------------------------------
class XCoRegDCCModelPallas:
    def __init__(self, num_classes=4, init_features=8, img_size=(16, 16),
                 modalities=("DE", "C0", "T2"), dimension=2, seed=0):
        self.num_classes = num_classes
        self.dimension = dimension
        self.img_size = list(img_size)
        self.modalities = modalities
        self.num_subjects = len(modalities)
        self.init_features = init_features

        H, W = self.img_size
        N = self.num_subjects
        F = init_features
        C = num_classes
        key = jax.random.PRNGKey(seed)
        k1, k2, k3 = jax.random.split(key, 3)
        # Deterministic surrogate-DCCNet parameters (shared across modalities).
        self.w1 = (0.3 / jnp.sqrt(9.0)) * jax.random.normal(k1, (F, 1, 3, 3), jnp.float32)
        self.b1 = jnp.zeros((F,), jnp.float32)
        self.w_flow = (0.05 / jnp.sqrt(9.0 * F)) * jax.random.normal(k2, (2, F, 3, 3), jnp.float32)
        self.b_flow = jnp.zeros((2,), jnp.float32)
        self.w_seg = (1.0 / jnp.sqrt(9.0 * F)) * jax.random.normal(k3, (C, F, 3, 3), jnp.float32)
        self.b_seg = jnp.zeros((C,), jnp.float32)

        # MXU-friendly packed parameters.
        # conv1: [F, 16] = [9 taps | bias col | zero pad]  (K multiple of 8)
        self.w1p = jnp.concatenate(
            [self.w1.reshape(F, 9), self.b1[:, None],
             jnp.zeros((F, _K1 - 10), jnp.float32)], axis=1)
        # head: out channels (2 flow + C seg) padded to a multiple of 8 rows.
        out8 = -(-(2 + C) // 8) * 8
        w_head = jnp.concatenate([self.w_flow, self.w_seg], axis=0)       # [2+C, F, 3, 3]
        w_head8 = jnp.concatenate(
            [w_head, jnp.zeros((out8 - (2 + C), F, 3, 3), jnp.float32)], axis=0)
        self.whp = jnp.transpose(w_head8.reshape(out8, F, 9), (2, 0, 1))  # [9, out8, F]
        self.bh8 = jnp.concatenate(
            [self.b_flow, self.b_seg,
             jnp.zeros((out8 - (2 + C),), jnp.float32)]).reshape(out8, 1)
        self.aux_masks = _make_aux_masks(H, W, N)                         # [9+N, N*H*W]

        self._forward_jit = self._build_forward()
        self._init_warp_jit = jax.jit(self._apply_init_flows)

    # ------------------------------------------------------------------ #
    def _build_forward(self):
        H, W = self.img_size
        N, C = self.num_subjects, self.num_classes
        S = H * W
        aux, w1p, whp, bh8 = self.aux_masks, self.w1p, self.whp, self.bh8

        def fwd(x_stacked):                       # raw images [B, N, 1, H, W]
            B = x_stacked.shape[0]
            x_flat = x_stacked.reshape(B, 1, N * S)          # modality chunks on lanes
            flows_f, segs_f = fused_dcc_forward(
                x_flat, aux, w1p, whp, bh8, H=H, W=W, N=N, C=C)
            flows = flows_f.reshape(B, 2, N, H, W).transpose(0, 2, 1, 3, 4)
            segs = segs_f.reshape(B, C, N, H, W).transpose(0, 2, 1, 3, 4)
            imgs = x_stacked.reshape(B * N, 1, H, W)
            warped = bilinear_warp(imgs, flows.reshape(B * N, 2, H, W))
            warped = warped.reshape(B, N, 1, H, W)
            return warped, flows, segs

        return jax.jit(fwd)

    def _apply_init_flows(self, x_stacked, init_flows):
        H, W = self.img_size
        B, N = x_stacked.shape[0], x_stacked.shape[1]
        w = bilinear_warp(x_stacked.reshape(B * N, 1, H, W),
                          init_flows.reshape(B * N, 2, H, W))
        return w.reshape(B, N, 1, H, W)

    # ------------------------------------------------------------------ #
    def forward(self, images, init_flows=None):
        """images: list of num_subjects arrays [B, 1, H, W]."""
        self.init_flows = init_flows
        x = jnp.stack(images, axis=1)                        # [B, N, 1, H, W]
        if init_flows is not None:
            x = self._init_warp_jit(x, init_flows)
        self.images = [x[:, i] for i in range(self.num_subjects)]

        warped, self.flows, self.seg_probs = self._forward_jit(x)
        self.warped_images = [warped[:, i] for i in range(self.num_subjects)]
        return self.warped_images

    __call__ = forward


if __name__ == "__main__":
    B, H, W = 2, 16, 16
    model = XCoRegDCCModelPallas(num_classes=4, init_features=8, img_size=(H, W))

    key = jax.random.PRNGKey(0)
    keys = jax.random.split(key, model.num_subjects)
    images = [jax.random.normal(keys[i], (B, 1, H, W), jnp.float32)
              for i in range(model.num_subjects)]

    warped = model(images)
    jax.block_until_ready(warped)

    assert len(warped) == model.num_subjects
    assert warped[0].shape == (B, 1, H, W)
    assert model.flows.shape == (B, model.num_subjects, 2, H, W)
    assert model.seg_probs.shape == (B, model.num_subjects, model.num_classes, H, W)
    # flows are centered across the modality dim
    assert float(jnp.max(jnp.abs(jnp.mean(model.flows, axis=1)))) < 1e-4
    # seg probabilities sum to 1 (exact-division softmax)
    assert float(jnp.max(jnp.abs(jnp.sum(model.seg_probs, axis=2) - 1.0))) < 1e-4
    # everything finite
    assert bool(jnp.all(jnp.isfinite(model.seg_probs)))
    assert bool(jnp.all(jnp.isfinite(warped[0])))
    print("KERNEL_OK")
</pallas_src>

<mosaic_0001>
module attributes {stable_mosaic.version = 11 : i64} {
  func.func private @main(%arg0: i32) attributes {dimension_semantics = [#tpu.dimension_semantics<core_parallel>], iteration_bounds = array<i64: 2>, tpu.core_type = #tpu.core_type<sc_scalar_subcore>, window_params = []} {
    return
  }
}

module attributes {stable_mosaic.version = 11 : i64} {
  func.func private @main(%arg0: i32) attributes {dimension_semantics = [#tpu.dimension_semantics<core_parallel>], iteration_bounds = array<i64: 2>, tpu.core_type = #tpu.core_type<sc_scalar_subcore>, window_params = []} {
    return
  }
}

module attributes {stable_mosaic.version = 11 : i64} {
  func.func @_fused_dcc_kernel(%arg0: i32, %arg1: memref<1x1x768xf32, #tpu.memory_space<vmem>>, %arg2: memref<12x768xf32, #tpu.memory_space<vmem>>, %arg3: memref<8x16xf32, #tpu.memory_space<vmem>>, %arg4: memref<9x8x8xf32, #tpu.memory_space<vmem>>, %arg5: memref<8x1xf32, #tpu.memory_space<vmem>>, %arg6: memref<1x2x768xf32, #tpu.memory_space<vmem>>, %arg7: memref<1x4x768xf32, #tpu.memory_space<vmem>>, %arg8: memref<16x768xf32, #tpu.memory_space<vmem>>) attributes {dimension_semantics = [#tpu.dimension_semantics<parallel>], iteration_bounds = array<i64: 2>, scalar_prefetch = 0 : i64, scratch_operands = 1 : i64, tpu.core_type = #tpu.core_type<tc>, window_params = [{transform_indices = @transform_0, window_bounds = array<i64: 1, 1, 768>}, {pipeline_mode = #tpu.pipeline_mode<synchronous>, transform_indices = @transform_1, window_bounds = array<i64: 12, 768>}, {pipeline_mode = #tpu.pipeline_mode<synchronous>, transform_indices = @transform_2, window_bounds = array<i64: 8, 16>}, {pipeline_mode = #tpu.pipeline_mode<synchronous>, transform_indices = @transform_3, window_bounds = array<i64: 9, 8, 8>}, {pipeline_mode = #tpu.pipeline_mode<synchronous>, transform_indices = @transform_4, window_bounds = array<i64: 8, 1>}, {transform_indices = @transform_5, window_bounds = array<i64: 1, 2, 768>}, {transform_indices = @transform_6, window_bounds = array<i64: 1, 4, 768>}]} {
    %c0 = arith.constant 0 : index
    %c0_0 = arith.constant 0 : index
    %c0_1 = arith.constant 0 : index
    %0 = vector.load %arg1[%c0, %c0_0, %c0_1] : memref<1x1x768xf32, #tpu.memory_space<vmem>>, vector<1x1x768xf32>
    %1 = vector.shape_cast %0 : vector<1x1x768xf32> to vector<1x768xf32>
    %cst = arith.constant 0.000000e+00 : f32
    %2 = vector.broadcast %cst : f32 to vector<1x768xf32>
    %c9 = arith.constant 9 : index
    %c0_2 = arith.constant 0 : index
    %3 = vector.load %arg2[%c9, %c0_2] : memref<12x768xf32, #tpu.memory_space<vmem>>, vector<1x768xf32>
    %4 = vector.shape_cast %3 : vector<1x768xf32> to vector<768xf32>
    %5 = vector.shape_cast %4 : vector<768xf32> to vector<1x768xf32>
    %6 = arith.mulf %1, %5 : vector<1x768xf32>
    %cst_3 = arith.constant dense<0.000000e+00> : vector<1xf32>
    %7 = vector.multi_reduction <add>, %6, %cst_3 [1] : vector<1x768xf32> to vector<1xf32>
    %8 = vector.shape_cast %7 : vector<1xf32> to vector<1x1xf32>
    %cst_4 = arith.constant 3.906250e-03 : f32
    %9 = vector.broadcast %cst_4 : f32 to vector<1x1xf32>
    %10 = arith.mulf %8, %9 : vector<1x1xf32>
    %11 = vector.shape_cast %4 : vector<768xf32> to vector<1x768xf32>
    %12 = vector.broadcast %10 : vector<1x1xf32> to vector<1x768xf32>
    %13 = arith.mulf %12, %11 : vector<1x768xf32>
    %14 = arith.subf %6, %13 : vector<1x768xf32>
    %15 = arith.mulf %14, %14 : vector<1x768xf32>
    %cst_5 = arith.constant dense<0.000000e+00> : vector<1xf32>
    %16 = vector.multi_reduction <add>, %15, %cst_5 [1] : vector<1x768xf32> to vector<1xf32>
    %17 = vector.shape_cast %16 : vector<1xf32> to vector<1x1xf32>
    %cst_6 = arith.constant 0.00392156886 : f32
    %18 = vector.broadcast %cst_6 : f32 to vector<1x1xf32>
    %19 = arith.mulf %17, %18 : vector<1x1xf32>
    %20 = math.rsqrt %19 : vector<1x1xf32>
    %21 = vector.broadcast %20 : vector<1x1xf32> to vector<1x768xf32>
    %22 = arith.mulf %14, %21 : vector<1x768xf32>
    %23 = arith.addf %2, %22 : vector<1x768xf32>
    %c10 = arith.constant 10 : index
    %c0_7 = arith.constant 0 : index
    %24 = vector.load %arg2[%c10, %c0_7] : memref<12x768xf32, #tpu.memory_space<vmem>>, vector<1x768xf32>
    %25 = vector.shape_cast %24 : vector<1x768xf32> to vector<768xf32>
    %26 = vector.shape_cast %25 : vector<768xf32> to vector<1x768xf32>
    %27 = arith.mulf %1, %26 : vector<1x768xf32>
    %cst_8 = arith.constant dense<0.000000e+00> : vector<1xf32>
    %28 = vector.multi_reduction <add>, %27, %cst_8 [1] : vector<1x768xf32> to vector<1xf32>
    %29 = vector.shape_cast %28 : vector<1xf32> to vector<1x1xf32>
    %cst_9 = arith.constant 3.906250e-03 : f32
    %30 = vector.broadcast %cst_9 : f32 to vector<1x1xf32>
    %31 = arith.mulf %29, %30 : vector<1x1xf32>
    %32 = vector.shape_cast %25 : vector<768xf32> to vector<1x768xf32>
    %33 = vector.broadcast %31 : vector<1x1xf32> to vector<1x768xf32>
    %34 = arith.mulf %33, %32 : vector<1x768xf32>
    %35 = arith.subf %27, %34 : vector<1x768xf32>
    %36 = arith.mulf %35, %35 : vector<1x768xf32>
    %cst_10 = arith.constant dense<0.000000e+00> : vector<1xf32>
    %37 = vector.multi_reduction <add>, %36, %cst_10 [1] : vector<1x768xf32> to vector<1xf32>
    %38 = vector.shape_cast %37 : vector<1xf32> to vector<1x1xf32>
    %cst_11 = arith.constant 0.00392156886 : f32
    %39 = vector.broadcast %cst_11 : f32 to vector<1x1xf32>
    %40 = arith.mulf %38, %39 : vector<1x1xf32>
    %41 = math.rsqrt %40 : vector<1x1xf32>
    %42 = vector.broadcast %41 : vector<1x1xf32> to vector<1x768xf32>
    %43 = arith.mulf %35, %42 : vector<1x768xf32>
    %44 = arith.addf %23, %43 : vector<1x768xf32>
    %c11 = arith.constant 11 : index
    %c0_12 = arith.constant 0 : index
    %45 = vector.load %arg2[%c11, %c0_12] : memref<12x768xf32, #tpu.memory_space<vmem>>, vector<1x768xf32>
    %46 = vector.shape_cast %45 : vector<1x768xf32> to vector<768xf32>
    %47 = vector.shape_cast %46 : vector<768xf32> to vector<1x768xf32>
    %48 = arith.mulf %1, %47 : vector<1x768xf32>
    %cst_13 = arith.constant dense<0.000000e+00> : vector<1xf32>
    %49 = vector.multi_reduction <add>, %48, %cst_13 [1] : vector<1x768xf32> to vector<1xf32>
    %50 = vector.shape_cast %49 : vector<1xf32> to vector<1x1xf32>
    %cst_14 = arith.constant 3.906250e-03 : f32
    %51 = vector.broadcast %cst_14 : f32 to vector<1x1xf32>
    %52 = arith.mulf %50, %51 : vector<1x1xf32>
    %53 = vector.shape_cast %46 : vector<768xf32> to vector<1x768xf32>
    %54 = vector.broadcast %52 : vector<1x1xf32> to vector<1x768xf32>
    %55 = arith.mulf %54, %53 : vector<1x768xf32>
    %56 = arith.subf %48, %55 : vector<1x768xf32>
    %57 = arith.mulf %56, %56 : vector<1x768xf32>
    %cst_15 = arith.constant dense<0.000000e+00> : vector<1xf32>
    %58 = vector.multi_reduction <add>, %57, %cst_15 [1] : vector<1x768xf32> to vector<1xf32>
    %59 = vector.shape_cast %58 : vector<1xf32> to vector<1x1xf32>
    %cst_16 = arith.constant 0.00392156886 : f32
    %60 = vector.broadcast %cst_16 : f32 to vector<1x1xf32>
    %61 = arith.mulf %59, %60 : vector<1x1xf32>
    %62 = math.rsqrt %61 : vector<1x1xf32>
    %63 = vector.broadcast %62 : vector<1x1xf32> to vector<1x768xf32>
    %64 = arith.mulf %56, %63 : vector<1x768xf32>
    %65 = arith.addf %44, %64 : vector<1x768xf32>
    %c17_i32 = arith.constant 17 : i32
    %66 = tpu.dynamic_rotate %65 by %c17_i32 dim 1 : vector<1x768xf32>, i32 -> vector<1x768xf32>
    %c0_17 = arith.constant 0 : index
    %c0_18 = arith.constant 0 : index
    %67 = vector.load %arg2[%c0_17, %c0_18] : memref<12x768xf32, #tpu.memory_space<vmem>>, vector<1x768xf32>
    %68 = vector.shape_cast %67 : vector<1x768xf32> to vector<768xf32>
    %69 = vector.shape_cast %68 : vector<768xf32> to vector<1x768xf32>
    %70 = arith.mulf %66, %69 : vector<1x768xf32>
    %c0_19 = arith.constant 0 : index
    %c0_20 = arith.constant 0 : index
    %71 = vector.load %arg8[%c0_19, %c0_20] : memref<16x768xf32, #tpu.memory_space<vmem>>, vector<1x768xf32>
    tpu.vector_store %arg8[%c0_19, %c0_20], %70 {strides = array<i32>} : memref<16x768xf32, #tpu.memory_space<vmem>>, vector<1x768xf32>,
    %c16_i32 = arith.constant 16 : i32
    %72 = tpu.dynamic_rotate %65 by %c16_i32 dim 1 : vector<1x768xf32>, i32 -> vector<1x768xf32>
    %c1 = arith.constant 1 : index
    %c0_21 = arith.constant 0 : index
    %73 = vector.load %arg2[%c1, %c0_21] : memref<12x768xf32, #tpu.memory_space<vmem>>, vector<1x768xf32>
    %74 = vector.shape_cast %73 : vector<1x768xf32> to vector<768xf32>
    %75 = vector.shape_cast %74 : vector<768xf32> to vector<1x768xf32>
    %76 = arith.mulf %72, %75 : vector<1x768xf32>
    %c1_22 = arith.constant 1 : index
    %c0_23 = arith.constant 0 : index
    %77 = vector.load %arg8[%c1_22, %c0_23] : memref<16x768xf32, #tpu.memory_space<vmem>>, vector<1x768xf32>
    tpu.vector_store %arg8[%c1_22, %c0_23], %76 {strides = array<i32>} : memref<16x768xf32, #tpu.memory_space<vmem>>, vector<1x768xf32>,
    %c15_i32 = arith.constant 15 : i32
    %78 = tpu.dynamic_rotate %65 by %c15_i32 dim 1 : vector<1x768xf32>, i32 -> vector<1x768xf32>
    %c2 = arith.constant 2 : index
    %c0_24 = arith.constant 0 : index
    %79 = vector.load %arg2[%c2, %c0_24] : memref<12x768xf32, #tpu.memory_space<vmem>>, vector<1x768xf32>
    %80 = vector.shape_cast %79 : vector<1x768xf32> to vector<768xf32>
    %81 = vector.shape_cast %80 : vector<768xf32> to vector<1x768xf32>
    %82 = arith.mulf %78, %81 : vector<1x768xf32>
    %c2_25 = arith.constant 2 : index
    %c0_26 = arith.constant 0 : index
    %83 = vector.load %arg8[%c2_25, %c0_26] : memref<16x768xf32, #tpu.memory_space<vmem>>, vector<1x768xf32>
    tpu.vector_store %arg8[%c2_25, %c0_26], %82 {strides = array<i32>} : memref<16x768xf32, #tpu.memory_space<vmem>>, vector<1x768xf32>,
    %c1_i32 = arith.constant 1 : i32
    %84 = tpu.dynamic_rotate %65 by %c1_i32 dim 1 : vector<1x768xf32>, i32 -> vector<1x768xf32>
    %c3 = arith.constant 3 : index
    %c0_27 = arith.constant 0 : index
    %85 = vector.load %arg2[%c3, %c0_27] : memref<12x768xf32, #tpu.memory_space<vmem>>, vector<1x768xf32>
    %86 = vector.shape_cast %85 : vector<1x768xf32> to vector<768xf32>
    %87 = vector.shape_cast %86 : vector<768xf32> to vector<1x768xf32>
    %88 = arith.mulf %84, %87 : vector<1x768xf32>
    %c3_28 = arith.constant 3 : index
    %c0_29 = arith.constant 0 : index
    %89 = vector.load %arg8[%c3_28, %c0_29] : memref<16x768xf32, #tpu.memory_space<vmem>>, vector<1x768xf32>
    tpu.vector_store %arg8[%c3_28, %c0_29], %88 {strides = array<i32>} : memref<16x768xf32, #tpu.memory_space<vmem>>, vector<1x768xf32>,
    %c4 = arith.constant 4 : index
    %c0_30 = arith.constant 0 : index
    %90 = vector.load %arg2[%c4, %c0_30] : memref<12x768xf32, #tpu.memory_space<vmem>>, vector<1x768xf32>
    %91 = vector.shape_cast %90 : vector<1x768xf32> to vector<768xf32>
    %92 = vector.shape_cast %91 : vector<768xf32> to vector<1x768xf32>
    %93 = arith.mulf %65, %92 : vector<1x768xf32>
    %c4_31 = arith.constant 4 : index
    %c0_32 = arith.constant 0 : index
    %94 = vector.load %arg8[%c4_31, %c0_32] : memref<16x768xf32, #tpu.memory_space<vmem>>, vector<1x768xf32>
    tpu.vector_store %arg8[%c4_31, %c0_32], %93 {strides = array<i32>} : memref<16x768xf32, #tpu.memory_space<vmem>>, vector<1x768xf32>,
    %c767_i32 = arith.constant 767 : i32
    %95 = tpu.dynamic_rotate %65 by %c767_i32 dim 1 : vector<1x768xf32>, i32 -> vector<1x768xf32>
    %c5 = arith.constant 5 : index
    %c0_33 = arith.constant 0 : index
    %96 = vector.load %arg2[%c5, %c0_33] : memref<12x768xf32, #tpu.memory_space<vmem>>, vector<1x768xf32>
    %97 = vector.shape_cast %96 : vector<1x768xf32> to vector<768xf32>
    %98 = vector.shape_cast %97 : vector<768xf32> to vector<1x768xf32>
    %99 = arith.mulf %95, %98 : vector<1x768xf32>
    %c5_34 = arith.constant 5 : index
    %c0_35 = arith.constant 0 : index
    %100 = vector.load %arg8[%c5_34, %c0_35] : memref<16x768xf32, #tpu.memory_space<vmem>>, vector<1x768xf32>
    tpu.vector_store %arg8[%c5_34, %c0_35], %99 {strides = array<i32>} : memref<16x768xf32, #tpu.memory_space<vmem>>, vector<1x768xf32>,
    %c753_i32 = arith.constant 753 : i32
    %101 = tpu.dynamic_rotate %65 by %c753_i32 dim 1 : vector<1x768xf32>, i32 -> vector<1x768xf32>
    %c6 = arith.constant 6 : index
    %c0_36 = arith.constant 0 : index
    %102 = vector.load %arg2[%c6, %c0_36] : memref<12x768xf32, #tpu.memory_space<vmem>>, vector<1x768xf32>
    %103 = vector.shape_cast %102 : vector<1x768xf32> to vector<768xf32>
    %104 = vector.shape_cast %103 : vector<768xf32> to vector<1x768xf32>
    %105 = arith.mulf %101, %104 : vector<1x768xf32>
    %c6_37 = arith.constant 6 : index
    %c0_38 = arith.constant 0 : index
    %106 = vector.load %arg8[%c6_37, %c0_38] : memref<16x768xf32, #tpu.memory_space<vmem>>, vector<1x768xf32>
    tpu.vector_store %arg8[%c6_37, %c0_38], %105 {strides = array<i32>} : memref<16x768xf32, #tpu.memory_space<vmem>>, vector<1x768xf32>,
    %c752_i32 = arith.constant 752 : i32
    %107 = tpu.dynamic_rotate %65 by %c752_i32 dim 1 : vector<1x768xf32>, i32 -> vector<1x768xf32>
    %c7 = arith.constant 7 : index
    %c0_39 = arith.constant 0 : index
    %108 = vector.load %arg2[%c7, %c0_39] : memref<12x768xf32, #tpu.memory_space<vmem>>, vector<1x768xf32>
    %109 = vector.shape_cast %108 : vector<1x768xf32> to vector<768xf32>
    %110 = vector.shape_cast %109 : vector<768xf32> to vector<1x768xf32>
    %111 = arith.mulf %107, %110 : vector<1x768xf32>
    %c7_40 = arith.constant 7 : index
    %c0_41 = arith.constant 0 : index
    %112 = vector.load %arg8[%c7_40, %c0_41] : memref<16x768xf32, #tpu.memory_space<vmem>>, vector<1x768xf32>
    tpu.vector_store %arg8[%c7_40, %c0_41], %111 {strides = array<i32>} : memref<16x768xf32, #tpu.memory_space<vmem>>, vector<1x768xf32>,
    %c751_i32 = arith.constant 751 : i32
    %113 = tpu.dynamic_rotate %65 by %c751_i32 dim 1 : vector<1x768xf32>, i32 -> vector<1x768xf32>
    %c8 = arith.constant 8 : index
    %c0_42 = arith.constant 0 : index
    %114 = vector.load %arg2[%c8, %c0_42] : memref<12x768xf32, #tpu.memory_space<vmem>>, vector<1x768xf32>
    %115 = vector.shape_cast %114 : vector<1x768xf32> to vector<768xf32>
    %116 = vector.shape_cast %115 : vector<768xf32> to vector<1x768xf32>
    %117 = arith.mulf %113, %116 : vector<1x768xf32>
    %c8_43 = arith.constant 8 : index
    %c0_44 = arith.constant 0 : index
    %118 = vector.load %arg8[%c8_43, %c0_44] : memref<16x768xf32, #tpu.memory_space<vmem>>, vector<1x768xf32>
    tpu.vector_store %arg8[%c8_43, %c0_44], %117 {strides = array<i32>} : memref<16x768xf32, #tpu.memory_space<vmem>>, vector<1x768xf32>,
    %cst_45 = arith.constant 1.000000e+00 : f32
    %119 = vector.broadcast %cst_45 : f32 to vector<1x768xf32>
    %c9_46 = arith.constant 9 : index
    %c0_47 = arith.constant 0 : index
    %120 = vector.load %arg8[%c9_46, %c0_47] : memref<16x768xf32, #tpu.memory_space<vmem>>, vector<1x768xf32>
    tpu.vector_store %arg8[%c9_46, %c0_47], %119 {strides = array<i32>} : memref<16x768xf32, #tpu.memory_space<vmem>>, vector<1x768xf32>,
    %cst_48 = arith.constant 0.000000e+00 : f32
    %121 = vector.broadcast %cst_48 : f32 to vector<6x768xf32>
    %c10_49 = arith.constant 10 : index
    %c0_50 = arith.constant 0 : index
    %122 = vector.load %arg8[%c10_49, %c0_50] : memref<16x768xf32, #tpu.memory_space<vmem>>, vector<6x768xf32>
    tpu.vector_store %arg8[%c10_49, %c0_50], %121 {strides = array<i32>} : memref<16x768xf32, #tpu.memory_space<vmem>>, vector<6x768xf32>,
    %c0_51 = arith.constant 0 : index
    %c0_52 = arith.constant 0 : index
    %123 = vector.load %arg3[%c0_51, %c0_52] : memref<8x16xf32, #tpu.memory_space<vmem>>, vector<8x16xf32>
    %c0_53 = arith.constant 0 : index
    %c0_54 = arith.constant 0 : index
    %124 = vector.load %arg8[%c0_53, %c0_54] : memref<16x768xf32, #tpu.memory_space<vmem>>, vector<16x768xf32>
    %cst_55 = arith.constant dense<0.000000e+00> : vector<8x768xf32>
    %125 = tpu.matmul %123, %124, %cst_55 {dimension_numbers = #tpu.dot_dimension_numbers<[1], [0], [0], [1], [0, 0, 1, 1], [], []>} : vector<8x16xf32>, vector<16x768xf32>, vector<8x768xf32> -> vector<8x768xf32>
    %cst_56 = arith.constant 0.000000e+00 : f32
    %126 = vector.broadcast %cst_56 : f32 to vector<8x768xf32>
    %127 = arith.maximumf %125, %126 : vector<8x768xf32>
    %c0_57 = arith.constant 0 : index
    %c0_58 = arith.constant 0 : index
    %128 = vector.load %arg5[%c0_57, %c0_58] : memref<8x1xf32, #tpu.memory_space<vmem>>, vector<8x1xf32>
    %129 = vector.shape_cast %128 : vector<8x1xf32> to vector<8x1xf32>
    %130 = vector.broadcast %129 : vector<8x1xf32> to vector<8x768xf32>
    %c17_i32_59 = arith.constant 17 : i32
    %131 = tpu.dynamic_rotate %127 by %c17_i32_59 dim 1 : vector<8x768xf32>, i32 -> vector<8x768xf32>
    %c0_60 = arith.constant 0 : index
    %c0_61 = arith.constant 0 : index
    %132 = vector.load %arg2[%c0_60, %c0_61] : memref<12x768xf32, #tpu.memory_space<vmem>>, vector<1x768xf32>
    %133 = vector.shape_cast %132 : vector<1x768xf32> to vector<768xf32>
    %134 = vector.shape_cast %133 : vector<768xf32> to vector<1x768xf32>
    %135 = vector.broadcast %134 : vector<1x768xf32> to vector<8x768xf32>
    %136 = arith.mulf %131, %135 : vector<8x768xf32>
    %c0_62 = arith.constant 0 : index
    %c0_63 = arith.constant 0 : index
    %c0_64 = arith.constant 0 : index
    %137 = vector.load %arg4[%c0_62, %c0_63, %c0_64] : memref<9x8x8xf32, #tpu.memory_space<vmem>>, vector<1x8x8xf32>
    %138 = vector.shape_cast %137 : vector<1x8x8xf32> to vector<8x8xf32>
    %cst_65 = arith.constant dense<0.000000e+00> : vector<8x768xf32>
    %139 = tpu.matmul %138, %136, %cst_65 {dimension_numbers = #tpu.dot_dimension_numbers<[1], [0], [0], [1], [0, 0, 1, 1], [], []>} : vector<8x8xf32>, vector<8x768xf32>, vector<8x768xf32> -> vector<8x768xf32>
    %140 = arith.addf %130, %139 : vector<8x768xf32>
    %c16_i32_66 = arith.constant 16 : i32
    %141 = tpu.dynamic_rotate %127 by %c16_i32_66 dim 1 : vector<8x768xf32>, i32 -> vector<8x768xf32>
    %c1_67 = arith.constant 1 : index
    %c0_68 = arith.constant 0 : index
    %142 = vector.load %arg2[%c1_67, %c0_68] : memref<12x768xf32, #tpu.memory_space<vmem>>, vector<1x768xf32>
    %143 = vector.shape_cast %142 : vector<1x768xf32> to vector<768xf32>
    %144 = vector.shape_cast %143 : vector<768xf32> to vector<1x768xf32>
    %145 = vector.broadcast %144 : vector<1x768xf32> to vector<8x768xf32>
    %146 = arith.mulf %141, %145 : vector<8x768xf32>
    %c1_69 = arith.constant 1 : index
    %c0_70 = arith.constant 0 : index
    %c0_71 = arith.constant 0 : index
    %147 = vector.load %arg4[%c1_69, %c0_70, %c0_71] : memref<9x8x8xf32, #tpu.memory_space<vmem>>, vector<1x8x8xf32>
    %148 = vector.shape_cast %147 : vector<1x8x8xf32> to vector<8x8xf32>
    %cst_72 = arith.constant dense<0.000000e+00> : vector<8x768xf32>
    %149 = tpu.matmul %148, %146, %cst_72 {dimension_numbers = #tpu.dot_dimension_numbers<[1], [0], [0], [1], [0, 0, 1, 1], [], []>} : vector<8x8xf32>, vector<8x768xf32>, vector<8x768xf32> -> vector<8x768xf32>
    %150 = arith.addf %140, %149 : vector<8x768xf32>
    %c15_i32_73 = arith.constant 15 : i32
    %151 = tpu.dynamic_rotate %127 by %c15_i32_73 dim 1 : vector<8x768xf32>, i32 -> vector<8x768xf32>
    %c2_74 = arith.constant 2 : index
    %c0_75 = arith.constant 0 : index
    %152 = vector.load %arg2[%c2_74, %c0_75] : memref<12x768xf32, #tpu.memory_space<vmem>>, vector<1x768xf32>
    %153 = vector.shape_cast %152 : vector<1x768xf32> to vector<768xf32>
    %154 = vector.shape_cast %153 : vector<768xf32> to vector<1x768xf32>
    %155 = vector.broadcast %154 : vector<1x768xf32> to vector<8x768xf32>
    %156 = arith.mulf %151, %155 : vector<8x768xf32>
    %c2_76 = arith.constant 2 : index
    %c0_77 = arith.constant 0 : index
    %c0_78 = arith.constant 0 : index
    %157 = vector.load %arg4[%c2_76, %c0_77, %c0_78] : memref<9x8x8xf32, #tpu.memory_space<vmem>>, vector<1x8x8xf32>
    %158 = vector.shape_cast %157 : vector<1x8x8xf32> to vector<8x8xf32>
    %cst_79 = arith.constant dense<0.000000e+00> : vector<8x768xf32>
    %159 = tpu.matmul %158, %156, %cst_79 {dimension_numbers = #tpu.dot_dimension_numbers<[1], [0], [0], [1], [0, 0, 1, 1], [], []>} : vector<8x8xf32>, vector<8x768xf32>, vector<8x768xf32> -> vector<8x768xf32>
    %160 = arith.addf %150, %159 : vector<8x768xf32>
    %c1_i32_80 = arith.constant 1 : i32
    %161 = tpu.dynamic_rotate %127 by %c1_i32_80 dim 1 : vector<8x768xf32>, i32 -> vector<8x768xf32>
    %c3_81 = arith.constant 3 : index
    %c0_82 = arith.constant 0 : index
    %162 = vector.load %arg2[%c3_81, %c0_82] : memref<12x768xf32, #tpu.memory_space<vmem>>, vector<1x768xf32>
    %163 = vector.shape_cast %162 : vector<1x768xf32> to vector<768xf32>
    %164 = vector.shape_cast %163 : vector<768xf32> to vector<1x768xf32>
    %165 = vector.broadcast %164 : vector<1x768xf32> to vector<8x768xf32>
    %166 = arith.mulf %161, %165 : vector<8x768xf32>
    %c3_83 = arith.constant 3 : index
    %c0_84 = arith.constant 0 : index
    %c0_85 = arith.constant 0 : index
    %167 = vector.load %arg4[%c3_83, %c0_84, %c0_85] : memref<9x8x8xf32, #tpu.memory_space<vmem>>, vector<1x8x8xf32>
    %168 = vector.shape_cast %167 : vector<1x8x8xf32> to vector<8x8xf32>
    %cst_86 = arith.constant dense<0.000000e+00> : vector<8x768xf32>
    %169 = tpu.matmul %168, %166, %cst_86 {dimension_numbers = #tpu.dot_dimension_numbers<[1], [0], [0], [1], [0, 0, 1, 1], [], []>} : vector<8x8xf32>, vector<8x768xf32>, vector<8x768xf32> -> vector<8x768xf32>
    %170 = arith.addf %160, %169 : vector<8x768xf32>
    %c4_87 = arith.constant 4 : index
    %c0_88 = arith.constant 0 : index
    %171 = vector.load %arg2[%c4_87, %c0_88] : memref<12x768xf32, #tpu.memory_space<vmem>>, vector<1x768xf32>
    %172 = vector.shape_cast %171 : vector<1x768xf32> to vector<768xf32>
    %173 = vector.shape_cast %172 : vector<768xf32> to vector<1x768xf32>
    %174 = vector.broadcast %173 : vector<1x768xf32> to vector<8x768xf32>
    %175 = arith.mulf %127, %174 : vector<8x768xf32>
    %c4_89 = arith.constant 4 : index
    %c0_90 = arith.constant 0 : index
    %c0_91 = arith.constant 0 : index
    %176 = vector.load %arg4[%c4_89, %c0_90, %c0_91] : memref<9x8x8xf32, #tpu.memory_space<vmem>>, vector<1x8x8xf32>
    %177 = vector.shape_cast %176 : vector<1x8x8xf32> to vector<8x8xf32>
    %cst_92 = arith.constant dense<0.000000e+00> : vector<8x768xf32>
    %178 = tpu.matmul %177, %175, %cst_92 {dimension_numbers = #tpu.dot_dimension_numbers<[1], [0], [0], [1], [0, 0, 1, 1], [], []>} : vector<8x8xf32>, vector<8x768xf32>, vector<8x768xf32> -> vector<8x768xf32>
    %179 = arith.addf %170, %178 : vector<8x768xf32>
    %c767_i32_93 = arith.constant 767 : i32
    %180 = tpu.dynamic_rotate %127 by %c767_i32_93 dim 1 : vector<8x768xf32>, i32 -> vector<8x768xf32>
    %c5_94 = arith.constant 5 : index
    %c0_95 = arith.constant 0 : index
    %181 = vector.load %arg2[%c5_94, %c0_95] : memref<12x768xf32, #tpu.memory_space<vmem>>, vector<1x768xf32>
    %182 = vector.shape_cast %181 : vector<1x768xf32> to vector<768xf32>
    %183 = vector.shape_cast %182 : vector<768xf32> to vector<1x768xf32>
    %184 = vector.broadcast %183 : vector<1x768xf32> to vector<8x768xf32>
    %185 = arith.mulf %180, %184 : vector<8x768xf32>
    %c5_96 = arith.constant 5 : index
    %c0_97 = arith.constant 0 : index
    %c0_98 = arith.constant 0 : index
    %186 = vector.load %arg4[%c5_96, %c0_97, %c0_98] : memref<9x8x8xf32, #tpu.memory_space<vmem>>, vector<1x8x8xf32>
    %187 = vector.shape_cast %186 : vector<1x8x8xf32> to vector<8x8xf32>
    %cst_99 = arith.constant dense<0.000000e+00> : vector<8x768xf32>
    %188 = tpu.matmul %187, %185, %cst_99 {dimension_numbers = #tpu.dot_dimension_numbers<[1], [0], [0], [1], [0, 0, 1, 1], [], []>} : vector<8x8xf32>, vector<8x768xf32>, vector<8x768xf32> -> vector<8x768xf32>
    %189 = arith.addf %179, %188 : vector<8x768xf32>
    %c753_i32_100 = arith.constant 753 : i32
    %190 = tpu.dynamic_rotate %127 by %c753_i32_100 dim 1 : vector<8x768xf32>, i32 -> vector<8x768xf32>
    %c6_101 = arith.constant 6 : index
    %c0_102 = arith.constant 0 : index
    %191 = vector.load %arg2[%c6_101, %c0_102] : memref<12x768xf32, #tpu.memory_space<vmem>>, vector<1x768xf32>
    %192 = vector.shape_cast %191 : vector<1x768xf32> to vector<768xf32>
    %193 = vector.shape_cast %192 : vector<768xf32> to vector<1x768xf32>
    %194 = vector.broadcast %193 : vector<1x768xf32> to vector<8x768xf32>
    %195 = arith.mulf %190, %194 : vector<8x768xf32>
    %c6_103 = arith.constant 6 : index
    %c0_104 = arith.constant 0 : index
    %c0_105 = arith.constant 0 : index
    %196 = vector.load %arg4[%c6_103, %c0_104, %c0_105] : memref<9x8x8xf32, #tpu.memory_space<vmem>>, vector<1x8x8xf32>
    %197 = vector.shape_cast %196 : vector<1x8x8xf32> to vector<8x8xf32>
    %cst_106 = arith.constant dense<0.000000e+00> : vector<8x768xf32>
    %198 = tpu.matmul %197, %195, %cst_106 {dimension_numbers = #tpu.dot_dimension_numbers<[1], [0], [0], [1], [0, 0, 1, 1], [], []>} : vector<8x8xf32>, vector<8x768xf32>, vector<8x768xf32> -> vector<8x768xf32>
    %199 = arith.addf %189, %198 : vector<8x768xf32>
    %c752_i32_107 = arith.constant 752 : i32
    %200 = tpu.dynamic_rotate %127 by %c752_i32_107 dim 1 : vector<8x768xf32>, i32 -> vector<8x768xf32>
    %c7_108 = arith.constant 7 : index
    %c0_109 = arith.constant 0 : index
    %201 = vector.load %arg2[%c7_108, %c0_109] : memref<12x768xf32, #tpu.memory_space<vmem>>, vector<1x768xf32>
    %202 = vector.shape_cast %201 : vector<1x768xf32> to vector<768xf32>
    %203 = vector.shape_cast %202 : vector<768xf32> to vector<1x768xf32>
    %204 = vector.broadcast %203 : vector<1x768xf32> to vector<8x768xf32>
    %205 = arith.mulf %200, %204 : vector<8x768xf32>
    %c7_110 = arith.constant 7 : index
    %c0_111 = arith.constant 0 : index
    %c0_112 = arith.constant 0 : index
    %206 = vector.load %arg4[%c7_110, %c0_111, %c0_112] : memref<9x8x8xf32, #tpu.memory_space<vmem>>, vector<1x8x8xf32>
    %207 = vector.shape_cast %206 : vector<1x8x8xf32> to vector<8x8xf32>
    %cst_113 = arith.constant dense<0.000000e+00> : vector<8x768xf32>
    %208 = tpu.matmul %207, %205, %cst_113 {dimension_numbers = #tpu.dot_dimension_numbers<[1], [0], [0], [1], [0, 0, 1, 1], [], []>} : vector<8x8xf32>, vector<8x768xf32>, vector<8x768xf32> -> vector<8x768xf32>
    %209 = arith.addf %199, %208 : vector<8x768xf32>
    %c751_i32_114 = arith.constant 751 : i32
    %210 = tpu.dynamic_rotate %127 by %c751_i32_114 dim 1 : vector<8x768xf32>, i32 -> vector<8x768xf32>
    %c8_115 = arith.constant 8 : index
    %c0_116 = arith.constant 0 : index
    %211 = vector.load %arg2[%c8_115, %c0_116] : memref<12x768xf32, #tpu.memory_space<vmem>>, vector<1x768xf32>
    %212 = vector.shape_cast %211 : vector<1x768xf32> to vector<768xf32>
    %213 = vector.shape_cast %212 : vector<768xf32> to vector<1x768xf32>
    %214 = vector.broadcast %213 : vector<1x768xf32> to vector<8x768xf32>
    %215 = arith.mulf %210, %214 : vector<8x768xf32>
    %c8_117 = arith.constant 8 : index
    %c0_118 = arith.constant 0 : index
    %c0_119 = arith.constant 0 : index
    %216 = vector.load %arg4[%c8_117, %c0_118, %c0_119] : memref<9x8x8xf32, #tpu.memory_space<vmem>>, vector<1x8x8xf32>
    %217 = vector.shape_cast %216 : vector<1x8x8xf32> to vector<8x8xf32>
    %cst_120 = arith.constant dense<0.000000e+00> : vector<8x768xf32>
    %218 = tpu.matmul %217, %215, %cst_120 {dimension_numbers = #tpu.dot_dimension_numbers<[1], [0], [0], [1], [0, 0, 1, 1], [], []>} : vector<8x8xf32>, vector<8x768xf32>, vector<8x768xf32> -> vector<8x768xf32>
    %219 = arith.addf %209, %218 : vector<8x768xf32>
    %220 = vector.extract_strided_slice %219 {offsets = [0, 0], sizes = [2, 768], strides = [1, 1]} : vector<8x768xf32> to vector<2x768xf32>
    %c256_i32 = arith.constant 256 : i32
    %221 = tpu.dynamic_rotate %220 by %c256_i32 dim 1 : vector<2x768xf32>, i32 -> vector<2x768xf32>
    %222 = arith.addf %220, %221 : vector<2x768xf32>
    %c512_i32 = arith.constant 512 : i32
    %223 = tpu.dynamic_rotate %220 by %c512_i32 dim 1 : vector<2x768xf32>, i32 -> vector<2x768xf32>
    %224 = arith.addf %222, %223 : vector<2x768xf32>
    %cst_121 = arith.constant 0.333333343 : f32
    %225 = vector.broadcast %cst_121 : f32 to vector<2x768xf32>
    %226 = arith.mulf %224, %225 : vector<2x768xf32>
    %227 = arith.subf %220, %226 : vector<2x768xf32>
    %c0_122 = arith.constant 0 : index
    %c0_123 = arith.constant 0 : index
    %c0_124 = arith.constant 0 : index
    %228 = vector.load %arg6[%c0_122, %c0_123, %c0_124] : memref<1x2x768xf32, #tpu.memory_space<vmem>>, vector<1x2x768xf32>
    %229 = vector.shape_cast %228 : vector<1x2x768xf32> to vector<2x768xf32>
    %230 = vector.shape_cast %227 : vector<2x768xf32> to vector<1x2x768xf32>
    tpu.vector_store %arg6[%c0_122, %c0_123, %c0_124], %230 {strides = array<i32>} : memref<1x2x768xf32, #tpu.memory_space<vmem>>, vector<1x2x768xf32>,
    %231 = vector.extract_strided_slice %219 {offsets = [2, 0], sizes = [4, 768], strides = [1, 1]} : vector<8x768xf32> to vector<4x768xf32>
    %cst_125 = arith.constant dense<0xFF800000> : vector<768xf32>
    %232 = vector.multi_reduction <maximumf>, %231, %cst_125 [0] : vector<4x768xf32> to vector<768xf32>
    %233 = vector.shape_cast %232 : vector<768xf32> to vector<1x768xf32>
    %234 = vector.broadcast %233 : vector<1x768xf32> to vector<4x768xf32>
    %235 = arith.subf %231, %234 : vector<4x768xf32>
    %236 = math.exp %235 : vector<4x768xf32>
    %cst_126 = arith.constant dense<0.000000e+00> : vector<768xf32>
    %237 = vector.multi_reduction <add>, %236, %cst_126 [0] : vector<4x768xf32> to vector<768xf32>
    %238 = vector.shape_cast %237 : vector<768xf32> to vector<1x768xf32>
    %239 = vector.broadcast %238 : vector<1x768xf32> to vector<4x768xf32>
    %240 = arith.divf %236, %239 : vector<4x768xf32>
    %c0_127 = arith.constant 0 : index
    %c0_128 = arith.constant 0 : index
    %c0_129 = arith.constant 0 : index
    %241 = vector.load %arg7[%c0_127, %c0_128, %c0_129] : memref<1x4x768xf32, #tpu.memory_space<vmem>>, vector<1x4x768xf32>
    %242 = vector.shape_cast %241 : vector<1x4x768xf32> to vector<4x768xf32>
    %243 = vector.shape_cast %240 : vector<4x768xf32> to vector<1x4x768xf32>
    tpu.vector_store %arg7[%c0_127, %c0_128, %c0_129], %243 {strides = array<i32>} : memref<1x4x768xf32, #tpu.memory_space<vmem>>, vector<1x4x768xf32>,
    return
  }
  func.func @transform_0(%arg0: i32) -> (i32, i32, i32) {
    %c0_i32 = arith.constant 0 : i32
    %c0_i32_0 = arith.constant 0 : i32
    %c0_i32_1 = arith.constant 0 : i32
    return %arg0, %c0_i32, %c0_i32_0 : i32, i32, i32
  }
  func.func @transform_1(%arg0: i32) -> (i32, i32) {
    %c0_i32 = arith.constant 0 : i32
    %c0_i32_0 = arith.constant 0 : i32
    %c0_i32_1 = arith.constant 0 : i32
    return %c0_i32, %c0_i32_0 : i32, i32
  }
  func.func @transform_2(%arg0: i32) -> (i32, i32) {
    %c0_i32 = arith.constant 0 : i32
    %c0_i32_0 = arith.constant 0 : i32
    %c0_i32_1 = arith.constant 0 : i32
    return %c0_i32, %c0_i32_0 : i32, i32
  }
  func.func @transform_3(%arg0: i32) -> (i32, i32, i32) {
    %c0_i32 = arith.constant 0 : i32
    %c0_i32_0 = arith.constant 0 : i32
    %c0_i32_1 = arith.constant 0 : i32
    %c0_i32_2 = arith.constant 0 : i32
    return %c0_i32, %c0_i32_0, %c0_i32_1 : i32, i32, i32
  }
  func.func @transform_4(%arg0: i32) -> (i32, i32) {
    %c0_i32 = arith.constant 0 : i32
    %c0_i32_0 = arith.constant 0 : i32
    %c0_i32_1 = arith.constant 0 : i32
    return %c0_i32, %c0_i32_0 : i32, i32
  }
  func.func @transform_5(%arg0: i32) -> (i32, i32, i32) {
    %c0_i32 = arith.constant 0 : i32
    %c0_i32_0 = arith.constant 0 : i32
    %c0_i32_1 = arith.constant 0 : i32
    return %arg0, %c0_i32, %c0_i32_0 : i32, i32, i32
  }
  func.func @transform_6(%arg0: i32) -> (i32, i32, i32) {
    %c0_i32 = arith.constant 0 : i32
    %c0_i32_0 = arith.constant 0 : i32
    %c0_i32_1 = arith.constant 0 : i32
    return %arg0, %c0_i32, %c0_i32_0 : i32, i32, i32
  }
}

</mosaic_0001>

<llo_original>
// kernel: fwd.1
$region0: #{fwd.1}
  #allocation0 [shape = 'u32[]', space=smem, size = 0x4, offset = 0x4, fixed_abs, tag = 'smem constant byte address 0x4 - core index']
  #allocation1 [shape = 'u32[144,128]{1,0:T(1,128)}', space=vmem, size = 0x12000, scoped, tag = 'internal scratch']
  #allocation2 [shape = 'f32[16,768]{1,0:T(8,128)}', space=vmem, size = 0xc000, scoped, tag = 'scratch operand']
  %s0 = inlined_call_operand.vmem [shape: f32[2,1,768], index: 0, kind: input, shape index: {}]
  %s1 = inlined_call_operand.vmem [shape: f32[12,768], index: 1, kind: input, shape index: {}]
  %s2 = inlined_call_operand.vmem [shape: f32[8,16], index: 2, kind: input, shape index: {}]
  %s3 = inlined_call_operand.vmem [shape: f32[9,8,8], index: 3, kind: input, shape index: {}]
  %s4 = inlined_call_operand.vmem [shape: f32[8,1], index: 4, kind: input, shape index: {}]
  %s5 = inlined_call_operand.vmem [shape: f32[2,2,768], index: 5, kind: output, shape index: {0}]
  %s6 = inlined_call_operand.vmem [shape: f32[2,4,768], index: 6, kind: output, shape index: {1}]
  %7 = xla_tuple %s5, %s6
  %s8 = sld [smem:[#allocation0]]
  $region61: #{fwd.1} parent=0
    _
  %s10 = ssub.s32 1, %s8
  %s11 = scalar_select 0, %s10, %s8
  loop: start=0, step=1, limit=4
  $region2: #{fwd.1} parent=0 // loop_pre_header
    _
  $region3: #{fwd.1} parent=0 // loop_header
    %s13 = sphi 0, %s17
    %p14 = scmp.ge.s32.totalorder %s13, 4
    %s23 = sphi 0, %s25
    %s26 = sphi 0, %s23
    %s27 = sphi 0, %s26
    %s43 = sphi 0, %s27
    %s47 = sphi 0, %s47
    %s49 = sphi 0, %s47
    %s50 = sphi 0, %s49
    %s64 = sphi 0, %s50
    %s68 = sphi 0, %s68
    %s70 = sphi 0, %s68
    %s71 = sphi 0, %s70
    %s85 = sphi 0, %s71
    %s89 = sphi 0, %s89
    %s91 = sphi 0, %s89
    %s92 = sphi 0, %s91
    %s106 = sphi 0, %s92
    %s110 = sphi 0, %s110
    %s112 = sphi 0, %s110
    %s113 = sphi 0, %s112
    %s127 = sphi 0, %s113
    %s133 = sphi 0, %s135
    %s136 = sphi 0, %s133
    %s137 = sphi 0, %s136
    %s153 = sphi 0, %s137
    %s159 = sphi 0, %s161
    %s162 = sphi 0, %s159
    %s163 = sphi 0, %s162
    %s179 = sphi 0, %s163
  $region4: #{fwd.1} parent=0 // loop_header_branch
    %16 = sbr.rel (%p14) target = $region8
  $region5: #{fwd.1} parent=0 // loop_body
    %s18 = ssub.s32 %s13, 1
    %s19 = ssub.s32 %s13, 2
    %s20 = sadd.s32 %s13, 1
    %s21 = ssub.s32 %s13, %s20
    %p22 = scmp.eq.s32.totalorder %s21, 0
    %s24 = sadd.s32 %s23, 1
    %s25 = scalar_select %p22, %s23, %s24
    %p28 = pneg %p22
    %p29 = scmp.eq.s32.totalorder %s13, 1
    %p30 = por %p28, %p29
    %p31 = scmp.ne.s32.totalorder %s23, %s26
    %p32 = scmp.eq.s32.totalorder %s13, 0
    %p33 = por %p31, %p32
    %p34 = scmp.ne.s32.totalorder %s23, %s26
    %p35 = scmp.eq.s32.totalorder %s18, 1
    %p36 = por %p34, %p35
    %p37 = scmp.ne.s32.totalorder %s26, %s27
    %p38 = scmp.eq.s32.totalorder %s18, 0
    %p39 = por %p37, %p38
    %p40 = scmp.ne.s32.totalorder %s26, %s27
    %p41 = scmp.eq.s32.totalorder %s19, 1
    %p42 = por %p40, %p41
    %p44 = scmp.ne.s32.totalorder %s27, %s43
    %p45 = scmp.eq.s32.totalorder %s19, 0
    %p46 = por %p44, %p45
    %s48 = sadd.s32 %s47, 1
    %p51 = scmp.eq.s32.totalorder %s13, 1
    %p52 = scmp.ne.s32.totalorder %s47, %s49
    %p53 = scmp.eq.s32.totalorder %s13, 0
    %p54 = por %p52, %p53
    %p55 = scmp.ne.s32.totalorder %s47, %s49
    %p56 = scmp.eq.s32.totalorder %s18, 1
    %p57 = por %p55, %p56
    %p58 = scmp.ne.s32.totalorder %s49, %s50
    %p59 = scmp.eq.s32.totalorder %s18, 0
    %p60 = por %p58, %p59
    %p61 = scmp.ne.s32.totalorder %s49, %s50
    %p62 = scmp.eq.s32.totalorder %s19, 1
    %p63 = por %p61, %p62
    %p65 = scmp.ne.s32.totalorder %s50, %s64
    %p66 = scmp.eq.s32.totalorder %s19, 0
    %p67 = por %p65, %p66
    %s69 = sadd.s32 %s68, 1
    %p72 = scmp.eq.s32.totalorder %s13, 1
    %p73 = scmp.ne.s32.totalorder %s68, %s70
    %p74 = scmp.eq.s32.totalorder %s13, 0
    %p75 = por %p73, %p74
    %p76 = scmp.ne.s32.totalorder %s68, %s70
    %p77 = scmp.eq.s32.totalorder %s18, 1
    %p78 = por %p76, %p77
    %p79 = scmp.ne.s32.totalorder %s70, %s71
    %p80 = scmp.eq.s32.totalorder %s18, 0
    %p81 = por %p79, %p80
    %p82 = scmp.ne.s32.totalorder %s70, %s71
    %p83 = scmp.eq.s32.totalorder %s19, 1
    %p84 = por %p82, %p83
    %p86 = scmp.ne.s32.totalorder %s71, %s85
    %p87 = scmp.eq.s32.totalorder %s19, 0
    %p88 = por %p86, %p87
    %s90 = sadd.s32 %s89, 1
    %p93 = scmp.eq.s32.totalorder %s13, 1
    %p94 = scmp.ne.s32.totalorder %s89, %s91
    %p95 = scmp.eq.s32.totalorder %s13, 0
    %p96 = por %p94, %p95
    %p97 = scmp.ne.s32.totalorder %s89, %s91
    %p98 = scmp.eq.s32.totalorder %s18, 1
    %p99 = por %p97, %p98
    %p100 = scmp.ne.s32.totalorder %s91, %s92
    %p101 = scmp.eq.s32.totalorder %s18, 0
    %p102 = por %p100, %p101
    %p103 = scmp.ne.s32.totalorder %s91, %s92
    %p104 = scmp.eq.s32.totalorder %s19, 1
    %p105 = por %p103, %p104
    %p107 = scmp.ne.s32.totalorder %s92, %s106
    %p108 = scmp.eq.s32.totalorder %s19, 0
    %p109 = por %p107, %p108
    %s111 = sadd.s32 %s110, 1
    %p114 = scmp.eq.s32.totalorder %s13, 1
    %p115 = scmp.ne.s32.totalorder %s110, %s112
    %p116 = scmp.eq.s32.totalorder %s13, 0
    %p117 = por %p115, %p116
    %p118 = scmp.ne.s32.totalorder %s110, %s112
    %p119 = scmp.eq.s32.totalorder %s18, 1
    %p120 = por %p118, %p119
    %p121 = scmp.ne.s32.totalorder %s112, %s113
    %p122 = scmp.eq.s32.totalorder %s18, 0
    %p123 = por %p121, %p122
    %p124 = scmp.ne.s32.totalorder %s112, %s113
    %p125 = scmp.eq.s32.totalorder %s19, 1
    %p126 = por %p124, %p125
    %p128 = scmp.ne.s32.totalorder %s113, %s127
    %p129 = scmp.eq.s32.totalorder %s19, 0
    %p130 = por %p128, %p129
    %s131 = ssub.s32 %s13, %s20
    %p132 = scmp.eq.s32.totalorder %s131, 0
    %s134 = sadd.s32 %s133, 1
    %s135 = scalar_select %p132, %s133, %s134
    %p138 = pneg %p132
    %p139 = scmp.eq.s32.totalorder %s13, 1
    %p140 = por %p138, %p139
    %p141 = scmp.ne.s32.totalorder %s133, %s136
    %p142 = scmp.eq.s32.totalorder %s13, 0
    %p143 = por %p141, %p142
    %p144 = scmp.ne.s32.totalorder %s133, %s136
    %p145 = scmp.eq.s32.totalorder %s18, 1
    %p146 = por %p144, %p145
    %p147 = scmp.ne.s32.totalorder %s136, %s137
    %p148 = scmp.eq.s32.totalorder %s18, 0
    %p149 = por %p147, %p148
    %p150 = scmp.ne.s32.totalorder %s136, %s137
    %p151 = scmp.eq.s32.totalorder %s19, 1
    %p152 = por %p150, %p151
    %p154 = scmp.ne.s32.totalorder %s137, %s153
    %p155 = scmp.eq.s32.totalorder %s19, 0
    %p156 = por %p154, %p155
    %s157 = ssub.s32 %s13, %s20
    %p158 = scmp.eq.s32.totalorder %s157, 0
    %s160 = sadd.s32 %s159, 1
    %s161 = scalar_select %p158, %s159, %s160
    %p164 = pneg %p158
    %p165 = scmp.eq.s32.totalorder %s13, 1
    %p166 = por %p164, %p165
    %p167 = scmp.ne.s32.totalorder %s159, %s162
    %p168 = scmp.eq.s32.totalorder %s13, 0
    %p169 = por %p167, %p168
    %p170 = scmp.ne.s32.totalorder %s159, %s162
    %p171 = scmp.eq.s32.totalorder %s18, 1
    %p172 = por %p170, %p171
    %p173 = scmp.ne.s32.totalorder %s162, %s163
    %p174 = scmp.eq.s32.totalorder %s18, 0
    %p175 = por %p173, %p174
    %p176 = scmp.ne.s32.totalorder %s162, %s163
    %p177 = scmp.eq.s32.totalorder %s19, 1
    %p178 = por %p176, %p177
    %p180 = scmp.ne.s32.totalorder %s163, %s179
    %p181 = scmp.eq.s32.totalorder %s19, 0
    %p182 = por %p180, %p181
    %p183 = scmp.le.s32.totalorder 1, %s13
    %p184 = scmp.lt.s32.totalorder %s13, 3
    %p185 = pnand %p183, %p184
    %p186 = pneg %p185
    // Predicated region
    $region9: #{fwd.1} parent=5 // pred_check
      _
    $region10: #{fwd.1} parent=5 // pred_check_branch
      %188 = sbr.rel (%p185) target = $region12
    $region11: #{fwd.1} parent=5 // pred_region
      %s189 = ssub.s32 %s13, 1
      // Predicated region
      $region13: #{fwd.1} parent=11 // pred_check
        %p190 = pneg %p60
      $region14: #{fwd.1} parent=11 // pred_check_branch
        %192 = sbr.rel (%p190) target = $region16
      $region15: #{fwd.1} parent=11 // pred_region
        _
      $region16: #{fwd.1} parent=11 // pred_fallthru
        _
      // Predicated region
      $region17: #{fwd.1} parent=11 // pred_check
        %p193 = pneg %p81
      $region18: #{fwd.1} parent=11 // pred_check_branch
        %195 = sbr.rel (%p193) target = $region20
      $region19: #{fwd.1} parent=11 // pred_region
        _
      $region20: #{fwd.1} parent=11 // pred_fallthru
        _
      // Predicated region
      $region21: #{fwd.1} parent=11 // pred_check
        %p196 = pneg %p102
      $region22: #{fwd.1} parent=11 // pred_check_branch
        %198 = sbr.rel (%p196) target = $region24
      $region23: #{fwd.1} parent=11 // pred_region
        _
      $region24: #{fwd.1} parent=11 // pred_fallthru
        _
      // Predicated region
      $region25: #{fwd.1} parent=11 // pred_check
        %p199 = pneg %p123
      $region26: #{fwd.1} parent=11 // pred_check_branch
        %201 = sbr.rel (%p199) target = $region28
      $region27: #{fwd.1} parent=11 // pred_region
        _
      $region28: #{fwd.1} parent=11 // pred_fallthru
        _
    $region12: #{fwd.1} parent=5 // pred_fallthru
      _
    %p202 = scmp.lt.s32.totalorder %s13, 2
    // Predicated region
    $region29: #{fwd.1} parent=5 // pred_check
      %p203 = pneg %p202
    $region30: #{fwd.1} parent=5 // pred_check_branch
      %205 = sbr.rel (%p203) target = $region32
    $region31: #{fwd.1} parent=5 // pred_region
      // Predicated region
      $region33: #{fwd.1} parent=31 // pred_check
        %p206 = pneg %p33
      $region34: #{fwd.1} parent=31 // pred_check_branch
        %208 = sbr.rel (%p206) target = $region36
      $region35: #{fwd.1} parent=31 // pred_region
        %p209 = scmp.lt.s32.totalorder %s13, 1
        %s210 = scalar_select %p209, %s13, 1
        %s211 = smul.addr %s210, 6
        %s212 = scalar_lea.vmem %s0, %s211
      $region36: #{fwd.1} parent=31 // pred_fallthru
        _
    $region32: #{fwd.1} parent=5 // pred_fallthru
      _
    %p213 = scmp.le.s32.totalorder 1, %s13
    %p214 = scmp.lt.s32.totalorder %s13, 3
    %p215 = pnand %p213, %p214
    %p216 = pneg %p215
    // Predicated region
    $region37: #{fwd.1} parent=5 // pred_check
      _
    $region38: #{fwd.1} parent=5 // pred_check_branch
      %218 = sbr.rel (%p215) target = $region40
    $region39: #{fwd.1} parent=5 // pred_region
      %s219 = ssub.s32 %s13, 1
      %p220 = scmp.lt.s32.totalorder %s18, 1
      %s221 = scalar_select %p220, %s18, 1
      %s222 = smul.addr %s221, 6
      %s223 = scalar_lea.vmem %s0, %s222
      %p224 = pneg %p39
      %p225 = pneg %p36
      %p226 = pneg %p60
      %p227 = pneg %p57
      %p228 = pneg %p81
      %p229 = pneg %p78
      %p230 = pneg %p102
      %p231 = pneg %p99
      %p232 = pneg %p123
      %p233 = pneg %p120
      %p234 = pneg %p149
      %p235 = pneg %p146
      %p236 = scmp.lt.s32.totalorder %s18, 1
      %s237 = scalar_select %p236, %s18, 1
      %s238 = smul.addr %s237, 6
      %s239 = smul.addr %s238, 2
      %s240 = scalar_lea.vmem %s5, %s239
      %p241 = pneg %p175
      %p242 = pneg %p172
      %p243 = scmp.lt.s32.totalorder %s18, 1
      %s244 = scalar_select %p243, %s18, 1
      %s245 = smul.addr %s244, 6
      %s246 = smul.addr %s245, 4
      %s247 = scalar_lea.vmem %s6, %s246
      %p248 = scmp.lt.s32.totalorder %s18, 1
      %s249 = scalar_select %p248, %s18, 1
      %s250 = smul.addr %s249, 6
      %s251 = scalar_lea.vmem %s0, %s250
      %p252 = scmp.lt.s32.totalorder %s18, 1
      %s253 = scalar_select %p252, %s18, 1
      %s254 = smul.addr %s253, 6
      %s255 = smul.addr %s254, 2
      %s256 = scalar_lea.vmem %s5, %s255
      %p257 = scmp.lt.s32.totalorder %s18, 1
      %s258 = scalar_select %p257, %s18, 1
      %s259 = smul.addr %s258, 6
      %s260 = smul.addr %s259, 4
      %s261 = scalar_lea.vmem %s6, %s260
      %v262 = vld [vmem:[%s251] sm:$0x3f]
      %s263 = scalar_lea.vmem %s1, 49
      %v264 = vld [vmem:[%s263] ss:$8 sm:$0xf]
      %v265 = vld [vmem:[%s263] ss:$8 sm:$0x30]
      %v266 = vor.u32 %v264, %v265
      %v267 = vmul.f32 %v262, %v266
      %v269 = vlaneseq
      %v270 = vshrl.u32 %v269, 7
      %v271 = vsub.s32 0, %v270
      %v272 = vrot.slane %v267, %v271
      %v273 = vlaneseq
      %v274 = vshrl.u32 %v273, 7
      %v275 = vsub.s32 1, %v274
      %v276 = vrot.slane %v267, %v275
      %v277 = vlaneseq
      %v278 = vshrl.u32 %v277, 7
      %v279 = vsub.s32 2, %v278
      %v280 = vrot.slane %v267, %v279
      %v281 = vlaneseq
      %v282 = vshrl.u32 %v281, 7
      %v283 = vsub.s32 3, %v282
      %v284 = vrot.slane %v267, %v283
      %v285 = vlaneseq
      %v286 = vshrl.u32 %v285, 7
      %v287 = vsub.s32 4, %v286
      %v288 = vrot.slane %v267, %v287
      %v289 = vlaneseq
      %v290 = vshrl.u32 %v289, 7
      %v291 = vsub.s32 5, %v290
      %v292 = vrot.slane %v267, %v291
      %vm299 = vcmask 1040384
      %v300 = vsel %vm299, %v272, 0.0
      %v301 = vsel %vm299, %v276, 0.0
      %v302 = vadd.f32 %v300, %v301
      %v303 = vsel %vm299, %v280, 0.0
      %v304 = vadd.f32 %v302, %v303
      %v305 = vsel %vm299, %v284, 0.0
      %v306 = vadd.f32 %v304, %v305
      %v307 = vsel %vm299, %v288, 0.0
      %v308 = vadd.f32 %v306, %v307
      %v309 = vsel %vm299, %v292, 0.0
      %v310 = vadd.f32 %v308, %v309
      %311 = vadd.xlane.f32.xlu0 %v310
      %v312 = vpop.xlane.xlu0 %311
      %v313 = vmul.f32 %v312, 0.00390625
      %v315 = vlaneseq
      %v316 = vshrl.u32 %v315, 7
      %v317 = vsub.s32 0, %v316
      %v318 = vrot.slane %v266, %v317
      %v319 = vlaneseq
      %v320 = vshrl.u32 %v319, 7
      %v321 = vsub.s32 1, %v320
      %v322 = vrot.slane %v266, %v321
      %v323 = vlaneseq
      %v324 = vshrl.u32 %v323, 7
      %v325 = vsub.s32 2, %v324
      %v326 = vrot.slane %v266, %v325
      %v327 = vlaneseq
      %v328 = vshrl.u32 %v327, 7
      %v329 = vsub.s32 3, %v328
      %v330 = vrot.slane %v266, %v329
      %v331 = vlaneseq
      %v332 = vshrl.u32 %v331, 7
      %v333 = vsub.s32 4, %v332
      %v334 = vrot.slane %v266, %v333
      %v335 = vlaneseq
      %v336 = vshrl.u32 %v335, 7
      %v337 = vsub.s32 5, %v336
      %v338 = vrot.slane %v266, %v337
      %v345 = vmul.f32 %v313, %v318
      %v346 = vmul.f32 %v313, %v322
      %v347 = vmul.f32 %v313, %v326
      %v348 = vmul.f32 %v313, %v330
      %v349 = vmul.f32 %v313, %v334
      %v350 = vmul.f32 %v313, %v338
      %v357 = vcombine.low %v345, %v346
      %v358 = vcombine.low %v347, %v348
      %v359 = vcombine.low %v349, %v350
      %v361 = vunpack.c.l.s4 1966171168
      %v362 = vunpack.c.0.s8 %v361
      %v363 = vlaneseq
      %v364 = vshrl.u32 %v363, 7
      %v365 = vsub.s32 %v362, %v364
      %v366 = vrot.slane %v357, %v365
      %v368 = vunpack.c.l.s4 1966171168
      %v369 = vunpack.c.0.s8 %v368
      %v370 = vlaneseq
      %v371 = vshrl.u32 %v370, 7
      %v372 = vsub.s32 %v369, %v371
      %v373 = vrot.slane %v358, %v372
      %v375 = vunpack.c.l.s4 1966171168
      %v376 = vunpack.c.0.s8 %v375
      %v377 = vlaneseq
      %v378 = vshrl.u32 %v377, 7
      %v379 = vsub.s32 %v376, %v378
      %v380 = vrot.slane %v359, %v379
      %v381 = vcombine.low %v366, %v373
      %v383 = vunpack.c.l.s4 1966171168
      %v384 = vunpack.c.0.s8 %v383
      %v385 = vlaneseq
      %v386 = vshrl.u32 %v385, 7
      %v387 = vsub.s32 %v384, %v386
      %v388 = vrot.slane %v381, %v387
      %v390 = vunpack.c.l.s4 1966171168
      %v391 = vunpack.c.0.s8 %v390
      %v392 = vlaneseq
      %v393 = vshrl.u32 %v392, 7
      %v394 = vsub.s32 %v391, %v393
      %v395 = vrot.slane %v380, %v394
      %v396 = vcombine.low %v388, %v395
      %v398 = vsub.f32 %v267, %v396
      %v399 = vmul.f32 %v398, %v398
      %v401 = vlaneseq
      %v402 = vshrl.u32 %v401, 7
      %v403 = vsub.s32 0, %v402
      %v404 = vrot.slane %v399, %v403
      %v405 = vlaneseq
      %v406 = vshrl.u32 %v405, 7
      %v407 = vsub.s32 1, %v406
      %v408 = vrot.slane %v399, %v407
      %v409 = vlaneseq
      %v410 = vshrl.u32 %v409, 7
      %v411 = vsub.s32 2, %v410
      %v412 = vrot.slane %v399, %v411
      %v413 = vlaneseq
      %v414 = vshrl.u32 %v413, 7
      %v415 = vsub.s32 3, %v414
      %v416 = vrot.slane %v399, %v415
      %v417 = vlaneseq
      %v418 = vshrl.u32 %v417, 7
      %v419 = vsub.s32 4, %v418
      %v420 = vrot.slane %v399, %v419
      %v421 = vlaneseq
      %v422 = vshrl.u32 %v421, 7
      %v423 = vsub.s32 5, %v422
      %v424 = vrot.slane %v399, %v423
      %v431 = vsel %vm299, %v404, 0.0
      %v432 = vsel %vm299, %v408, 0.0
      %v433 = vadd.f32 %v431, %v432
      %v434 = vsel %vm299, %v412, 0.0
      %v435 = vadd.f32 %v433, %v434
      %v436 = vsel %vm299, %v416, 0.0
      %v437 = vadd.f32 %v435, %v436
      %v438 = vsel %vm299, %v420, 0.0
      %v439 = vadd.f32 %v437, %v438
      %v440 = vsel %vm299, %v424, 0.0
      %v441 = vadd.f32 %v439, %v440
      %442 = vadd.xlane.f32.xlu0 %v441
      %v443 = vpop.xlane.xlu0 %442
      %v444 = vmul.f32 %v443, 0.003921569
      %v445 = vrsqrt.pop %v444
      %v447 = vlaneseq
      %v448 = vshrl.u32 %v447, 7
      %v449 = vsub.s32 0, %v448
      %v450 = vrot.slane %v445, %v449
      %v452 = vmul.f32 %v398, %v450
      %v453 = vadd.f32 %v452, 0.0
      %s454 = scalar_lea.vmem %s1, 50
      %v455 = vld [vmem:[%s454] ss:$8 sm:$0xf]
      %v456 = vld [vmem:[%s454] ss:$8 sm:$0x30]
      %v457 = vor.u32 %v455, %v456
      %v458 = vmul.f32 %v262, %v457
      %v460 = vlaneseq
      %v461 = vshrl.u32 %v460, 7
      %v462 = vsub.s32 0, %v461
      %v463 = vrot.slane %v458, %v462
      %v464 = vlaneseq
      %v465 = vshrl.u32 %v464, 7
      %v466 = vsub.s32 1, %v465
      %v467 = vrot.slane %v458, %v466
      %v468 = vlaneseq
      %v469 = vshrl.u32 %v468, 7
      %v470 = vsub.s32 2, %v469
      %v471 = vrot.slane %v458, %v470
      %v472 = vlaneseq
      %v473 = vshrl.u32 %v472, 7
      %v474 = vsub.s32 3, %v473
      %v475 = vrot.slane %v458, %v474
      %v476 = vlaneseq
      %v477 = vshrl.u32 %v476, 7
      %v478 = vsub.s32 4, %v477
      %v479 = vrot.slane %v458, %v478
      %v480 = vlaneseq
      %v481 = vshrl.u32 %v480, 7
      %v482 = vsub.s32 5, %v481
      %v483 = vrot.slane %v458, %v482
      %v490 = vsel %vm299, %v463, 0.0
      %v491 = vsel %vm299, %v467, 0.0
      %v492 = vadd.f32 %v490, %v491
      %v493 = vsel %vm299, %v471, 0.0
      %v494 = vadd.f32 %v492, %v493
      %v495 = vsel %vm299, %v475, 0.0
      %v496 = vadd.f32 %v494, %v495
      %v497 = vsel %vm299, %v479, 0.0
      %v498 = vadd.f32 %v496, %v497
      %v499 = vsel %vm299, %v483, 0.0
      %v500 = vadd.f32 %v498, %v499
      %501 = vadd.xlane.f32.xlu0 %v500
      %v502 = vpop.xlane.xlu0 %501
      %v503 = vmul.f32 %v502, 0.00390625
      %v505 = vlaneseq
      %v506 = vshrl.u32 %v505, 7
      %v507 = vsub.s32 0, %v506
      %v508 = vrot.slane %v457, %v507
      %v509 = vlaneseq
      %v510 = vshrl.u32 %v509, 7
      %v511 = vsub.s32 1, %v510
      %v512 = vrot.slane %v457, %v511
      %v513 = vlaneseq
      %v514 = vshrl.u32 %v513, 7
      %v515 = vsub.s32 2, %v514
      %v516 = vrot.slane %v457, %v515
      %v517 = vlaneseq
      %v518 = vshrl.u32 %v517, 7
      %v519 = vsub.s32 3, %v518
      %v520 = vrot.slane %v457, %v519
      %v521 = vlaneseq
      %v522 = vshrl.u32 %v521, 7
      %v523 = vsub.s32 4, %v522
      %v524 = vrot.slane %v457, %v523
      %v525 = vlaneseq
      %v526 = vshrl.u32 %v525, 7
      %v527 = vsub.s32 5, %v526
      %v528 = vrot.slane %v457, %v527
      %v535 = vmul.f32 %v503, %v508
      %v536 = vmul.f32 %v503, %v512
      %v537 = vmul.f32 %v503, %v516
      %v538 = vmul.f32 %v503, %v520
      %v539 = vmul.f32 %v503, %v524
      %v540 = vmul.f32 %v503, %v528
      %v547 = vcombine.low %v535, %v536
      %v548 = vcombine.low %v537, %v538
      %v549 = vcombine.low %v539, %v540
      %v551 = vunpack.c.l.s4 1966171168
      %v552 = vunpack.c.0.s8 %v551
      %v553 = vlaneseq
      %v554 = vshrl.u32 %v553, 7
      %v555 = vsub.s32 %v552, %v554
      %v556 = vrot.slane %v547, %v555
      %v558 = vunpack.c.l.s4 1966171168
      %v559 = vunpack.c.0.s8 %v558
      %v560 = vlaneseq
      %v561 = vshrl.u32 %v560, 7
      %v562 = vsub.s32 %v559, %v561
      %v563 = vrot.slane %v548, %v562
      %v565 = vunpack.c.l.s4 1966171168
      %v566 = vunpack.c.0.s8 %v565
      %v567 = vlaneseq
      %v568 = vshrl.u32 %v567, 7
      %v569 = vsub.s32 %v566, %v568
      %v570 = vrot.slane %v549, %v569
      %v571 = vcombine.low %v556, %v563
      %v573 = vunpack.c.l.s4 1966171168
      %v574 = vunpack.c.0.s8 %v573
      %v575 = vlaneseq
      %v576 = vshrl.u32 %v575, 7
      %v577 = vsub.s32 %v574, %v576
      %v578 = vrot.slane %v571, %v577
      %v580 = vunpack.c.l.s4 1966171168
      %v581 = vunpack.c.0.s8 %v580
      %v582 = vlaneseq
      %v583 = vshrl.u32 %v582, 7
      %v584 = vsub.s32 %v581, %v583
      %v585 = vrot.slane %v570, %v584
      %v586 = vcombine.low %v578, %v585
      %v588 = vsub.f32 %v458, %v586
      %v589 = vmul.f32 %v588, %v588
      %v591 = vlaneseq
      %v592 = vshrl.u32 %v591, 7
      %v593 = vsub.s32 0, %v592
      %v594 = vrot.slane %v589, %v593
      %v595 = vlaneseq
      %v596 = vshrl.u32 %v595, 7
      %v597 = vsub.s32 1, %v596
      %v598 = vrot.slane %v589, %v597
      %v599 = vlaneseq
      %v600 = vshrl.u32 %v599, 7
      %v601 = vsub.s32 2, %v600
      %v602 = vrot.slane %v589, %v601
      %v603 = vlaneseq
      %v604 = vshrl.u32 %v603, 7
      %v605 = vsub.s32 3, %v604
      %v606 = vrot.slane %v589, %v605
      %v607 = vlaneseq
      %v608 = vshrl.u32 %v607, 7
      %v609 = vsub.s32 4, %v608
      %v610 = vrot.slane %v589, %v609
      %v611 = vlaneseq
      %v612 = vshrl.u32 %v611, 7
      %v613 = vsub.s32 5, %v612
      %v614 = vrot.slane %v589, %v613
      %v621 = vsel %vm299, %v594, 0.0
      %v622 = vsel %vm299, %v598, 0.0
      %v623 = vadd.f32 %v621, %v622
      %v624 = vsel %vm299, %v602, 0.0
      %v625 = vadd.f32 %v623, %v624
      %v626 = vsel %vm299, %v606, 0.0
      %v627 = vadd.f32 %v625, %v626
      %v628 = vsel %vm299, %v610, 0.0
      %v629 = vadd.f32 %v627, %v628
      %v630 = vsel %vm299, %v614, 0.0
      %v631 = vadd.f32 %v629, %v630
      %632 = vadd.xlane.f32.xlu0 %v631
      %v633 = vpop.xlane.xlu0 %632
      %v634 = vmul.f32 %v633, 0.003921569
      %v635 = vrsqrt.pop %v634
      %v637 = vlaneseq
      %v638 = vshrl.u32 %v637, 7
      %v639 = vsub.s32 0, %v638
      %v640 = vrot.slane %v635, %v639
      %v642 = vmul.f32 %v588, %v640
      %v643 = vadd.f32 %v453, %v642
      %s644 = scalar_lea.vmem %s1, 51
      %v645 = vld [vmem:[%s644] ss:$8 sm:$0xf]
      %v646 = vld [vmem:[%s644] ss:$8 sm:$0x30]
      %v647 = vor.u32 %v645, %v646
      %v648 = vmul.f32 %v262, %v647
      %v650 = vlaneseq
      %v651 = vshrl.u32 %v650, 7
      %v652 = vsub.s32 0, %v651
      %v653 = vrot.slane %v648, %v652
      %v654 = vlaneseq
      %v655 = vshrl.u32 %v654, 7
      %v656 = vsub.s32 1, %v655
      %v657 = vrot.slane %v648, %v656
      %v658 = vlaneseq
      %v659 = vshrl.u32 %v658, 7
      %v660 = vsub.s32 2, %v659
      %v661 = vrot.slane %v648, %v660
      %v662 = vlaneseq
      %v663 = vshrl.u32 %v662, 7
      %v664 = vsub.s32 3, %v663
      %v665 = vrot.slane %v648, %v664
      %v666 = vlaneseq
      %v667 = vshrl.u32 %v666, 7
      %v668 = vsub.s32 4, %v667
      %v669 = vrot.slane %v648, %v668
      %v670 = vlaneseq
      %v671 = vshrl.u32 %v670, 7
      %v672 = vsub.s32 5, %v671
      %v673 = vrot.slane %v648, %v672
      %v680 = vsel %vm299, %v653, 0.0
      %v681 = vsel %vm299, %v657, 0.0
      %v682 = vadd.f32 %v680, %v681
      %v683 = vsel %vm299, %v661, 0.0
      %v684 = vadd.f32 %v682, %v683
      %v685 = vsel %vm299, %v665, 0.0
      %v686 = vadd.f32 %v684, %v685
      %v687 = vsel %vm299, %v669, 0.0
      %v688 = vadd.f32 %v686, %v687
      %v689 = vsel %vm299, %v673, 0.0
      %v690 = vadd.f32 %v688, %v689
      %691 = vadd.xlane.f32.xlu0 %v690
      %v692 = vpop.xlane.xlu0 %691
      %v693 = vmul.f32 %v692, 0.00390625
      %v695 = vlaneseq
      %v696 = vshrl.u32 %v695, 7
      %v697 = vsub.s32 0, %v696
      %v698 = vrot.slane %v647, %v697
      %v699 = vlaneseq
      %v700 = vshrl.u32 %v699, 7
      %v701 = vsub.s32 1, %v700
      %v702 = vrot.slane %v647, %v701
      %v703 = vlaneseq
      %v704 = vshrl.u32 %v703, 7
      %v705 = vsub.s32 2, %v704
      %v706 = vrot.slane %v647, %v705
      %v707 = vlaneseq
      %v708 = vshrl.u32 %v707, 7
      %v709 = vsub.s32 3, %v708
      %v710 = vrot.slane %v647, %v709
      %v711 = vlaneseq
      %v712 = vshrl.u32 %v711, 7
      %v713 = vsub.s32 4, %v712
      %v714 = vrot.slane %v647, %v713
      %v715 = vlaneseq
      %v716 = vshrl.u32 %v715, 7
      %v717 = vsub.s32 5, %v716
      %v718 = vrot.slane %v647, %v717
      %v725 = vmul.f32 %v693, %v698
      %v726 = vmul.f32 %v693, %v702
      %v727 = vmul.f32 %v693, %v706
      %v728 = vmul.f32 %v693, %v710
      %v729 = vmul.f32 %v693, %v714
      %v730 = vmul.f32 %v693, %v718
      %v737 = vcombine.low %v725, %v726
      %v738 = vcombine.low %v727, %v728
      %v739 = vcombine.low %v729, %v730
      %v741 = vunpack.c.l.s4 1966171168
      %v742 = vunpack.c.0.s8 %v741
      %v743 = vlaneseq
      %v744 = vshrl.u32 %v743, 7
      %v745 = vsub.s32 %v742, %v744
      %v746 = vrot.slane %v737, %v745
      %v748 = vunpack.c.l.s4 1966171168
      %v749 = vunpack.c.0.s8 %v748
      %v750 = vlaneseq
      %v751 = vshrl.u32 %v750, 7
      %v752 = vsub.s32 %v749, %v751
      %v753 = vrot.slane %v738, %v752
      %v755 = vunpack.c.l.s4 1966171168
      %v756 = vunpack.c.0.s8 %v755
      %v757 = vlaneseq
      %v758 = vshrl.u32 %v757, 7
      %v759 = vsub.s32 %v756, %v758
      %v760 = vrot.slane %v739, %v759
      %v761 = vcombine.low %v746, %v753
      %v763 = vunpack.c.l.s4 1966171168
      %v764 = vunpack.c.0.s8 %v763
      %v765 = vlaneseq
      %v766 = vshrl.u32 %v765, 7
      %v767 = vsub.s32 %v764, %v766
      %v768 = vrot.slane %v761, %v767
      %v770 = vunpack.c.l.s4 1966171168
      %v771 = vunpack.c.0.s8 %v770
      %v772 = vlaneseq
      %v773 = vshrl.u32 %v772, 7
      %v774 = vsub.s32 %v771, %v773
      %v775 = vrot.slane %v760, %v774
      %v776 = vcombine.low %v768, %v775
      %v778 = vsub.f32 %v648, %v776
      %v779 = vmul.f32 %v778, %v778
      %v781 = vlaneseq
      %v782 = vshrl.u32 %v781, 7
      %v783 = vsub.s32 0, %v782
      %v784 = vrot.slane %v779, %v783
      %v785 = vlaneseq
      %v786 = vshrl.u32 %v785, 7
      %v787 = vsub.s32 1, %v786
      %v788 = vrot.slane %v779, %v787
      %v789 = vlaneseq
      %v790 = vshrl.u32 %v789, 7
      %v791 = vsub.s32 2, %v790
      %v792 = vrot.slane %v779, %v791
      %v793 = vlaneseq
      %v794 = vshrl.u32 %v793, 7
      %v795 = vsub.s32 3, %v794
      %v796 = vrot.slane %v779, %v795
      %v797 = vlaneseq
      %v798 = vshrl.u32 %v797, 7
      %v799 = vsub.s32 4, %v798
      %v800 = vrot.slane %v779, %v799
      %v801 = vlaneseq
      %v802 = vshrl.u32 %v801, 7
      %v803 = vsub.s32 5, %v802
      %v804 = vrot.slane %v779, %v803
      %v811 = vsel %vm299, %v784, 0.0
      %v812 = vsel %vm299, %v788, 0.0
      %v813 = vadd.f32 %v811, %v812
      %v814 = vsel %vm299, %v792, 0.0
      %v815 = vadd.f32 %v813, %v814
      %v816 = vsel %vm299, %v796, 0.0
      %v817 = vadd.f32 %v815, %v816
      %v818 = vsel %vm299, %v800, 0.0
      %v819 = vadd.f32 %v817, %v818
      %v820 = vsel %vm299, %v804, 0.0
      %v821 = vadd.f32 %v819, %v820
      %822 = vadd.xlane.f32.xlu0 %v821
      %v823 = vpop.xlane.xlu0 %822
      %v824 = vmul.f32 %v823, 0.003921569
      %v825 = vrsqrt.pop %v824
      %v827 = vlaneseq
      %v828 = vshrl.u32 %v827, 7
      %v829 = vsub.s32 0, %v828
      %v830 = vrot.slane %v825, %v829
      %v832 = vmul.f32 %v778, %v830
      %v833 = vadd.f32 %v643, %v832
      %v835 = vlaneseq
      %v836 = vshrl.u32 %v835, 7
      %v837 = vsub.s32 0, %v836
      %v838 = vrot.slane %v833, %v837
      %v839 = vlaneseq
      %v840 = vshrl.u32 %v839, 7
      %v841 = vsub.s32 1, %v840
      %v842 = vrot.slane %v833, %v841
      %v843 = vlaneseq
      %v844 = vshrl.u32 %v843, 7
      %v845 = vsub.s32 2, %v844
      %v846 = vrot.slane %v833, %v845
      %v847 = vlaneseq
      %v848 = vshrl.u32 %v847, 7
      %v849 = vsub.s32 3, %v848
      %v850 = vrot.slane %v833, %v849
      %v851 = vlaneseq
      %v852 = vshrl.u32 %v851, 7
      %v853 = vsub.s32 4, %v852
      %v854 = vrot.slane %v833, %v853
      %v855 = vlaneseq
      %v856 = vshrl.u32 %v855, 7
      %v857 = vsub.s32 5, %v856
      %v858 = vrot.slane %v833, %v857
      %865 = vrot.lane.b32.xlu0 %v838, 17
      %v866 = vpop.permute.xlu0 %865
      %867 = vrot.lane.b32.xlu0 %v842, 17
      %v868 = vpop.permute.xlu0 %867
      %869 = vrot.lane.b32.xlu0 %v846, 17
      %v870 = vpop.permute.xlu0 %869
      %871 = vrot.lane.b32.xlu0 %v850, 17
      %v872 = vpop.permute.xlu0 %871
      %873 = vrot.lane.b32.xlu0 %v854, 17
      %v874 = vpop.permute.xlu0 %873
      %875 = vrot.lane.b32.xlu0 %v858, 17
      %v876 = vpop.permute.xlu0 %875
      %v877 = vlaneseq
      %v878 = vand.u32 %v877, 127
      %vm879 = vcmp.lt.s32.totalorder %v878, 17
      %v880 = vsel %vm879, %v874, %v876
      %v881 = vsel %vm879, %v872, %v874
      %v882 = vsel %vm879, %v870, %v872
      %v883 = vsel %vm879, %v868, %v870
      %v884 = vsel %vm879, %v866, %v868
      %v885 = vsel %vm879, %v876, %v866
      %v886 = vld [vmem:[%s1] ss:$8 sm:$0xf]
      %v887 = vld [vmem:[%s1] ss:$8 sm:$0x30]
      %v888 = vor.u32 %v886, %v887
      %v890 = vlaneseq
      %v891 = vshrl.u32 %v890, 7
      %v892 = vsub.s32 0, %v891
      %v893 = vrot.slane %v888, %v892
      %v894 = vlaneseq
      %v895 = vshrl.u32 %v894, 7
      %v896 = vsub.s32 1, %v895
      %v897 = vrot.slane %v888, %v896
      %v898 = vlaneseq
      %v899 = vshrl.u32 %v898, 7
      %v900 = vsub.s32 2, %v899
      %v901 = vrot.slane %v888, %v900
      %v902 = vlaneseq
      %v903 = vshrl.u32 %v902, 7
      %v904 = vsub.s32 3, %v903
      %v905 = vrot.slane %v888, %v904
      %v906 = vlaneseq
      %v907 = vshrl.u32 %v906, 7
      %v908 = vsub.s32 4, %v907
      %v909 = vrot.slane %v888, %v908
      %v910 = vlaneseq
      %v911 = vshrl.u32 %v910, 7
      %v912 = vsub.s32 5, %v911
      %v913 = vrot.slane %v888, %v912
      %v920 = vmul.f32 %v885, %v893
      %v921 = vmul.f32 %v884, %v897
      %v922 = vmul.f32 %v883, %v901
      %v923 = vmul.f32 %v882, %v905
      %v924 = vmul.f32 %v881, %v909
      %v925 = vmul.f32 %v880, %v913
      %v932 = vcombine.low %v920, %v921
      %v933 = vcombine.low %v922, %v923
      %v934 = vcombine.low %v924, %v925
      %v936 = vunpack.c.l.s4 1966171168
      %v937 = vunpack.c.0.s8 %v936
      %v938 = vlaneseq
      %v939 = vshrl.u32 %v938, 7
      %v940 = vsub.s32 %v937, %v939
      %v941 = vrot.slane %v932, %v940
      %v943 = vunpack.c.l.s4 1966171168
      %v944 = vunpack.c.0.s8 %v943
      %v945 = vlaneseq
      %v946 = vshrl.u32 %v945, 7
      %v947 = vsub.s32 %v944, %v946
      %v948 = vrot.slane %v933, %v947
      %v950 = vunpack.c.l.s4 1966171168
      %v951 = vunpack.c.0.s8 %v950
      %v952 = vlaneseq
      %v953 = vshrl.u32 %v952, 7
      %v954 = vsub.s32 %v951, %v953
      %v955 = vrot.slane %v934, %v954
      %v956 = vcombine.low %v941, %v948
      %v958 = vunpack.c.l.s4 1966171168
      %v959 = vunpack.c.0.s8 %v958
      %v960 = vlaneseq
      %v961 = vshrl.u32 %v960, 7
      %v962 = vsub.s32 %v959, %v961
      %v963 = vrot.slane %v956, %v962
      %v965 = vunpack.c.l.s4 1966171168
      %v966 = vunpack.c.0.s8 %v965
      %v967 = vlaneseq
      %v968 = vshrl.u32 %v967, 7
      %v969 = vsub.s32 %v966, %v968
      %v970 = vrot.slane %v955, %v969
      %v971 = vcombine.low %v963, %v970
      %v973 = vlaneseq
      %vm974 = vcmp.ge.s32.totalorder %v973, 0
      %vm975 = vcmp.lt.s32.totalorder %v973, 768
      %vm976 = vmand %vm974, %vm975
      %977 = vst.msk [vmem:[#allocation2] ss:$8 sm:$0xf] %vm976, %v971
      %978 = vst.msk [vmem:[#allocation2] ss:$8 sm:$0x30] %vm976, %v971
      %979 = vrot.lane.b32.xlu0 %v838, 16
      %v980 = vpop.permute.xlu0 %979
      %981 = vrot.lane.b32.xlu0 %v842, 16
      %v982 = vpop.permute.xlu0 %981
      %983 = vrot.lane.b32.xlu0 %v846, 16
      %v984 = vpop.permute.xlu0 %983
      %985 = vrot.lane.b32.xlu0 %v850, 16
      %v986 = vpop.permute.xlu0 %985
      %987 = vrot.lane.b32.xlu0 %v854, 16
      %v988 = vpop.permute.xlu0 %987
      %989 = vrot.lane.b32.xlu0 %v858, 16
      %v990 = vpop.permute.xlu0 %989
      %vm991 = vcmp.lt.s32.totalorder %v878, 16
      %v992 = vsel %vm991, %v988, %v990
      %v993 = vsel %vm991, %v986, %v988
      %v994 = vsel %vm991, %v984, %v986
      %v995 = vsel %vm991, %v982, %v984
      %v996 = vsel %vm991, %v980, %v982
      %v997 = vsel %vm991, %v990, %v980
      %s998 = scalar_lea.vmem %s1, 1
      %v999 = vld [vmem:[%s998] ss:$8 sm:$0xf]
      %v1000 = vld [vmem:[%s998] ss:$8 sm:$0x30]
      %v1001 = vor.u32 %v999, %v1000
      %v1003 = vlaneseq
      %v1004 = vshrl.u32 %v1003, 7
      %v1005 = vsub.s32 0, %v1004
      %v1006 = vrot.slane %v1001, %v1005
      %v1007 = vlaneseq
      %v1008 = vshrl.u32 %v1007, 7
      %v1009 = vsub.s32 1, %v1008
      %v1010 = vrot.slane %v1001, %v1009
      %v1011 = vlaneseq
      %v1012 = vshrl.u32 %v1011, 7
      %v1013 = vsub.s32 2, %v1012
      %v1014 = vrot.slane %v1001, %v1013
      %v1015 = vlaneseq
      %v1016 = vshrl.u32 %v1015, 7
      %v1017 = vsub.s32 3, %v1016
      %v1018 = vrot.slane %v1001, %v1017
      %v1019 = vlaneseq
      %v1020 = vshrl.u32 %v1019, 7
      %v1021 = vsub.s32 4, %v1020
      %v1022 = vrot.slane %v1001, %v1021
      %v1023 = vlaneseq
      %v1024 = vshrl.u32 %v1023, 7
      %v1025 = vsub.s32 5, %v1024
      %v1026 = vrot.slane %v1001, %v1025
      %v1033 = vmul.f32 %v997, %v1006
      %v1034 = vmul.f32 %v996, %v1010
      %v1035 = vmul.f32 %v995, %v1014
      %v1036 = vmul.f32 %v994, %v1018
      %v1037 = vmul.f32 %v993, %v1022
      %v1038 = vmul.f32 %v992, %v1026
      %v1045 = vcombine.low %v1033, %v1034
      %v1046 = vcombine.low %v1035, %v1036
      %v1047 = vcombine.low %v1037, %v1038
      %v1049 = vunpack.c.l.s4 1966171168
      %v1050 = vunpack.c.0.s8 %v1049
      %v1051 = vlaneseq
      %v1052 = vshrl.u32 %v1051, 7
      %v1053 = vsub.s32 %v1050, %v1052
      %v1054 = vrot.slane %v1045, %v1053
      %v1056 = vunpack.c.l.s4 1966171168
      %v1057 = vunpack.c.0.s8 %v1056
      %v1058 = vlaneseq
      %v1059 = vshrl.u32 %v1058, 7
      %v1060 = vsub.s32 %v1057, %v1059
      %v1061 = vrot.slane %v1046, %v1060
      %v1063 = vunpack.c.l.s4 1966171168
      %v1064 = vunpack.c.0.s8 %v1063
      %v1065 = vlaneseq
      %v1066 = vshrl.u32 %v1065, 7
      %v1067 = vsub.s32 %v1064, %v1066
      %v1068 = vrot.slane %v1047, %v1067
      %v1069 = vcombine.low %v1054, %v1061
      %v1071 = vunpack.c.l.s4 1966171168
      %v1072 = vunpack.c.0.s8 %v1071
      %v1073 = vlaneseq
      %v1074 = vshrl.u32 %v1073, 7
      %v1075 = vsub.s32 %v1072, %v1074
      %v1076 = vrot.slane %v1069, %v1075
      %v1078 = vunpack.c.l.s4 1966171168
      %v1079 = vunpack.c.0.s8 %v1078
      %v1080 = vlaneseq
      %v1081 = vshrl.u32 %v1080, 7
      %v1082 = vsub.s32 %v1079, %v1081
      %v1083 = vrot.slane %v1068, %v1082
      %v1084 = vcombine.low %v1076, %v1083
      %s1086 = scalar_lea.vmem [#allocation2], 1
      %1087 = vst.msk [vmem:[%s1086] ss:$8 sm:$0xf] %vm976, %v1084
      %1088 = vst.msk [vmem:[%s1086] ss:$8 sm:$0x30] %vm976, %v1084
      %1089 = vrot.lane.b32.xlu0 %v838, 15
      %v1090 = vpop.permute.xlu0 %1089
      %1091 = vrot.lane.b32.xlu0 %v842, 15
      %v1092 = vpop.permute.xlu0 %1091
      %1093 = vrot.lane.b32.xlu0 %v846, 15
      %v1094 = vpop.permute.xlu0 %1093
      %1095 = vrot.lane.b32.xlu0 %v850, 15
      %v1096 = vpop.permute.xlu0 %1095
      %1097 = vrot.lane.b32.xlu0 %v854, 15
      %v1098 = vpop.permute.xlu0 %1097
      %1099 = vrot.lane.b32.xlu0 %v858, 15
      %v1100 = vpop.permute.xlu0 %1099
      %vm1101 = vcmp.lt.s32.totalorder %v878, 15
      %v1102 = vsel %vm1101, %v1098, %v1100
      %v1103 = vsel %vm1101, %v1096, %v1098
      %v1104 = vsel %vm1101, %v1094, %v1096
      %v1105 = vsel %vm1101, %v1092, %v1094
      %v1106 = vsel %vm1101, %v1090, %v1092
      %v1107 = vsel %vm1101, %v1100, %v1090
      %s1108 = scalar_lea.vmem %s1, 2
      %v1109 = vld [vmem:[%s1108] ss:$8 sm:$0xf]
      %v1110 = vld [vmem:[%s1108] ss:$8 sm:$0x30]
      %v1111 = vor.u32 %v1109, %v1110
      %v1113 = vlaneseq
      %v1114 = vshrl.u32 %v1113, 7
      %v1115 = vsub.s32 0, %v1114
      %v1116 = vrot.slane %v1111, %v1115
      %v1117 = vlaneseq
      %v1118 = vshrl.u32 %v1117, 7
      %v1119 = vsub.s32 1, %v1118
      %v1120 = vrot.slane %v1111, %v1119
      %v1121 = vlaneseq
      %v1122 = vshrl.u32 %v1121, 7
      %v1123 = vsub.s32 2, %v1122
      %v1124 = vrot.slane %v1111, %v1123
      %v1125 = vlaneseq
      %v1126 = vshrl.u32 %v1125, 7
      %v1127 = vsub.s32 3, %v1126
      %v1128 = vrot.slane %v1111, %v1127
      %v1129 = vlaneseq
      %v1130 = vshrl.u32 %v1129, 7
      %v1131 = vsub.s32 4, %v1130
      %v1132 = vrot.slane %v1111, %v1131
      %v1133 = vlaneseq
      %v1134 = vshrl.u32 %v1133, 7
      %v1135 = vsub.s32 5, %v1134
      %v1136 = vrot.slane %v1111, %v1135
      %v1143 = vmul.f32 %v1107, %v1116
      %v1144 = vmul.f32 %v1106, %v1120
      %v1145 = vmul.f32 %v1105, %v1124
      %v1146 = vmul.f32 %v1104, %v1128
      %v1147 = vmul.f32 %v1103, %v1132
      %v1148 = vmul.f32 %v1102, %v1136
      %v1155 = vcombine.low %v1143, %v1144
      %v1156 = vcombine.low %v1145, %v1146
      %v1157 = vcombine.low %v1147, %v1148
      %v1159 = vunpack.c.l.s4 1966171168
      %v1160 = vunpack.c.0.s8 %v1159
      %v1161 = vlaneseq
      %v1162 = vshrl.u32 %v1161, 7
      %v1163 = vsub.s32 %v1160, %v1162
      %v1164 = vrot.slane %v1155, %v1163
      %v1166 = vunpack.c.l.s4 1966171168
      %v1167 = vunpack.c.0.s8 %v1166
      %v1168 = vlaneseq
      %v1169 = vshrl.u32 %v1168, 7
      %v1170 = vsub.s32 %v1167, %v1169
      %v1171 = vrot.slane %v1156, %v1170
      %v1173 = vunpack.c.l.s4 1966171168
      %v1174 = vunpack.c.0.s8 %v1173
      %v1175 = vlaneseq
      %v1176 = vshrl.u32 %v1175, 7
      %v1177 = vsub.s32 %v1174, %v1176
      %v1178 = vrot.slane %v1157, %v1177
      %v1179 = vcombine.low %v1164, %v1171
      %v1181 = vunpack.c.l.s4 1966171168
      %v1182 = vunpack.c.0.s8 %v1181
      %v1183 = vlaneseq
      %v1184 = vshrl.u32 %v1183, 7
      %v1185 = vsub.s32 %v1182, %v1184
      %v1186 = vrot.slane %v1179, %v1185
      %v1188 = vunpack.c.l.s4 1966171168
      %v1189 = vunpack.c.0.s8 %v1188
      %v1190 = vlaneseq
      %v1191 = vshrl.u32 %v1190, 7
      %v1192 = vsub.s32 %v1189, %v1191
      %v1193 = vrot.slane %v1178, %v1192
      %v1194 = vcombine.low %v1186, %v1193
      %s1196 = scalar_lea.vmem [#allocation2], 2
      %1197 = vst.msk [vmem:[%s1196] ss:$8 sm:$0xf] %vm976, %v1194
      %1198 = vst.msk [vmem:[%s1196] ss:$8 sm:$0x30] %vm976, %v1194
      %1199 = vrot.lane.b32.xlu0 %v838, 1
      %v1200 = vpop.permute.xlu0 %1199
      %1201 = vrot.lane.b32.xlu0 %v842, 1
      %v1202 = vpop.permute.xlu0 %1201
      %1203 = vrot.lane.b32.xlu0 %v846, 1
      %v1204 = vpop.permute.xlu0 %1203
      %1205 = vrot.lane.b32.xlu0 %v850, 1
      %v1206 = vpop.permute.xlu0 %1205
      %1207 = vrot.lane.b32.xlu0 %v854, 1
      %v1208 = vpop.permute.xlu0 %1207
      %1209 = vrot.lane.b32.xlu0 %v858, 1
      %v1210 = vpop.permute.xlu0 %1209
      %vm1211 = vcmp.lt.s32.totalorder %v878, 1
      %v1212 = vsel %vm1211, %v1208, %v1210
      %v1213 = vsel %vm1211, %v1206, %v1208
      %v1214 = vsel %vm1211, %v1204, %v1206
      %v1215 = vsel %vm1211, %v1202, %v1204
      %v1216 = vsel %vm1211, %v1200, %v1202
      %v1217 = vsel %vm1211, %v1210, %v1200
      %s1218 = scalar_lea.vmem %s1, 3
      %v1219 = vld [vmem:[%s1218] ss:$8 sm:$0xf]
      %v1220 = vld [vmem:[%s1218] ss:$8 sm:$0x30]
      %v1221 = vor.u32 %v1219, %v1220
      %v1223 = vlaneseq
      %v1224 = vshrl.u32 %v1223, 7
      %v1225 = vsub.s32 0, %v1224
      %v1226 = vrot.slane %v1221, %v1225
      %v1227 = vlaneseq
      %v1228 = vshrl.u32 %v1227, 7
      %v1229 = vsub.s32 1, %v1228
      %v1230 = vrot.slane %v1221, %v1229
      %v1231 = vlaneseq
      %v1232 = vshrl.u32 %v1231, 7
      %v1233 = vsub.s32 2, %v1232
      %v1234 = vrot.slane %v1221, %v1233
      %v1235 = vlaneseq
      %v1236 = vshrl.u32 %v1235, 7
      %v1237 = vsub.s32 3, %v1236
      %v1238 = vrot.slane %v1221, %v1237
      %v1239 = vlaneseq
      %v1240 = vshrl.u32 %v1239, 7
      %v1241 = vsub.s32 4, %v1240
      %v1242 = vrot.slane %v1221, %v1241
      %v1243 = vlaneseq
      %v1244 = vshrl.u32 %v1243, 7
      %v1245 = vsub.s32 5, %v1244
      %v1246 = vrot.slane %v1221, %v1245
      %v1253 = vmul.f32 %v1217, %v1226
      %v1254 = vmul.f32 %v1216, %v1230
      %v1255 = vmul.f32 %v1215, %v1234
      %v1256 = vmul.f32 %v1214, %v1238
      %v1257 = vmul.f32 %v1213, %v1242
      %v1258 = vmul.f32 %v1212, %v1246
      %v1265 = vcombine.low %v1253, %v1254
      %v1266 = vcombine.low %v1255, %v1256
      %v1267 = vcombine.low %v1257, %v1258
      %v1269 = vunpack.c.l.s4 1966171168
      %v1270 = vunpack.c.0.s8 %v1269
      %v1271 = vlaneseq
      %v1272 = vshrl.u32 %v1271, 7
      %v1273 = vsub.s32 %v1270, %v1272
      %v1274 = vrot.slane %v1265, %v1273
      %v1276 = vunpack.c.l.s4 1966171168
      %v1277 = vunpack.c.0.s8 %v1276
      %v1278 = vlaneseq
      %v1279 = vshrl.u32 %v1278, 7
      %v1280 = vsub.s32 %v1277, %v1279
      %v1281 = vrot.slane %v1266, %v1280
      %v1283 = vunpack.c.l.s4 1966171168
      %v1284 = vunpack.c.0.s8 %v1283
      %v1285 = vlaneseq
      %v1286 = vshrl.u32 %v1285, 7
      %v1287 = vsub.s32 %v1284, %v1286
      %v1288 = vrot.slane %v1267, %v1287
      %v1289 = vcombine.low %v1274, %v1281
      %v1291 = vunpack.c.l.s4 1966171168
      %v1292 = vunpack.c.0.s8 %v1291
      %v1293 = vlaneseq
      %v1294 = vshrl.u32 %v1293, 7
      %v1295 = vsub.s32 %v1292, %v1294
      %v1296 = vrot.slane %v1289, %v1295
      %v1298 = vunpack.c.l.s4 1966171168
      %v1299 = vunpack.c.0.s8 %v1298
      %v1300 = vlaneseq
      %v1301 = vshrl.u32 %v1300, 7
      %v1302 = vsub.s32 %v1299, %v1301
      %v1303 = vrot.slane %v1288, %v1302
      %v1304 = vcombine.low %v1296, %v1303
      %s1306 = scalar_lea.vmem [#allocation2], 3
      %1307 = vst.msk [vmem:[%s1306] ss:$8 sm:$0xf] %vm976, %v1304
      %1308 = vst.msk [vmem:[%s1306] ss:$8 sm:$0x30] %vm976, %v1304
      %s1309 = scalar_lea.vmem %s1, 4
      %v1310 = vld [vmem:[%s1309] ss:$8 sm:$0xf]
      %v1311 = vld [vmem:[%s1309] ss:$8 sm:$0x30]
      %v1312 = vor.u32 %v1310, %v1311
      %v1313 = vmul.f32 %v833, %v1312
      %s1314 = scalar_lea.vmem [#allocation2], 4
      %1315 = vst.msk [vmem:[%s1314] ss:$8 sm:$0xf] %vm976, %v1313
      %1316 = vst.msk [vmem:[%s1314] ss:$8 sm:$0x30] %vm976, %v1313
      %1317 = vrot.lane.b32.xlu0 %v838, 127
      %v1318 = vpop.permute.xlu0 %1317
      %1319 = vrot.lane.b32.xlu0 %v842, 127
      %v1320 = vpop.permute.xlu0 %1319
      %1321 = vrot.lane.b32.xlu0 %v846, 127
      %v1322 = vpop.permute.xlu0 %1321
      %1323 = vrot.lane.b32.xlu0 %v850, 127
      %v1324 = vpop.permute.xlu0 %1323
      %1325 = vrot.lane.b32.xlu0 %v854, 127
      %v1326 = vpop.permute.xlu0 %1325
      %1327 = vrot.lane.b32.xlu0 %v858, 127
      %v1328 = vpop.permute.xlu0 %1327
      %vm1329 = vcmp.lt.s32.totalorder %v878, 127
      %v1330 = vsel %vm1329, %v1326, %v1328
      %v1331 = vsel %vm1329, %v1324, %v1326
      %v1332 = vsel %vm1329, %v1322, %v1324
      %v1333 = vsel %vm1329, %v1320, %v1322
      %v1334 = vsel %vm1329, %v1318, %v1320
      %v1335 = vsel %vm1329, %v1328, %v1318
      %s1336 = scalar_lea.vmem %s1, 5
      %v1337 = vld [vmem:[%s1336] ss:$8 sm:$0xf]
      %v1338 = vld [vmem:[%s1336] ss:$8 sm:$0x30]
      %v1339 = vor.u32 %v1337, %v1338
      %v1341 = vlaneseq
      %v1342 = vshrl.u32 %v1341, 7
      %v1343 = vsub.s32 0, %v1342
      %v1344 = vrot.slane %v1339, %v1343
      %v1345 = vlaneseq
      %v1346 = vshrl.u32 %v1345, 7
      %v1347 = vsub.s32 1, %v1346
      %v1348 = vrot.slane %v1339, %v1347
      %v1349 = vlaneseq
      %v1350 = vshrl.u32 %v1349, 7
      %v1351 = vsub.s32 2, %v1350
      %v1352 = vrot.slane %v1339, %v1351
      %v1353 = vlaneseq
      %v1354 = vshrl.u32 %v1353, 7
      %v1355 = vsub.s32 3, %v1354
      %v1356 = vrot.slane %v1339, %v1355
      %v1357 = vlaneseq
      %v1358 = vshrl.u32 %v1357, 7
      %v1359 = vsub.s32 4, %v1358
      %v1360 = vrot.slane %v1339, %v1359
      %v1361 = vlaneseq
      %v1362 = vshrl.u32 %v1361, 7
      %v1363 = vsub.s32 5, %v1362
      %v1364 = vrot.slane %v1339, %v1363
      %v1371 = vmul.f32 %v1334, %v1344
      %v1372 = vmul.f32 %v1333, %v1348
      %v1373 = vmul.f32 %v1332, %v1352
      %v1374 = vmul.f32 %v1331, %v1356
      %v1375 = vmul.f32 %v1330, %v1360
      %v1376 = vmul.f32 %v1335, %v1364
      %v1383 = vcombine.low %v1371, %v1372
      %v1384 = vcombine.low %v1373, %v1374
      %v1385 = vcombine.low %v1375, %v1376
      %v1387 = vunpack.c.l.s4 1966171168
      %v1388 = vunpack.c.0.s8 %v1387
      %v1389 = vlaneseq
      %v1390 = vshrl.u32 %v1389, 7
      %v1391 = vsub.s32 %v1388, %v1390
      %v1392 = vrot.slane %v1383, %v1391
      %v1394 = vunpack.c.l.s4 1966171168
      %v1395 = vunpack.c.0.s8 %v1394
      %v1396 = vlaneseq
      %v1397 = vshrl.u32 %v1396, 7
      %v1398 = vsub.s32 %v1395, %v1397
      %v1399 = vrot.slane %v1384, %v1398
      %v1401 = vunpack.c.l.s4 1966171168
      %v1402 = vunpack.c.0.s8 %v1401
      %v1403 = vlaneseq
      %v1404 = vshrl.u32 %v1403, 7
      %v1405 = vsub.s32 %v1402, %v1404
      %v1406 = vrot.slane %v1385, %v1405
      %v1407 = vcombine.low %v1392, %v1399
      %v1409 = vunpack.c.l.s4 1966171168
      %v1410 = vunpack.c.0.s8 %v1409
      %v1411 = vlaneseq
      %v1412 = vshrl.u32 %v1411, 7
      %v1413 = vsub.s32 %v1410, %v1412
      %v1414 = vrot.slane %v1407, %v1413
      %v1416 = vunpack.c.l.s4 1966171168
      %v1417 = vunpack.c.0.s8 %v1416
      %v1418 = vlaneseq
      %v1419 = vshrl.u32 %v1418, 7
      %v1420 = vsub.s32 %v1417, %v1419
      %v1421 = vrot.slane %v1406, %v1420
      %v1422 = vcombine.low %v1414, %v1421
      %s1424 = scalar_lea.vmem [#allocation2], 5
      %1425 = vst.msk [vmem:[%s1424] ss:$8 sm:$0xf] %vm976, %v1422
      %1426 = vst.msk [vmem:[%s1424] ss:$8 sm:$0x30] %vm976, %v1422
      %1427 = vrot.lane.b32.xlu0 %v838, 113
      %v1428 = vpop.permute.xlu0 %1427
      %1429 = vrot.lane.b32.xlu0 %v842, 113
      %v1430 = vpop.permute.xlu0 %1429
      %1431 = vrot.lane.b32.xlu0 %v846, 113
      %v1432 = vpop.permute.xlu0 %1431
      %1433 = vrot.lane.b32.xlu0 %v850, 113
      %v1434 = vpop.permute.xlu0 %1433
      %1435 = vrot.lane.b32.xlu0 %v854, 113
      %v1436 = vpop.permute.xlu0 %1435
      %1437 = vrot.lane.b32.xlu0 %v858, 113
      %v1438 = vpop.permute.xlu0 %1437
      %vm1439 = vcmp.lt.s32.totalorder %v878, 113
      %v1440 = vsel %vm1439, %v1436, %v1438
      %v1441 = vsel %vm1439, %v1434, %v1436
      %v1442 = vsel %vm1439, %v1432, %v1434
      %v1443 = vsel %vm1439, %v1430, %v1432
      %v1444 = vsel %vm1439, %v1428, %v1430
      %v1445 = vsel %vm1439, %v1438, %v1428
      %s1446 = scalar_lea.vmem %s1, 6
      %v1447 = vld [vmem:[%s1446] ss:$8 sm:$0xf]
      %v1448 = vld [vmem:[%s1446] ss:$8 sm:$0x30]
      %v1449 = vor.u32 %v1447, %v1448
      %v1451 = vlaneseq
      %v1452 = vshrl.u32 %v1451, 7
      %v1453 = vsub.s32 0, %v1452
      %v1454 = vrot.slane %v1449, %v1453
      %v1455 = vlaneseq
      %v1456 = vshrl.u32 %v1455, 7
      %v1457 = vsub.s32 1, %v1456
      %v1458 = vrot.slane %v1449, %v1457
      %v1459 = vlaneseq
      %v1460 = vshrl.u32 %v1459, 7
      %v1461 = vsub.s32 2, %v1460
      %v1462 = vrot.slane %v1449, %v1461
      %v1463 = vlaneseq
      %v1464 = vshrl.u32 %v1463, 7
      %v1465 = vsub.s32 3, %v1464
      %v1466 = vrot.slane %v1449, %v1465
      %v1467 = vlaneseq
      %v1468 = vshrl.u32 %v1467, 7
      %v1469 = vsub.s32 4, %v1468
      %v1470 = vrot.slane %v1449, %v1469
      %v1471 = vlaneseq
      %v1472 = vshrl.u32 %v1471, 7
      %v1473 = vsub.s32 5, %v1472
      %v1474 = vrot.slane %v1449, %v1473
      %v1481 = vmul.f32 %v1444, %v1454
      %v1482 = vmul.f32 %v1443, %v1458
      %v1483 = vmul.f32 %v1442, %v1462
      %v1484 = vmul.f32 %v1441, %v1466
      %v1485 = vmul.f32 %v1440, %v1470
      %v1486 = vmul.f32 %v1445, %v1474
      %v1493 = vcombine.low %v1481, %v1482
      %v1494 = vcombine.low %v1483, %v1484
      %v1495 = vcombine.low %v1485, %v1486
      %v1497 = vunpack.c.l.s4 1966171168
      %v1498 = vunpack.c.0.s8 %v1497
      %v1499 = vlaneseq
      %v1500 = vshrl.u32 %v1499, 7
      %v1501 = vsub.s32 %v1498, %v1500
      %v1502 = vrot.slane %v1493, %v1501
      %v1504 = vunpack.c.l.s4 1966171168
      %v1505 = vunpack.c.0.s8 %v1504
      %v1506 = vlaneseq
      %v1507 = vshrl.u32 %v1506, 7
      %v1508 = vsub.s32 %v1505, %v1507
      %v1509 = vrot.slane %v1494, %v1508
      %v1511 = vunpack.c.l.s4 1966171168
      %v1512 = vunpack.c.0.s8 %v1511
      %v1513 = vlaneseq
      %v1514 = vshrl.u32 %v1513, 7
      %v1515 = vsub.s32 %v1512, %v1514
      %v1516 = vrot.slane %v1495, %v1515
      %v1517 = vcombine.low %v1502, %v1509
      %v1519 = vunpack.c.l.s4 1966171168
      %v1520 = vunpack.c.0.s8 %v1519
      %v1521 = vlaneseq
      %v1522 = vshrl.u32 %v1521, 7
      %v1523 = vsub.s32 %v1520, %v1522
      %v1524 = vrot.slane %v1517, %v1523
      %v1526 = vunpack.c.l.s4 1966171168
      %v1527 = vunpack.c.0.s8 %v1526
      %v1528 = vlaneseq
      %v1529 = vshrl.u32 %v1528, 7
      %v1530 = vsub.s32 %v1527, %v1529
      %v1531 = vrot.slane %v1516, %v1530
      %v1532 = vcombine.low %v1524, %v1531
      %s1534 = scalar_lea.vmem [#allocation2], 6
      %1535 = vst.msk [vmem:[%s1534] ss:$8 sm:$0xf] %vm976, %v1532
      %1536 = vst.msk [vmem:[%s1534] ss:$8 sm:$0x30] %vm976, %v1532
      %1537 = vrot.lane.b32.xlu0 %v838, 112
      %v1538 = vpop.permute.xlu0 %1537
      %1539 = vrot.lane.b32.xlu0 %v842, 112
      %v1540 = vpop.permute.xlu0 %1539
      %1541 = vrot.lane.b32.xlu0 %v846, 112
      %v1542 = vpop.permute.xlu0 %1541
      %1543 = vrot.lane.b32.xlu0 %v850, 112
      %v1544 = vpop.permute.xlu0 %1543
      %1545 = vrot.lane.b32.xlu0 %v854, 112
      %v1546 = vpop.permute.xlu0 %1545
      %1547 = vrot.lane.b32.xlu0 %v858, 112
      %v1548 = vpop.permute.xlu0 %1547
      %vm1549 = vcmp.lt.s32.totalorder %v878, 112
      %v1550 = vsel %vm1549, %v1546, %v1548
      %v1551 = vsel %vm1549, %v1544, %v1546
      %v1552 = vsel %vm1549, %v1542, %v1544
      %v1553 = vsel %vm1549, %v1540, %v1542
      %v1554 = vsel %vm1549, %v1538, %v1540
      %v1555 = vsel %vm1549, %v1548, %v1538
      %s1556 = scalar_lea.vmem %s1, 7
      %v1557 = vld [vmem:[%s1556] ss:$8 sm:$0xf]
      %v1558 = vld [vmem:[%s1556] ss:$8 sm:$0x30]
      %v1559 = vor.u32 %v1557, %v1558
      %v1561 = vlaneseq
      %v1562 = vshrl.u32 %v1561, 7
      %v1563 = vsub.s32 0, %v1562
      %v1564 = vrot.slane %v1559, %v1563
      %v1565 = vlaneseq
      %v1566 = vshrl.u32 %v1565, 7
      %v1567 = vsub.s32 1, %v1566
      %v1568 = vrot.slane %v1559, %v1567
      %v1569 = vlaneseq
      %v1570 = vshrl.u32 %v1569, 7
      %v1571 = vsub.s32 2, %v1570
      %v1572 = vrot.slane %v1559, %v1571
      %v1573 = vlaneseq
      %v1574 = vshrl.u32 %v1573, 7
      %v1575 = vsub.s32 3, %v1574
      %v1576 = vrot.slane %v1559, %v1575
      %v1577 = vlaneseq
      %v1578 = vshrl.u32 %v1577, 7
      %v1579 = vsub.s32 4, %v1578
      %v1580 = vrot.slane %v1559, %v1579
      %v1581 = vlaneseq
      %v1582 = vshrl.u32 %v1581, 7
      %v1583 = vsub.s32 5, %v1582
      %v1584 = vrot.slane %v1559, %v1583
      %v1591 = vmul.f32 %v1554, %v1564
      %v1592 = vmul.f32 %v1553, %v1568
      %v1593 = vmul.f32 %v1552, %v1572
      %v1594 = vmul.f32 %v1551, %v1576
      %v1595 = vmul.f32 %v1550, %v1580
      %v1596 = vmul.f32 %v1555, %v1584
      %v1603 = vcombine.low %v1591, %v1592
      %v1604 = vcombine.low %v1593, %v1594
      %v1605 = vcombine.low %v1595, %v1596
      %v1607 = vunpack.c.l.s4 1966171168
      %v1608 = vunpack.c.0.s8 %v1607
      %v1609 = vlaneseq
      %v1610 = vshrl.u32 %v1609, 7
      %v1611 = vsub.s32 %v1608, %v1610
      %v1612 = vrot.slane %v1603, %v1611
      %v1614 = vunpack.c.l.s4 1966171168
      %v1615 = vunpack.c.0.s8 %v1614
      %v1616 = vlaneseq
      %v1617 = vshrl.u32 %v1616, 7
      %v1618 = vsub.s32 %v1615, %v1617
      %v1619 = vrot.slane %v1604, %v1618
      %v1621 = vunpack.c.l.s4 1966171168
      %v1622 = vunpack.c.0.s8 %v1621
      %v1623 = vlaneseq
      %v1624 = vshrl.u32 %v1623, 7
      %v1625 = vsub.s32 %v1622, %v1624
      %v1626 = vrot.slane %v1605, %v1625
      %v1627 = vcombine.low %v1612, %v1619
      %v1629 = vunpack.c.l.s4 1966171168
      %v1630 = vunpack.c.0.s8 %v1629
      %v1631 = vlaneseq
      %v1632 = vshrl.u32 %v1631, 7
      %v1633 = vsub.s32 %v1630, %v1632
      %v1634 = vrot.slane %v1627, %v1633
      %v1636 = vunpack.c.l.s4 1966171168
      %v1637 = vunpack.c.0.s8 %v1636
      %v1638 = vlaneseq
      %v1639 = vshrl.u32 %v1638, 7
      %v1640 = vsub.s32 %v1637, %v1639
      %v1641 = vrot.slane %v1626, %v1640
      %v1642 = vcombine.low %v1634, %v1641
      %s1644 = scalar_lea.vmem [#allocation2], 7
      %1645 = vst.msk [vmem:[%s1644] ss:$8 sm:$0xf] %vm976, %v1642
      %1646 = vst.msk [vmem:[%s1644] ss:$8 sm:$0x30] %vm976, %v1642
      %1647 = vrot.lane.b32.xlu0 %v838, 111
      %v1648 = vpop.permute.xlu0 %1647
      %1649 = vrot.lane.b32.xlu0 %v842, 111
      %v1650 = vpop.permute.xlu0 %1649
      %1651 = vrot.lane.b32.xlu0 %v846, 111
      %v1652 = vpop.permute.xlu0 %1651
      %1653 = vrot.lane.b32.xlu0 %v850, 111
      %v1654 = vpop.permute.xlu0 %1653
      %1655 = vrot.lane.b32.xlu0 %v854, 111
      %v1656 = vpop.permute.xlu0 %1655
      %1657 = vrot.lane.b32.xlu0 %v858, 111
      %v1658 = vpop.permute.xlu0 %1657
      %vm1659 = vcmp.lt.s32.totalorder %v878, 111
      %v1660 = vsel %vm1659, %v1656, %v1658
      %v1661 = vsel %vm1659, %v1654, %v1656
      %v1662 = vsel %vm1659, %v1652, %v1654
      %v1663 = vsel %vm1659, %v1650, %v1652
      %v1664 = vsel %vm1659, %v1648, %v1650
      %v1665 = vsel %vm1659, %v1658, %v1648
      %s1666 = scalar_lea.vmem %s1, 48
      %v1667 = vld [vmem:[%s1666] ss:$8 sm:$0xf]
      %v1668 = vld [vmem:[%s1666] ss:$8 sm:$0x30]
      %v1669 = vor.u32 %v1667, %v1668
      %v1671 = vlaneseq
      %v1672 = vshrl.u32 %v1671, 7
      %v1673 = vsub.s32 0, %v1672
      %v1674 = vrot.slane %v1669, %v1673
      %v1675 = vlaneseq
      %v1676 = vshrl.u32 %v1675, 7
      %v1677 = vsub.s32 1, %v1676
      %v1678 = vrot.slane %v1669, %v1677
      %v1679 = vlaneseq
      %v1680 = vshrl.u32 %v1679, 7
      %v1681 = vsub.s32 2, %v1680
      %v1682 = vrot.slane %v1669, %v1681
      %v1683 = vlaneseq
      %v1684 = vshrl.u32 %v1683, 7
      %v1685 = vsub.s32 3, %v1684
      %v1686 = vrot.slane %v1669, %v1685
      %v1687 = vlaneseq
      %v1688 = vshrl.u32 %v1687, 7
      %v1689 = vsub.s32 4, %v1688
      %v1690 = vrot.slane %v1669, %v1689
      %v1691 = vlaneseq
      %v1692 = vshrl.u32 %v1691, 7
      %v1693 = vsub.s32 5, %v1692
      %v1694 = vrot.slane %v1669, %v1693
      %v1701 = vmul.f32 %v1664, %v1674
      %v1702 = vmul.f32 %v1663, %v1678
      %v1703 = vmul.f32 %v1662, %v1682
      %v1704 = vmul.f32 %v1661, %v1686
      %v1705 = vmul.f32 %v1660, %v1690
      %v1706 = vmul.f32 %v1665, %v1694
      %v1713 = vcombine.low %v1701, %v1702
      %v1714 = vcombine.low %v1703, %v1704
      %v1715 = vcombine.low %v1705, %v1706
      %v1717 = vunpack.c.l.s4 1966171168
      %v1718 = vunpack.c.0.s8 %v1717
      %v1719 = vlaneseq
      %v1720 = vshrl.u32 %v1719, 7
      %v1721 = vsub.s32 %v1718, %v1720
      %v1722 = vrot.slane %v1713, %v1721
      %v1724 = vunpack.c.l.s4 1966171168
      %v1725 = vunpack.c.0.s8 %v1724
      %v1726 = vlaneseq
      %v1727 = vshrl.u32 %v1726, 7
      %v1728 = vsub.s32 %v1725, %v1727
      %v1729 = vrot.slane %v1714, %v1728
      %v1731 = vunpack.c.l.s4 1966171168
      %v1732 = vunpack.c.0.s8 %v1731
      %v1733 = vlaneseq
      %v1734 = vshrl.u32 %v1733, 7
      %v1735 = vsub.s32 %v1732, %v1734
      %v1736 = vrot.slane %v1715, %v1735
      %v1737 = vcombine.low %v1722, %v1729
      %v1739 = vunpack.c.l.s4 1966171168
      %v1740 = vunpack.c.0.s8 %v1739
      %v1741 = vlaneseq
      %v1742 = vshrl.u32 %v1741, 7
      %v1743 = vsub.s32 %v1740, %v1742
      %v1744 = vrot.slane %v1737, %v1743
      %v1746 = vunpack.c.l.s4 1966171168
      %v1747 = vunpack.c.0.s8 %v1746
      %v1748 = vlaneseq
      %v1749 = vshrl.u32 %v1748, 7
      %v1750 = vsub.s32 %v1747, %v1749
      %v1751 = vrot.slane %v1736, %v1750
      %v1752 = vcombine.low %v1744, %v1751
      %s1754 = scalar_lea.vmem [#allocation2], 48
      %1755 = vst.msk [vmem:[%s1754] ss:$8 sm:$0xf] %vm976, %v1752
      %1756 = vst.msk [vmem:[%s1754] ss:$8 sm:$0x30] %vm976, %v1752
      %s1757 = scalar_lea.vmem [#allocation2], 49
      %1758 = vst.msk [vmem:[%s1757] ss:$8 sm:$0xf] %vm976, 1.0
      %1759 = vst.msk [vmem:[%s1757] ss:$8 sm:$0x30] %vm976, 1.0
      %1760 = vst [vmem:[#allocation2 + $0x30] sm:$0xfc] 0.0
      %1761 = vst [vmem:[#allocation2 + $0x38] sm:$0xfc] 0.0
      %1762 = vst [vmem:[#allocation2 + $0x40] sm:$0xfc] 0.0
      %1763 = vst [vmem:[#allocation2 + $0x48] sm:$0xfc] 0.0
      %1764 = vst [vmem:[#allocation2 + $0x50] sm:$0xfc] 0.0
      %1765 = vst [vmem:[#allocation2 + $0x58] sm:$0xfc] 0.0
      %v1766 = vld [vmem:[%s2] sm:$0xff]
      %v1767 = vld [vmem:[#allocation2] sm:$0xff]
      %v1768 = vld [vmem:[#allocation2 + $0x8] sm:$0xff]
      %v1769 = vld [vmem:[#allocation2 + $0x10] sm:$0xff]
      %v1770 = vld [vmem:[#allocation2 + $0x18] sm:$0xff]
      %v1771 = vld [vmem:[#allocation2 + $0x20] sm:$0xff]
      %v1772 = vld [vmem:[#allocation2 + $0x28] sm:$0xff]
      %v1773 = vld [vmem:[#allocation2 + $0x30] sm:$0xff]
      %v1774 = vld [vmem:[#allocation2 + $0x38] sm:$0xff]
      %v1775 = vld [vmem:[#allocation2 + $0x40] sm:$0xff]
      %v1776 = vld [vmem:[#allocation2 + $0x48] sm:$0xff]
      %v1777 = vld [vmem:[#allocation2 + $0x50] sm:$0xff]
      %v1778 = vld [vmem:[#allocation2 + $0x58] sm:$0xff]
      %vm1779 = vcmask 130048
      %v1781 = vsel %vm1779, %v1766, 0
      %1783 = vmatprep.subr.mxu0 %v1768
      %1784 = vmatpush1.msra.mxu0 %v1767
      %1785 = vmatprep.subr.mxu0 %v1774
      %1786 = vmatpush1.msra.mxu0 %v1773
      %1787 = vmatprep.subr.mxu0 0.0
      %1788 = vmatpush1.msra.mxu0 0.0
      %1789 = vmatprep.subr.mxu0 0.0
      %1790 = vmatpush1.msra.mxu0 0.0
      %1791 = vmatprep.subr.mxu0 0.0
      %1792 = vmatpush1.msra.mxu0 0.0
      %1793 = vmatprep.subr.mxu0 0.0
      %1794 = vmatpush1.msra.mxu0 0.0
      %1795 = vmatprep.subr.mxu0 0.0
      %1796 = vmatpush1.msra.mxu0 0.0
      %1797 = vmatprep.subr.mxu0 0.0
      %1798 = vmatpush1.msra.mxu0 0.0
      %1799 = vmatprep.subr.mxu0 0.0
      %1800 = vmatpush1.msra.mxu0 0.0
      %1801 = vmatprep.subr.mxu0 0.0
      %1802 = vmatpush1.msra.mxu0 0.0
      %1803 = vmatprep.subr.mxu0 0.0
      %1804 = vmatpush1.msra.mxu0 0.0
      %1805 = vmatprep.subr.mxu0 0.0
      %1806 = vmatpush1.msra.mxu0 0.0
      %1807 = vmatprep.subr.mxu0 0.0
      %1808 = vmatpush1.msra.mxu0 0.0
      %1809 = vmatprep.subr.mxu0 0.0
      %1810 = vmatpush1.msra.mxu0 0.0
      %1811 = vmatprep.subr.mxu0 0.0
      %1812 = vmatpush1.msra.mxu0 0.0
      %1813 = vmatprep.subr.mxu0 0.0
      %1814 = vmatpush1.msra.mxu0 0.0
      %1815 = vmatprep.subr.mxu0 0.0
      %1816 = vmatpush1.msra.mxu0 0.0
      %1817 = vmatprep.subr.mxu0 0.0
      %1818 = vmatpush1.msra.mxu0 0.0
      %1819 = vmatprep.subr.mxu0 0.0
      %1820 = vmatpush1.msra.mxu0 0.0
      %1821 = vmatprep.subr.mxu0 0.0
      %1822 = vmatpush1.msra.mxu0 0.0
      %1823 = vmatprep.subr.mxu0 0.0
      %1824 = vmatpush1.msra.mxu0 0.0
      %1825 = vmatprep.subr.mxu0 0.0
      %1826 = vmatpush1.msra.mxu0 0.0
      %1827 = vmatprep.subr.mxu0 0.0
      %1828 = vmatpush1.msra.mxu0 0.0
      %1829 = vmatprep.subr.mxu0 0.0
      %1830 = vmatpush1.msra.mxu0 0.0
      %1831 = vmatprep.subr.mxu0 0.0
      %1832 = vmatpush1.msra.mxu0 0.0
      %1833 = vmatprep.subr.mxu0 0.0
      %1834 = vmatpush1.msra.mxu0 0.0
      %1835 = vmatprep.subr.mxu0 0.0
      %1836 = vmatpush1.msra.mxu0 0.0
      %1837 = vmatprep.subr.mxu0 0.0
      %1838 = vmatpush1.msra.mxu0 0.0
      %1839 = vmatprep.subr.mxu0 0.0
      %1840 = vmatpush1.msra.mxu0 0.0
      %1841 = vmatprep.subr.mxu0 0.0
      %1842 = vmatpush1.msra.mxu0 0.0
      %1843 = vmatprep.subr.mxu0 0.0
      %1844 = vmatpush1.msra.mxu0 0.0
      %1845 = vmatprep.subr.mxu0 0.0
      %1846 = vmatpush1.msra.mxu0 0.0
      %1847 = vmatprep.mubr.f32.mxu0 0.0
      %1848 = vmatmul.mubr.f32.gmra.mrb[0].mxu0 %v1781
      %v1849 = vpop.f32.mrb[0].mxu0
      %v1850 = vadd.f32 0.0, %v1849
      %v1851 = vpop.f32.mrb[0].mxu0
      %v1852 = vadd.f32 0.0, %v1851
      %1853 = vdwg.mxu0
      %1854 = vmatprep.subr.mxu0 %v1770
      %1855 = vmatpush1.msra.mxu0 %v1769
      %1856 = vmatprep.subr.mxu0 %v1776
      %1857 = vmatpush1.msra.mxu0 %v1775
      %1858 = vmatprep.subr.mxu0 0.0
      %1859 = vmatpush1.msra.mxu0 0.0
      %1860 = vmatprep.subr.mxu0 0.0
      %1861 = vmatpush1.msra.mxu0 0.0
      %1862 = vmatprep.subr.mxu0 0.0
      %1863 = vmatpush1.msra.mxu0 0.0
      %1864 = vmatprep.subr.mxu0 0.0
      %1865 = vmatpush1.msra.mxu0 0.0
      %1866 = vmatprep.subr.mxu0 0.0
      %1867 = vmatpush1.msra.mxu0 0.0
      %1868 = vmatprep.subr.mxu0 0.0
      %1869 = vmatpush1.msra.mxu0 0.0
      %1870 = vmatprep.subr.mxu0 0.0
      %1871 = vmatpush1.msra.mxu0 0.0
      %1872 = vmatprep.subr.mxu0 0.0
      %1873 = vmatpush1.msra.mxu0 0.0
      %1874 = vmatprep.subr.mxu0 0.0
      %1875 = vmatpush1.msra.mxu0 0.0
      %1876 = vmatprep.subr.mxu0 0.0
      %1877 = vmatpush1.msra.mxu0 0.0
      %1878 = vmatprep.subr.mxu0 0.0
      %1879 = vmatpush1.msra.mxu0 0.0
      %1880 = vmatprep.subr.mxu0 0.0
      %1881 = vmatpush1.msra.mxu0 0.0
      %1882 = vmatprep.subr.mxu0 0.0
      %1883 = vmatpush1.msra.mxu0 0.0
      %1884 = vmatprep.subr.mxu0 0.0
      %1885 = vmatpush1.msra.mxu0 0.0
      %1886 = vmatprep.subr.mxu0 0.0
      %1887 = vmatpush1.msra.mxu0 0.0
      %1888 = vmatprep.subr.mxu0 0.0
      %1889 = vmatpush1.msra.mxu0 0.0
      %1890 = vmatprep.subr.mxu0 0.0
      %1891 = vmatpush1.msra.mxu0 0.0
      %1892 = vmatprep.subr.mxu0 0.0
      %1893 = vmatpush1.msra.mxu0 0.0
      %1894 = vmatprep.subr.mxu0 0.0
      %1895 = vmatpush1.msra.mxu0 0.0
      %1896 = vmatprep.subr.mxu0 0.0
      %1897 = vmatpush1.msra.mxu0 0.0
      %1898 = vmatprep.subr.mxu0 0.0
      %1899 = vmatpush1.msra.mxu0 0.0
      %1900 = vmatprep.subr.mxu0 0.0
      %1901 = vmatpush1.msra.mxu0 0.0
      %1902 = vmatprep.subr.mxu0 0.0
      %1903 = vmatpush1.msra.mxu0 0.0
      %1904 = vmatprep.subr.mxu0 0.0
      %1905 = vmatpush1.msra.mxu0 0.0
      %1906 = vmatprep.subr.mxu0 0.0
      %1907 = vmatpush1.msra.mxu0 0.0
      %1908 = vmatprep.subr.mxu0 0.0
      %1909 = vmatpush1.msra.mxu0 0.0
      %1910 = vmatprep.subr.mxu0 0.0
      %1911 = vmatpush1.msra.mxu0 0.0
      %1912 = vmatprep.subr.mxu0 0.0
      %1913 = vmatpush1.msra.mxu0 0.0
      %1914 = vmatprep.subr.mxu0 0.0
      %1915 = vmatpush1.msra.mxu0 0.0
      %1916 = vmatprep.subr.mxu0 0.0
      %1917 = vmatpush1.msra.mxu0 0.0
      %1918 = vmatprep.mubr.f32.mxu0 0.0
      %1919 = vmatmul.mubr.f32.gmra.mrb[0].mxu0 %v1781
      %v1920 = vpop.f32.mrb[0].mxu0
      %v1921 = vadd.f32 0.0, %v1920
      %v1922 = vpop.f32.mrb[0].mxu0
      %v1923 = vadd.f32 0.0, %v1922
      %1924 = vdwg.mxu0
      %1925 = vmatprep.subr.mxu0 %v1772
      %1926 = vmatpush1.msra.mxu0 %v1771
      %1927 = vmatprep.subr.mxu0 %v1778
      %1928 = vmatpush1.msra.mxu0 %v1777
      %1929 = vmatprep.subr.mxu0 0.0
      %1930 = vmatpush1.msra.mxu0 0.0
      %1931 = vmatprep.subr.mxu0 0.0
      %1932 = vmatpush1.msra.mxu0 0.0
      %1933 = vmatprep.subr.mxu0 0.0
      %1934 = vmatpush1.msra.mxu0 0.0
      %1935 = vmatprep.subr.mxu0 0.0
      %1936 = vmatpush1.msra.mxu0 0.0
      %1937 = vmatprep.subr.mxu0 0.0
      %1938 = vmatpush1.msra.mxu0 0.0
      %1939 = vmatprep.subr.mxu0 0.0
      %1940 = vmatpush1.msra.mxu0 0.0
      %1941 = vmatprep.subr.mxu0 0.0
      %1942 = vmatpush1.msra.mxu0 0.0
      %1943 = vmatprep.subr.mxu0 0.0
      %1944 = vmatpush1.msra.mxu0 0.0
      %1945 = vmatprep.subr.mxu0 0.0
      %1946 = vmatpush1.msra.mxu0 0.0
      %1947 = vmatprep.subr.mxu0 0.0
      %1948 = vmatpush1.msra.mxu0 0.0
      %1949 = vmatprep.subr.mxu0 0.0
      %1950 = vmatpush1.msra.mxu0 0.0
      %1951 = vmatprep.subr.mxu0 0.0
      %1952 = vmatpush1.msra.mxu0 0.0
      %1953 = vmatprep.subr.mxu0 0.0
      %1954 = vmatpush1.msra.mxu0 0.0
      %1955 = vmatprep.subr.mxu0 0.0
      %1956 = vmatpush1.msra.mxu0 0.0
      %1957 = vmatprep.subr.mxu0 0.0
      %1958 = vmatpush1.msra.mxu0 0.0
      %1959 = vmatprep.subr.mxu0 0.0
      %1960 = vmatpush1.msra.mxu0 0.0
      %1961 = vmatprep.subr.mxu0 0.0
      %1962 = vmatpush1.msra.mxu0 0.0
      %1963 = vmatprep.subr.mxu0 0.0
      %1964 = vmatpush1.msra.mxu0 0.0
      %1965 = vmatprep.subr.mxu0 0.0
      %1966 = vmatpush1.msra.mxu0 0.0
      %1967 = vmatprep.subr.mxu0 0.0
      %1968 = vmatpush1.msra.mxu0 0.0
      %1969 = vmatprep.subr.mxu0 0.0
      %1970 = vmatpush1.msra.mxu0 0.0
      %1971 = vmatprep.subr.mxu0 0.0
      %1972 = vmatpush1.msra.mxu0 0.0
      %1973 = vmatprep.subr.mxu0 0.0
      %1974 = vmatpush1.msra.mxu0 0.0
      %1975 = vmatprep.subr.mxu0 0.0
      %1976 = vmatpush1.msra.mxu0 0.0
      %1977 = vmatprep.subr.mxu0 0.0
      %1978 = vmatpush1.msra.mxu0 0.0
      %1979 = vmatprep.subr.mxu0 0.0
      %1980 = vmatpush1.msra.mxu0 0.0
      %1981 = vmatprep.subr.mxu0 0.0
      %1982 = vmatpush1.msra.mxu0 0.0
      %1983 = vmatprep.subr.mxu0 0.0
      %1984 = vmatpush1.msra.mxu0 0.0
      %1985 = vmatprep.subr.mxu0 0.0
      %1986 = vmatpush1.msra.mxu0 0.0
      %1987 = vmatprep.subr.mxu0 0.0
      %1988 = vmatpush1.msra.mxu0 0.0
      %1989 = vmatprep.mubr.f32.mxu0 0.0
      %1990 = vmatmul.mubr.f32.gmra.mrb[0].mxu0 %v1781
      %v1991 = vpop.f32.mrb[0].mxu0
      %v1992 = vadd.f32 0.0, %v1991
      %v1993 = vpop.f32.mrb[0].mxu0
      %v1994 = vadd.f32 0.0, %v1993
      %1995 = vdwg.mxu0
      %v1996 = vmax.f32 %v1850, 0.0
      %v1997 = vmax.f32 %v1852, 0.0
      %v1998 = vmax.f32 %v1921, 0.0
      %v1999 = vmax.f32 %v1923, 0.0
      %v2000 = vmax.f32 %v1992, 0.0
      %v2001 = vmax.f32 %v1994, 0.0
      %v2002 = vld [vmem:[%s4] sm:$0xff]
      %2004 = vset.pattern.permute.xlu0 0
      %2005 = vperm.xlu0 %2004, %v2002
      %v2006 = vpop.permute.xlu0 %2005
      %2008 = vrot.lane.b32.xlu0 %v1996, 17
      %v2009 = vpop.permute.xlu0 %2008
      %2010 = vrot.lane.b32.xlu0 %v1997, 17
      %v2011 = vpop.permute.xlu0 %2010
      %2012 = vrot.lane.b32.xlu0 %v1998, 17
      %v2013 = vpop.permute.xlu0 %2012
      %2014 = vrot.lane.b32.xlu0 %v1999, 17
      %v2015 = vpop.permute.xlu0 %2014
      %2016 = vrot.lane.b32.xlu0 %v2000, 17
      %v2017 = vpop.permute.xlu0 %2016
      %2018 = vrot.lane.b32.xlu0 %v2001, 17
      %v2019 = vpop.permute.xlu0 %2018
      %v2020 = vsel %vm879, %v2017, %v2019
      %v2021 = vsel %vm879, %v2015, %v2017
      %v2022 = vsel %vm879, %v2013, %v2015
      %v2023 = vsel %vm879, %v2011, %v2013
      %v2024 = vsel %vm879, %v2009, %v2011
      %v2025 = vsel %vm879, %v2019, %v2009
      %v2026 = vld [vmem:[%s1] ss:$8 sm:$0xf]
      %v2027 = vld [vmem:[%s1] ss:$8 sm:$0x30]
      %v2028 = vor.u32 %v2026, %v2027
      %v2030 = vlaneseq
      %v2031 = vshrl.u32 %v2030, 7
      %v2032 = vsub.s32 0, %v2031
      %v2033 = vrot.slane %v2028, %v2032
      %v2034 = vlaneseq
      %v2035 = vshrl.u32 %v2034, 7
      %v2036 = vsub.s32 1, %v2035
      %v2037 = vrot.slane %v2028, %v2036
      %v2038 = vlaneseq
      %v2039 = vshrl.u32 %v2038, 7
      %v2040 = vsub.s32 2, %v2039
      %v2041 = vrot.slane %v2028, %v2040
      %v2042 = vlaneseq
      %v2043 = vshrl.u32 %v2042, 7
      %v2044 = vsub.s32 3, %v2043
      %v2045 = vrot.slane %v2028, %v2044
      %v2046 = vlaneseq
      %v2047 = vshrl.u32 %v2046, 7
      %v2048 = vsub.s32 4, %v2047
      %v2049 = vrot.slane %v2028, %v2048
      %v2050 = vlaneseq
      %v2051 = vshrl.u32 %v2050, 7
      %v2052 = vsub.s32 5, %v2051
      %v2053 = vrot.slane %v2028, %v2052
      %v2060 = vmul.f32 %v2025, %v2033
      %v2061 = vmul.f32 %v2024, %v2037
      %v2062 = vmul.f32 %v2023, %v2041
      %v2063 = vmul.f32 %v2022, %v2045
      %v2064 = vmul.f32 %v2021, %v2049
      %v2065 = vmul.f32 %v2020, %v2053
      %v2066 = vld [vmem:[%s3] sm:$0xff]
      %vm2067 = vcmask 64512
      %v2069 = vsel %vm2067, %v2066, 0
      %2071 = vmatprep.subr.mxu0 %v2061
      %2072 = vmatpush1.msra.mxu0 %v2060
      %2073 = vmatprep.subr.mxu0 0.0
      %2074 = vmatpush1.msra.mxu0 0.0
      %2075 = vmatprep.subr.mxu0 0.0
      %2076 = vmatpush1.msra.mxu0 0.0
      %2077 = vmatprep.subr.mxu0 0.0
      %2078 = vmatpush1.msra.mxu0 0.0
      %2079 = vmatprep.subr.mxu0 0.0
      %2080 = vmatpush1.msra.mxu0 0.0
      %2081 = vmatprep.subr.mxu0 0.0
      %2082 = vmatpush1.msra.mxu0 0.0
      %2083 = vmatprep.subr.mxu0 0.0
      %2084 = vmatpush1.msra.mxu0 0.0
      %2085 = vmatprep.subr.mxu0 0.0
      %2086 = vmatpush1.msra.mxu0 0.0
      %2087 = vmatprep.subr.mxu0 0.0
      %2088 = vmatpush1.msra.mxu0 0.0
      %2089 = vmatprep.subr.mxu0 0.0
      %2090 = vmatpush1.msra.mxu0 0.0
      %2091 = vmatprep.subr.mxu0 0.0
      %2092 = vmatpush1.msra.mxu0 0.0
      %2093 = vmatprep.subr.mxu0 0.0
      %2094 = vmatpush1.msra.mxu0 0.0
      %2095 = vmatprep.subr.mxu0 0.0
      %2096 = vmatpush1.msra.mxu0 0.0
      %2097 = vmatprep.subr.mxu0 0.0
      %2098 = vmatpush1.msra.mxu0 0.0
      %2099 = vmatprep.subr.mxu0 0.0
      %2100 = vmatpush1.msra.mxu0 0.0
      %2101 = vmatprep.subr.mxu0 0.0
      %2102 = vmatpush1.msra.mxu0 0.0
      %2103 = vmatprep.subr.mxu0 0.0
      %2104 = vmatpush1.msra.mxu0 0.0
      %2105 = vmatprep.subr.mxu0 0.0
      %2106 = vmatpush1.msra.mxu0 0.0
      %2107 = vmatprep.subr.mxu0 0.0
      %2108 = vmatpush1.msra.mxu0 0.0
      %2109 = vmatprep.subr.mxu0 0.0
      %2110 = vmatpush1.msra.mxu0 0.0
      %2111 = vmatprep.subr.mxu0 0.0
      %2112 = vmatpush1.msra.mxu0 0.0
      %2113 = vmatprep.subr.mxu0 0.0
      %2114 = vmatpush1.msra.mxu0 0.0
      %2115 = vmatprep.subr.mxu0 0.0
      %2116 = vmatpush1.msra.mxu0 0.0
      %2117 = vmatprep.subr.mxu0 0.0
      %2118 = vmatpush1.msra.mxu0 0.0
      %2119 = vmatprep.subr.mxu0 0.0
      %2120 = vmatpush1.msra.mxu0 0.0
      %2121 = vmatprep.subr.mxu0 0.0
      %2122 = vmatpush1.msra.mxu0 0.0
      %2123 = vmatprep.subr.mxu0 0.0
      %2124 = vmatpush1.msra.mxu0 0.0
      %2125 = vmatprep.subr.mxu0 0.0
      %2126 = vmatpush1.msra.mxu0 0.0
      %2127 = vmatprep.subr.mxu0 0.0
      %2128 = vmatpush1.msra.mxu0 0.0
      %2129 = vmatprep.subr.mxu0 0.0
      %2130 = vmatpush1.msra.mxu0 0.0
      %2131 = vmatprep.subr.mxu0 0.0
      %2132 = vmatpush1.msra.mxu0 0.0
      %2133 = vmatprep.subr.mxu0 0.0
      %2134 = vmatpush1.msra.mxu0 0.0
      %2135 = vmatprep.mubr.f32.mxu0 0.0
      %2136 = vmatmul.mubr.f32.gmra.mrb[0].mxu0 %v2069
      %v2137 = vpop.f32.mrb[0].mxu0
      %v2138 = vadd.f32 0.0, %v2137
      %v2139 = vpop.f32.mrb[0].mxu0
      %v2140 = vadd.f32 0.0, %v2139
      %2141 = vdwg.mxu0
      %2142 = vmatprep.subr.mxu0 %v2063
      %2143 = vmatpush1.msra.mxu0 %v2062
      %2144 = vmatprep.subr.mxu0 0.0
      %2145 = vmatpush1.msra.mxu0 0.0
      %2146 = vmatprep.subr.mxu0 0.0
      %2147 = vmatpush1.msra.mxu0 0.0
      %2148 = vmatprep.subr.mxu0 0.0
      %2149 = vmatpush1.msra.mxu0 0.0
      %2150 = vmatprep.subr.mxu0 0.0
      %2151 = vmatpush1.msra.mxu0 0.0
      %2152 = vmatprep.subr.mxu0 0.0
      %2153 = vmatpush1.msra.mxu0 0.0
      %2154 = vmatprep.subr.mxu0 0.0
      %2155 = vmatpush1.msra.mxu0 0.0
      %2156 = vmatprep.subr.mxu0 0.0
      %2157 = vmatpush1.msra.mxu0 0.0
      %2158 = vmatprep.subr.mxu0 0.0
      %2159 = vmatpush1.msra.mxu0 0.0
      %2160 = vmatprep.subr.mxu0 0.0
      %2161 = vmatpush1.msra.mxu0 0.0
      %2162 = vmatprep.subr.mxu0 0.0
      %2163 = vmatpush1.msra.mxu0 0.0
      %2164 = vmatprep.subr.mxu0 0.0
      %2165 = vmatpush1.msra.mxu0 0.0
      %2166 = vmatprep.subr.mxu0 0.0
      %2167 = vmatpush1.msra.mxu0 0.0
      %2168 = vmatprep.subr.mxu0 0.0
      %2169 = vmatpush1.msra.mxu0 0.0
      %2170 = vmatprep.subr.mxu0 0.0
      %2171 = vmatpush1.msra.mxu0 0.0
      %2172 = vmatprep.subr.mxu0 0.0
      %2173 = vmatpush1.msra.mxu0 0.0
      %2174 = vmatprep.subr.mxu0 0.0
      %2175 = vmatpush1.msra.mxu0 0.0
      %2176 = vmatprep.subr.mxu0 0.0
      %2177 = vmatpush1.msra.mxu0 0.0
      %2178 = vmatprep.subr.mxu0 0.0
      %2179 = vmatpush1.msra.mxu0 0.0
      %2180 = vmatprep.subr.mxu0 0.0
      %2181 = vmatpush1.msra.mxu0 0.0
      %2182 = vmatprep.subr.mxu0 0.0
      %2183 = vmatpush1.msra.mxu0 0.0
      %2184 = vmatprep.subr.mxu0 0.0
      %2185 = vmatpush1.msra.mxu0 0.0
      %2186 = vmatprep.subr.mxu0 0.0
      %2187 = vmatpush1.msra.mxu0 0.0
      %2188 = vmatprep.subr.mxu0 0.0
      %2189 = vmatpush1.msra.mxu0 0.0
      %2190 = vmatprep.subr.mxu0 0.0
      %2191 = vmatpush1.msra.mxu0 0.0
      %2192 = vmatprep.subr.mxu0 0.0
      %2193 = vmatpush1.msra.mxu0 0.0
      %2194 = vmatprep.subr.mxu0 0.0
      %2195 = vmatpush1.msra.mxu0 0.0
      %2196 = vmatprep.subr.mxu0 0.0
      %2197 = vmatpush1.msra.mxu0 0.0
      %2198 = vmatprep.subr.mxu0 0.0
      %2199 = vmatpush1.msra.mxu0 0.0
      %2200 = vmatprep.subr.mxu0 0.0
      %2201 = vmatpush1.msra.mxu0 0.0
      %2202 = vmatprep.subr.mxu0 0.0
      %2203 = vmatpush1.msra.mxu0 0.0
      %2204 = vmatprep.subr.mxu0 0.0
      %2205 = vmatpush1.msra.mxu0 0.0
      %2206 = vmatprep.mubr.f32.mxu0 0.0
      %2207 = vmatmul.mubr.f32.gmra.mrb[0].mxu0 %v2069
      %v2208 = vpop.f32.mrb[0].mxu0
      %v2209 = vadd.f32 0.0, %v2208
      %v2210 = vpop.f32.mrb[0].mxu0
      %v2211 = vadd.f32 0.0, %v2210
      %2212 = vdwg.mxu0
      %2213 = vmatprep.subr.mxu0 %v2065
      %2214 = vmatpush1.msra.mxu0 %v2064
      %2215 = vmatprep.subr.mxu0 0.0
      %2216 = vmatpush1.msra.mxu0 0.0
      %2217 = vmatprep.subr.mxu0 0.0
      %2218 = vmatpush1.msra.mxu0 0.0
      %2219 = vmatprep.subr.mxu0 0.0
      %2220 = vmatpush1.msra.mxu0 0.0
      %2221 = vmatprep.subr.mxu0 0.0
      %2222 = vmatpush1.msra.mxu0 0.0
      %2223 = vmatprep.subr.mxu0 0.0
      %2224 = vmatpush1.msra.mxu0 0.0
      %2225 = vmatprep.subr.mxu0 0.0
      %2226 = vmatpush1.msra.mxu0 0.0
      %2227 = vmatprep.subr.mxu0 0.0
      %2228 = vmatpush1.msra.mxu0 0.0
      %2229 = vmatprep.subr.mxu0 0.0
      %2230 = vmatpush1.msra.mxu0 0.0
      %2231 = vmatprep.subr.mxu0 0.0
      %2232 = vmatpush1.msra.mxu0 0.0
      %2233 = vmatprep.subr.mxu0 0.0
      %2234 = vmatpush1.msra.mxu0 0.0
      %2235 = vmatprep.subr.mxu0 0.0
      %2236 = vmatpush1.msra.mxu0 0.0
      %2237 = vmatprep.subr.mxu0 0.0
      %2238 = vmatpush1.msra.mxu0 0.0
      %2239 = vmatprep.subr.mxu0 0.0
      %2240 = vmatpush1.msra.mxu0 0.0
      %2241 = vmatprep.subr.mxu0 0.0
      %2242 = vmatpush1.msra.mxu0 0.0
      %2243 = vmatprep.subr.mxu0 0.0
      %2244 = vmatpush1.msra.mxu0 0.0
      %2245 = vmatprep.subr.mxu0 0.0
      %2246 = vmatpush1.msra.mxu0 0.0
      %2247 = vmatprep.subr.mxu0 0.0
      %2248 = vmatpush1.msra.mxu0 0.0
      %2249 = vmatprep.subr.mxu0 0.0
      %2250 = vmatpush1.msra.mxu0 0.0
      %2251 = vmatprep.subr.mxu0 0.0
      %2252 = vmatpush1.msra.mxu0 0.0
      %2253 = vmatprep.subr.mxu0 0.0
      %2254 = vmatpush1.msra.mxu0 0.0
      %2255 = vmatprep.subr.mxu0 0.0
      %2256 = vmatpush1.msra.mxu0 0.0
      %2257 = vmatprep.subr.mxu0 0.0
      %2258 = vmatpush1.msra.mxu0 0.0
      %2259 = vmatprep.subr.mxu0 0.0
      %2260 = vmatpush1.msra.mxu0 0.0
      %2261 = vmatprep.subr.mxu0 0.0
      %2262 = vmatpush1.msra.mxu0 0.0
      %2263 = vmatprep.subr.mxu0 0.0
      %2264 = vmatpush1.msra.mxu0 0.0
      %2265 = vmatprep.subr.mxu0 0.0
      %2266 = vmatpush1.msra.mxu0 0.0
      %2267 = vmatprep.subr.mxu0 0.0
      %2268 = vmatpush1.msra.mxu0 0.0
      %2269 = vmatprep.subr.mxu0 0.0
      %2270 = vmatpush1.msra.mxu0 0.0
      %2271 = vmatprep.subr.mxu0 0.0
      %2272 = vmatpush1.msra.mxu0 0.0
      %2273 = vmatprep.subr.mxu0 0.0
      %2274 = vmatpush1.msra.mxu0 0.0
      %2275 = vmatprep.subr.mxu0 0.0
      %2276 = vmatpush1.msra.mxu0 0.0
      %2277 = vmatprep.mubr.f32.mxu0 0.0
      %2278 = vmatmul.mubr.f32.gmra.mrb[0].mxu0 %v2069
      %v2279 = vpop.f32.mrb[0].mxu0
      %v2280 = vadd.f32 0.0, %v2279
      %v2281 = vpop.f32.mrb[0].mxu0
      %v2282 = vadd.f32 0.0, %v2281
      %2283 = vdwg.mxu0
      %v2284 = vadd.f32 %v2006, %v2138
      %v2285 = vadd.f32 %v2006, %v2140
      %v2286 = vadd.f32 %v2006, %v2209
      %v2287 = vadd.f32 %v2006, %v2211
      %v2288 = vadd.f32 %v2006, %v2280
      %v2289 = vadd.f32 %v2006, %v2282
      %2290 = vrot.lane.b32.xlu0 %v1996, 16
      %v2291 = vpop.permute.xlu0 %2290
      %2292 = vrot.lane.b32.xlu0 %v1997, 16
      %v2293 = vpop.permute.xlu0 %2292
      %2294 = vrot.lane.b32.xlu0 %v1998, 16
      %v2295 = vpop.permute.xlu0 %2294
      %2296 = vrot.lane.b32.xlu0 %v1999, 16
      %v2297 = vpop.permute.xlu0 %2296
      %2298 = vrot.lane.b32.xlu0 %v2000, 16
      %v2299 = vpop.permute.xlu0 %2298
      %2300 = vrot.lane.b32.xlu0 %v2001, 16
      %v2301 = vpop.permute.xlu0 %2300
      %v2302 = vsel %vm991, %v2299, %v2301
      %v2303 = vsel %vm991, %v2297, %v2299
      %v2304 = vsel %vm991, %v2295, %v2297
      %v2305 = vsel %vm991, %v2293, %v2295
      %v2306 = vsel %vm991, %v2291, %v2293
      %v2307 = vsel %vm991, %v2301, %v2291
      %v2308 = vld [vmem:[%s998] ss:$8 sm:$0xf]
      %v2309 = vld [vmem:[%s998] ss:$8 sm:$0x30]
      %v2310 = vor.u32 %v2308, %v2309
      %v2312 = vlaneseq
      %v2313 = vshrl.u32 %v2312, 7
      %v2314 = vsub.s32 0, %v2313
      %v2315 = vrot.slane %v2310, %v2314
      %v2316 = vlaneseq
      %v2317 = vshrl.u32 %v2316, 7
      %v2318 = vsub.s32 1, %v2317
      %v2319 = vrot.slane %v2310, %v2318
      %v2320 = vlaneseq
      %v2321 = vshrl.u32 %v2320, 7
      %v2322 = vsub.s32 2, %v2321
      %v2323 = vrot.slane %v2310, %v2322
      %v2324 = vlaneseq
      %v2325 = vshrl.u32 %v2324, 7
      %v2326 = vsub.s32 3, %v2325
      %v2327 = vrot.slane %v2310, %v2326
      %v2328 = vlaneseq
      %v2329 = vshrl.u32 %v2328, 7
      %v2330 = vsub.s32 4, %v2329
      %v2331 = vrot.slane %v2310, %v2330
      %v2332 = vlaneseq
      %v2333 = vshrl.u32 %v2332, 7
      %v2334 = vsub.s32 5, %v2333
      %v2335 = vrot.slane %v2310, %v2334
      %v2342 = vmul.f32 %v2307, %v2315
      %v2343 = vmul.f32 %v2306, %v2319
      %v2344 = vmul.f32 %v2305, %v2323
      %v2345 = vmul.f32 %v2304, %v2327
      %v2346 = vmul.f32 %v2303, %v2331
      %v2347 = vmul.f32 %v2302, %v2335
      %s2348 = scalar_lea.vmem %s3, 8
      %v2349 = vld [vmem:[%s2348] sm:$0xff]
      %v2351 = vsel %vm2067, %v2349, 0
      %2353 = vmatprep.subr.mxu0 %v2343
      %2354 = vmatpush1.msra.mxu0 %v2342
      %2355 = vmatprep.subr.mxu0 0.0
      %2356 = vmatpush1.msra.mxu0 0.0
      %2357 = vmatprep.subr.mxu0 0.0
      %2358 = vmatpush1.msra.mxu0 0.0
      %2359 = vmatprep.subr.mxu0 0.0
      %2360 = vmatpush1.msra.mxu0 0.0
      %2361 = vmatprep.subr.mxu0 0.0
      %2362 = vmatpush1.msra.mxu0 0.0
      %2363 = vmatprep.subr.mxu0 0.0
      %2364 = vmatpush1.msra.mxu0 0.0
      %2365 = vmatprep.subr.mxu0 0.0
      %2366 = vmatpush1.msra.mxu0 0.0
      %2367 = vmatprep.subr.mxu0 0.0
      %2368 = vmatpush1.msra.mxu0 0.0
      %2369 = vmatprep.subr.mxu0 0.0
      %2370 = vmatpush1.msra.mxu0 0.0
      %2371 = vmatprep.subr.mxu0 0.0
      %2372 = vmatpush1.msra.mxu0 0.0
      %2373 = vmatprep.subr.mxu0 0.0
      %2374 = vmatpush1.msra.mxu0 0.0
      %2375 = vmatprep.subr.mxu0 0.0
      %2376 = vmatpush1.msra.mxu0 0.0
      %2377 = vmatprep.subr.mxu0 0.0
      %2378 = vmatpush1.msra.mxu0 0.0
      %2379 = vmatprep.subr.mxu0 0.0
      %2380 = vmatpush1.msra.mxu0 0.0
      %2381 = vmatprep.subr.mxu0 0.0
      %2382 = vmatpush1.msra.mxu0 0.0
      %2383 = vmatprep.subr.mxu0 0.0
      %2384 = vmatpush1.msra.mxu0 0.0
      %2385 = vmatprep.subr.mxu0 0.0
      %2386 = vmatpush1.msra.mxu0 0.0
      %2387 = vmatprep.subr.mxu0 0.0
      %2388 = vmatpush1.msra.mxu0 0.0
      %2389 = vmatprep.subr.mxu0 0.0
      %2390 = vmatpush1.msra.mxu0 0.0
      %2391 = vmatprep.subr.mxu0 0.0
      %2392 = vmatpush1.msra.mxu0 0.0
      %2393 = vmatprep.subr.mxu0 0.0
      %2394 = vmatpush1.msra.mxu0 0.0
      %2395 = vmatprep.subr.mxu0 0.0
      %2396 = vmatpush1.msra.mxu0 0.0
      %2397 = vmatprep.subr.mxu0 0.0
      %2398 = vmatpush1.msra.mxu0 0.0
      %2399 = vmatprep.subr.mxu0 0.0
      %2400 = vmatpush1.msra.mxu0 0.0
      %2401 = vmatprep.subr.mxu0 0.0
      %2402 = vmatpush1.msra.mxu0 0.0
      %2403 = vmatprep.subr.mxu0 0.0
      %2404 = vmatpush1.msra.mxu0 0.0
      %2405 = vmatprep.subr.mxu0 0.0
      %2406 = vmatpush1.msra.mxu0 0.0
      %2407 = vmatprep.subr.mxu0 0.0
      %2408 = vmatpush1.msra.mxu0 0.0
      %2409 = vmatprep.subr.mxu0 0.0
      %2410 = vmatpush1.msra.mxu0 0.0
      %2411 = vmatprep.subr.mxu0 0.0
      %2412 = vmatpush1.msra.mxu0 0.0
      %2413 = vmatprep.subr.mxu0 0.0
      %2414 = vmatpush1.msra.mxu0 0.0
      %2415 = vmatprep.subr.mxu0 0.0
      %2416 = vmatpush1.msra.mxu0 0.0
      %2417 = vmatprep.mubr.f32.mxu0 0.0
      %2418 = vmatmul.mubr.f32.gmra.mrb[0].mxu0 %v2351
      %v2419 = vpop.f32.mrb[0].mxu0
      %v2420 = vadd.f32 0.0, %v2419
      %v2421 = vpop.f32.mrb[0].mxu0
      %v2422 = vadd.f32 0.0, %v2421
      %2423 = vdwg.mxu0
      %2424 = vmatprep.subr.mxu0 %v2345
      %2425 = vmatpush1.msra.mxu0 %v2344
      %2426 = vmatprep.subr.mxu0 0.0
      %2427 = vmatpush1.msra.mxu0 0.0
      %2428 = vmatprep.subr.mxu0 0.0
      %2429 = vmatpush1.msra.mxu0 0.0
      %2430 = vmatprep.subr.mxu0 0.0
      %2431 = vmatpush1.msra.mxu0 0.0
      %2432 = vmatprep.subr.mxu0 0.0
      %2433 = vmatpush1.msra.mxu0 0.0
      %2434 = vmatprep.subr.mxu0 0.0
      %2435 = vmatpush1.msra.mxu0 0.0
      %2436 = vmatprep.subr.mxu0 0.0
      %2437 = vmatpush1.msra.mxu0 0.0
      %2438 = vmatprep.subr.mxu0 0.0
      %2439 = vmatpush1.msra.mxu0 0.0
      %2440 = vmatprep.subr.mxu0 0.0
      %2441 = vmatpush1.msra.mxu0 0.0
      %2442 = vmatprep.subr.mxu0 0.0
      %2443 = vmatpush1.msra.mxu0 0.0
      %2444 = vmatprep.subr.mxu0 0.0
      %2445 = vmatpush1.msra.mxu0 0.0
      %2446 = vmatprep.subr.mxu0 0.0
      %2447 = vmatpush1.msra.mxu0 0.0
      %2448 = vmatprep.subr.mxu0 0.0
      %2449 = vmatpush1.msra.mxu0 0.0
      %2450 = vmatprep.subr.mxu0 0.0
      %2451 = vmatpush1.msra.mxu0 0.0
      %2452 = vmatprep.subr.mxu0 0.0
      %2453 = vmatpush1.msra.mxu0 0.0
      %2454 = vmatprep.subr.mxu0 0.0
      %2455 = vmatpush1.msra.mxu0 0.0
      %2456 = vmatprep.subr.mxu0 0.0
      %2457 = vmatpush1.msra.mxu0 0.0
      %2458 = vmatprep.subr.mxu0 0.0
      %2459 = vmatpush1.msra.mxu0 0.0
      %2460 = vmatprep.subr.mxu0 0.0
      %2461 = vmatpush1.msra.mxu0 0.0
      %2462 = vmatprep.subr.mxu0 0.0
      %2463 = vmatpush1.msra.mxu0 0.0
      %2464 = vmatprep.subr.mxu0 0.0
      %2465 = vmatpush1.msra.mxu0 0.0
      %2466 = vmatprep.subr.mxu0 0.0
      %2467 = vmatpush1.msra.mxu0 0.0
      %2468 = vmatprep.subr.mxu0 0.0
      %2469 = vmatpush1.msra.mxu0 0.0
      %2470 = vmatprep.subr.mxu0 0.0
      %2471 = vmatpush1.msra.mxu0 0.0
      %2472 = vmatprep.subr.mxu0 0.0
      %2473 = vmatpush1.msra.mxu0 0.0
      %2474 = vmatprep.subr.mxu0 0.0
      %2475 = vmatpush1.msra.mxu0 0.0
      %2476 = vmatprep.subr.mxu0 0.0
      %2477 = vmatpush1.msra.mxu0 0.0
      %2478 = vmatprep.subr.mxu0 0.0
      %2479 = vmatpush1.msra.mxu0 0.0
      %2480 = vmatprep.subr.mxu0 0.0
      %2481 = vmatpush1.msra.mxu0 0.0
      %2482 = vmatprep.subr.mxu0 0.0
      %2483 = vmatpush1.msra.mxu0 0.0
      %2484 = vmatprep.subr.mxu0 0.0
      %2485 = vmatpush1.msra.mxu0 0.0
      %2486 = vmatprep.subr.mxu0 0.0
      %2487 = vmatpush1.msra.mxu0 0.0
      %2488 = vmatprep.mubr.f32.mxu0 0.0
      %2489 = vmatmul.mubr.f32.gmra.mrb[0].mxu0 %v2351
      %v2490 = vpop.f32.mrb[0].mxu0
      %v2491 = vadd.f32 0.0, %v2490
      %v2492 = vpop.f32.mrb[0].mxu0
      %v2493 = vadd.f32 0.0, %v2492
      %2494 = vdwg.mxu0
      %2495 = vmatprep.subr.mxu0 %v2347
      %2496 = vmatpush1.msra.mxu0 %v2346
      %2497 = vmatprep.subr.mxu0 0.0
      %2498 = vmatpush1.msra.mxu0 0.0
      %2499 = vmatprep.subr.mxu0 0.0
      %2500 = vmatpush1.msra.mxu0 0.0
      %2501 = vmatprep.subr.mxu0 0.0
      %2502 = vmatpush1.msra.mxu0 0.0
      %2503 = vmatprep.subr.mxu0 0.0
      %2504 = vmatpush1.msra.mxu0 0.0
      %2505 = vmatprep.subr.mxu0 0.0
      %2506 = vmatpush1.msra.mxu0 0.0
      %2507 = vmatprep.subr.mxu0 0.0
      %2508 = vmatpush1.msra.mxu0 0.0
      %2509 = vmatprep.subr.mxu0 0.0
      %2510 = vmatpush1.msra.mxu0 0.0
      %2511 = vmatprep.subr.mxu0 0.0
      %2512 = vmatpush1.msra.mxu0 0.0
      %2513 = vmatprep.subr.mxu0 0.0
      %2514 = vmatpush1.msra.mxu0 0.0
      %2515 = vmatprep.subr.mxu0 0.0
      %2516 = vmatpush1.msra.mxu0 0.0
      %2517 = vmatprep.subr.mxu0 0.0
      %2518 = vmatpush1.msra.mxu0 0.0
      %2519 = vmatprep.subr.mxu0 0.0
      %2520 = vmatpush1.msra.mxu0 0.0
      %2521 = vmatprep.subr.mxu0 0.0
      %2522 = vmatpush1.msra.mxu0 0.0
      %2523 = vmatprep.subr.mxu0 0.0
      %2524 = vmatpush1.msra.mxu0 0.0
      %2525 = vmatprep.subr.mxu0 0.0
      %2526 = vmatpush1.msra.mxu0 0.0
      %2527 = vmatprep.subr.mxu0 0.0
      %2528 = vmatpush1.msra.mxu0 0.0
      %2529 = vmatprep.subr.mxu0 0.0
      %2530 = vmatpush1.msra.mxu0 0.0
      %2531 = vmatprep.subr.mxu0 0.0
      %2532 = vmatpush1.msra.mxu0 0.0
      %2533 = vmatprep.subr.mxu0 0.0
      %2534 = vmatpush1.msra.mxu0 0.0
      %2535 = vmatprep.subr.mxu0 0.0
      %2536 = vmatpush1.msra.mxu0 0.0
      %2537 = vmatprep.subr.mxu0 0.0
      %2538 = vmatpush1.msra.mxu0 0.0
      %2539 = vmatprep.subr.mxu0 0.0
      %2540 = vmatpush1.msra.mxu0 0.0
      %2541 = vmatprep.subr.mxu0 0.0
      %2542 = vmatpush1.msra.mxu0 0.0
      %2543 = vmatprep.subr.mxu0 0.0
      %2544 = vmatpush1.msra.mxu0 0.0
      %2545 = vmatprep.subr.mxu0 0.0
      %2546 = vmatpush1.msra.mxu0 0.0
      %2547 = vmatprep.subr.mxu0 0.0
      %2548 = vmatpush1.msra.mxu0 0.0
      %2549 = vmatprep.subr.mxu0 0.0
      %2550 = vmatpush1.msra.mxu0 0.0
      %2551 = vmatprep.subr.mxu0 0.0
      %2552 = vmatpush1.msra.mxu0 0.0
      %2553 = vmatprep.subr.mxu0 0.0
      %2554 = vmatpush1.msra.mxu0 0.0
      %2555 = vmatprep.subr.mxu0 0.0
      %2556 = vmatpush1.msra.mxu0 0.0
      %2557 = vmatprep.subr.mxu0 0.0
      %2558 = vmatpush1.msra.mxu0 0.0
      %2559 = vmatprep.mubr.f32.mxu0 0.0
      %2560 = vmatmul.mubr.f32.gmra.mrb[0].mxu0 %v2351
      %v2561 = vpop.f32.mrb[0].mxu0
      %v2562 = vadd.f32 0.0, %v2561
      %v2563 = vpop.f32.mrb[0].mxu0
      %v2564 = vadd.f32 0.0, %v2563
      %2565 = vdwg.mxu0
      %v2566 = vadd.f32 %v2284, %v2420
      %v2567 = vadd.f32 %v2285, %v2422
      %v2568 = vadd.f32 %v2286, %v2491
      %v2569 = vadd.f32 %v2287, %v2493
      %v2570 = vadd.f32 %v2288, %v2562
      %v2571 = vadd.f32 %v2289, %v2564
      %2572 = vrot.lane.b32.xlu0 %v1996, 15
      %v2573 = vpop.permute.xlu0 %2572
      %2574 = vrot.lane.b32.xlu0 %v1997, 15
      %v2575 = vpop.permute.xlu0 %2574
      %2576 = vrot.lane.b32.xlu0 %v1998, 15
      %v2577 = vpop.permute.xlu0 %2576
      %2578 = vrot.lane.b32.xlu0 %v1999, 15
      %v2579 = vpop.permute.xlu0 %2578
      %2580 = vrot.lane.b32.xlu0 %v2000, 15
      %v2581 = vpop.permute.xlu0 %2580
      %2582 = vrot.lane.b32.xlu0 %v2001, 15
      %v2583 = vpop.permute.xlu0 %2582
      %v2584 = vsel %vm1101, %v2581, %v2583
      %v2585 = vsel %vm1101, %v2579, %v2581
      %v2586 = vsel %vm1101, %v2577, %v2579
      %v2587 = vsel %vm1101, %v2575, %v2577
      %v2588 = vsel %vm1101, %v2573, %v2575
      %v2589 = vsel %vm1101, %v2583, %v2573
      %v2590 = vld [vmem:[%s1108] ss:$8 sm:$0xf]
      %v2591 = vld [vmem:[%s1108] ss:$8 sm:$0x30]
      %v2592 = vor.u32 %v2590, %v2591
      %v2594 = vlaneseq
      %v2595 = vshrl.u32 %v2594, 7
      %v2596 = vsub.s32 0, %v2595
      %v2597 = vrot.slane %v2592, %v2596
      %v2598 = vlaneseq
      %v2599 = vshrl.u32 %v2598, 7
      %v2600 = vsub.s32 1, %v2599
      %v2601 = vrot.slane %v2592, %v2600
      %v2602 = vlaneseq
      %v2603 = vshrl.u32 %v2602, 7
      %v2604 = vsub.s32 2, %v2603
      %v2605 = vrot.slane %v2592, %v2604
      %v2606 = vlaneseq
      %v2607 = vshrl.u32 %v2606, 7
      %v2608 = vsub.s32 3, %v2607
      %v2609 = vrot.slane %v2592, %v2608
      %v2610 = vlaneseq
      %v2611 = vshrl.u32 %v2610, 7
      %v2612 = vsub.s32 4, %v2611
      %v2613 = vrot.slane %v2592, %v2612
      %v2614 = vlaneseq
      %v2615 = vshrl.u32 %v2614, 7
      %v2616 = vsub.s32 5, %v2615
      %v2617 = vrot.slane %v2592, %v2616
      %v2624 = vmul.f32 %v2589, %v2597
      %v2625 = vmul.f32 %v2588, %v2601
      %v2626 = vmul.f32 %v2587, %v2605
      %v2627 = vmul.f32 %v2586, %v2609
      %v2628 = vmul.f32 %v2585, %v2613
      %v2629 = vmul.f32 %v2584, %v2617
      %s2630 = scalar_lea.vmem %s3, 16
      %v2631 = vld [vmem:[%s2630] sm:$0xff]
      %v2633 = vsel %vm2067, %v2631, 0
      %2635 = vmatprep.subr.mxu0 %v2625
      %2636 = vmatpush1.msra.mxu0 %v2624
      %2637 = vmatprep.subr.mxu0 0.0
      %2638 = vmatpush1.msra.mxu0 0.0
      %2639 = vmatprep.subr.mxu0 0.0
      %2640 = vmatpush1.msra.mxu0 0.0
      %2641 = vmatprep.subr.mxu0 0.0
      %2642 = vmatpush1.msra.mxu0 0.0
      %2643 = vmatprep.subr.mxu0 0.0
      %2644 = vmatpush1.msra.mxu0 0.0
      %2645 = vmatprep.subr.mxu0 0.0
      %2646 = vmatpush1.msra.mxu0 0.0
      %2647 = vmatprep.subr.mxu0 0.0
      %2648 = vmatpush1.msra.mxu0 0.0
      %2649 = vmatprep.subr.mxu0 0.0
      %2650 = vmatpush1.msra.mxu0 0.0
      %2651 = vmatprep.subr.mxu0 0.0
      %2652 = vmatpush1.msra.mxu0 0.0
      %2653 = vmatprep.subr.mxu0 0.0
      %2654 = vmatpush1.msra.mxu0 0.0
      %2655 = vmatprep.subr.mxu0 0.0
      %2656 = vmatpush1.msra.mxu0 0.0
      %2657 = vmatprep.subr.mxu0 0.0
      %2658 = vmatpush1.msra.mxu0 0.0
      %2659 = vmatprep.subr.mxu0 0.0
      %2660 = vmatpush1.msra.mxu0 0.0
      %2661 = vmatprep.subr.mxu0 0.0
      %2662 = vmatpush1.msra.mxu0 0.0
      %2663 = vmatprep.subr.mxu0 0.0
      %2664 = vmatpush1.msra.mxu0 0.0
      %2665 = vmatprep.subr.mxu0 0.0
      %2666 = vmatpush1.msra.mxu0 0.0
      %2667 = vmatprep.subr.mxu0 0.0
      %2668 = vmatpush1.msra.mxu0 0.0
      %2669 = vmatprep.subr.mxu0 0.0
      %2670 = vmatpush1.msra.mxu0 0.0
      %2671 = vmatprep.subr.mxu0 0.0
      %2672 = vmatpush1.msra.mxu0 0.0
      %2673 = vmatprep.subr.mxu0 0.0
      %2674 = vmatpush1.msra.mxu0 0.0
      %2675 = vmatprep.subr.mxu0 0.0
      %2676 = vmatpush1.msra.mxu0 0.0
      %2677 = vmatprep.subr.mxu0 0.0
      %2678 = vmatpush1.msra.mxu0 0.0
      %2679 = vmatprep.subr.mxu0 0.0
      %2680 = vmatpush1.msra.mxu0 0.0
      %2681 = vmatprep.subr.mxu0 0.0
      %2682 = vmatpush1.msra.mxu0 0.0
      %2683 = vmatprep.subr.mxu0 0.0
      %2684 = vmatpush1.msra.mxu0 0.0
      %2685 = vmatprep.subr.mxu0 0.0
      %2686 = vmatpush1.msra.mxu0 0.0
      %2687 = vmatprep.subr.mxu0 0.0
      %2688 = vmatpush1.msra.mxu0 0.0
      %2689 = vmatprep.subr.mxu0 0.0
      %2690 = vmatpush1.msra.mxu0 0.0
      %2691 = vmatprep.subr.mxu0 0.0
      %2692 = vmatpush1.msra.mxu0 0.0
      %2693 = vmatprep.subr.mxu0 0.0
      %2694 = vmatpush1.msra.mxu0 0.0
      %2695 = vmatprep.subr.mxu0 0.0
      %2696 = vmatpush1.msra.mxu0 0.0
      %2697 = vmatprep.subr.mxu0 0.0
      %2698 = vmatpush1.msra.mxu0 0.0
      %2699 = vmatprep.mubr.f32.mxu0 0.0
      %2700 = vmatmul.mubr.f32.gmra.mrb[0].mxu0 %v2633
      %v2701 = vpop.f32.mrb[0].mxu0
      %v2702 = vadd.f32 0.0, %v2701
      %v2703 = vpop.f32.mrb[0].mxu0
      %v2704 = vadd.f32 0.0, %v2703
      %2705 = vdwg.mxu0
      %2706 = vmatprep.subr.mxu0 %v2627
      %2707 = vmatpush1.msra.mxu0 %v2626
      %2708 = vmatprep.subr.mxu0 0.0
      %2709 = vmatpush1.msra.mxu0 0.0
      %2710 = vmatprep.subr.mxu0 0.0
      %2711 = vmatpush1.msra.mxu0 0.0
      %2712 = vmatprep.subr.mxu0 0.0
      %2713 = vmatpush1.msra.mxu0 0.0
      %2714 = vmatprep.subr.mxu0 0.0
      %2715 = vmatpush1.msra.mxu0 0.0
      %2716 = vmatprep.subr.mxu0 0.0
      %2717 = vmatpush1.msra.mxu0 0.0
      %2718 = vmatprep.subr.mxu0 0.0
      %2719 = vmatpush1.msra.mxu0 0.0
      %2720 = vmatprep.subr.mxu0 0.0
      %2721 = vmatpush1.msra.mxu0 0.0
      %2722 = vmatprep.subr.mxu0 0.0
      %2723 = vmatpush1.msra.mxu0 0.0
      %2724 = vmatprep.subr.mxu0 0.0
      %2725 = vmatpush1.msra.mxu0 0.0
      %2726 = vmatprep.subr.mxu0 0.0
      %2727 = vmatpush1.msra.mxu0 0.0
      %2728 = vmatprep.subr.mxu0 0.0
      %2729 = vmatpush1.msra.mxu0 0.0
      %2730 = vmatprep.subr.mxu0 0.0
      %2731 = vmatpush1.msra.mxu0 0.0
      %2732 = vmatprep.subr.mxu0 0.0
      %2733 = vmatpush1.msra.mxu0 0.0
      %2734 = vmatprep.subr.mxu0 0.0
      %2735 = vmatpush1.msra.mxu0 0.0
      %2736 = vmatprep.subr.mxu0 0.0
      %2737 = vmatpush1.msra.mxu0 0.0
      %2738 = vmatprep.subr.mxu0 0.0
      %2739 = vmatpush1.msra.mxu0 0.0
      %2740 = vmatprep.subr.mxu0 0.0
      %2741 = vmatpush1.msra.mxu0 0.0
      %2742 = vmatprep.subr.mxu0 0.0
      %2743 = vmatpush1.msra.mxu0 0.0
      %2744 = vmatprep.subr.mxu0 0.0
      %2745 = vmatpush1.msra.mxu0 0.0
      %2746 = vmatprep.subr.mxu0 0.0
      %2747 = vmatpush1.msra.mxu0 0.0
      %2748 = vmatprep.subr.mxu0 0.0
      %2749 = vmatpush1.msra.mxu0 0.0
      %2750 = vmatprep.subr.mxu0 0.0
      %2751 = vmatpush1.msra.mxu0 0.0
      %2752 = vmatprep.subr.mxu0 0.0
      %2753 = vmatpush1.msra.mxu0 0.0
      %2754 = vmatprep.subr.mxu0 0.0
      %2755 = vmatpush1.msra.mxu0 0.0
      %2756 = vmatprep.subr.mxu0 0.0
      %2757 = vmatpush1.msra.mxu0 0.0
      %2758 = vmatprep.subr.mxu0 0.0
      %2759 = vmatpush1.msra.mxu0 0.0
      %2760 = vmatprep.subr.mxu0 0.0
      %2761 = vmatpush1.msra.mxu0 0.0
      %2762 = vmatprep.subr.mxu0 0.0
      %2763 = vmatpush1.msra.mxu0 0.0
      %2764 = vmatprep.subr.mxu0 0.0
      %2765 = vmatpush1.msra.mxu0 0.0
      %2766 = vmatprep.subr.mxu0 0.0
      %2767 = vmatpush1.msra.mxu0 0.0
      %2768 = vmatprep.subr.mxu0 0.0
      %2769 = vmatpush1.msra.mxu0 0.0
      %2770 = vmatprep.mubr.f32.mxu0 0.0
      %2771 = vmatmul.mubr.f32.gmra.mrb[0].mxu0 %v2633
      %v2772 = vpop.f32.mrb[0].mxu0
      %v2773 = vadd.f32 0.0, %v2772
      %v2774 = vpop.f32.mrb[0].mxu0
      %v2775 = vadd.f32 0.0, %v2774
      %2776 = vdwg.mxu0
      %2777 = vmatprep.subr.mxu0 %v2629
      %2778 = vmatpush1.msra.mxu0 %v2628
      %2779 = vmatprep.subr.mxu0 0.0
      %2780 = vmatpush1.msra.mxu0 0.0
      %2781 = vmatprep.subr.mxu0 0.0
      %2782 = vmatpush1.msra.mxu0 0.0
      %2783 = vmatprep.subr.mxu0 0.0
      %2784 = vmatpush1.msra.mxu0 0.0
      %2785 = vmatprep.subr.mxu0 0.0
      %2786 = vmatpush1.msra.mxu0 0.0
      %2787 = vmatprep.subr.mxu0 0.0
      %2788 = vmatpush1.msra.mxu0 0.0
      %2789 = vmatprep.subr.mxu0 0.0
      %2790 = vmatpush1.msra.mxu0 0.0
      %2791 = vmatprep.subr.mxu0 0.0
      %2792 = vmatpush1.msra.mxu0 0.0
      %2793 = vmatprep.subr.mxu0 0.0
      %2794 = vmatpush1.msra.mxu0 0.0
      %2795 = vmatprep.subr.mxu0 0.0
      %2796 = vmatpush1.msra.mxu0 0.0
      %2797 = vmatprep.subr.mxu0 0.0
      %2798 = vmatpush1.msra.mxu0 0.0
      %2799 = vmatprep.subr.mxu0 0.0
      %2800 = vmatpush1.msra.mxu0 0.0
      %2801 = vmatprep.subr.mxu0 0.0
      %2802 = vmatpush1.msra.mxu0 0.0
      %2803 = vmatprep.subr.mxu0 0.0
      %2804 = vmatpush1.msra.mxu0 0.0
      %2805 = vmatprep.subr.mxu0 0.0
      %2806 = vmatpush1.msra.mxu0 0.0
      %2807 = vmatprep.subr.mxu0 0.0
      %2808 = vmatpush1.msra.mxu0 0.0
      %2809 = vmatprep.subr.mxu0 0.0
      %2810 = vmatpush1.msra.mxu0 0.0
      %2811 = vmatprep.subr.mxu0 0.0
      %2812 = vmatpush1.msra.mxu0 0.0
      %2813 = vmatprep.subr.mxu0 0.0
      %2814 = vmatpush1.msra.mxu0 0.0
      %2815 = vmatprep.subr.mxu0 0.0
      %2816 = vmatpush1.msra.mxu0 0.0
      %2817 = vmatprep.subr.mxu0 0.0
      %2818 = vmatpush1.msra.mxu0 0.0
      %2819 = vmatprep.subr.mxu0 0.0
      %2820 = vmatpush1.msra.mxu0 0.0
      %2821 = vmatprep.subr.mxu0 0.0
      %2822 = vmatpush1.msra.mxu0 0.0
      %2823 = vmatprep.subr.mxu0 0.0
      %2824 = vmatpush1.msra.mxu0 0.0
      %2825 = vmatprep.subr.mxu0 0.0
      %2826 = vmatpush1.msra.mxu0 0.0
      %2827 = vmatprep.subr.mxu0 0.0
      %2828 = vmatpush1.msra.mxu0 0.0
      %2829 = vmatprep.subr.mxu0 0.0
      %2830 = vmatpush1.msra.mxu0 0.0
      %2831 = vmatprep.subr.mxu0 0.0
      %2832 = vmatpush1.msra.mxu0 0.0
      %2833 = vmatprep.subr.mxu0 0.0
      %2834 = vmatpush1.msra.mxu0 0.0
      %2835 = vmatprep.subr.mxu0 0.0
      %2836 = vmatpush1.msra.mxu0 0.0
      %2837 = vmatprep.subr.mxu0 0.0
      %2838 = vmatpush1.msra.mxu0 0.0
      %2839 = vmatprep.subr.mxu0 0.0
      %2840 = vmatpush1.msra.mxu0 0.0
      %2841 = vmatprep.mubr.f32.mxu0 0.0
      %2842 = vmatmul.mubr.f32.gmra.mrb[0].mxu0 %v2633
      %v2843 = vpop.f32.mrb[0].mxu0
      %v2844 = vadd.f32 0.0, %v2843
      %v2845 = vpop.f32.mrb[0].mxu0
      %v2846 = vadd.f32 0.0, %v2845
      %2847 = vdwg.mxu0
      %v2848 = vadd.f32 %v2566, %v2702
      %v2849 = vadd.f32 %v2567, %v2704
      %v2850 = vadd.f32 %v2568, %v2773
      %v2851 = vadd.f32 %v2569, %v2775
      %v2852 = vadd.f32 %v2570, %v2844
      %v2853 = vadd.f32 %v2571, %v2846
      %2854 = vrot.lane.b32.xlu0 %v1996, 1
      %v2855 = vpop.permute.xlu0 %2854
      %2856 = vrot.lane.b32.xlu0 %v1997, 1
      %v2857 = vpop.permute.xlu0 %2856
      %2858 = vrot.lane.b32.xlu0 %v1998, 1
      %v2859 = vpop.permute.xlu0 %2858
      %2860 = vrot.lane.b32.xlu0 %v1999, 1
      %v2861 = vpop.permute.xlu0 %2860
      %2862 = vrot.lane.b32.xlu0 %v2000, 1
      %v2863 = vpop.permute.xlu0 %2862
      %2864 = vrot.lane.b32.xlu0 %v2001, 1
      %v2865 = vpop.permute.xlu0 %2864
      %v2866 = vsel %vm1211, %v2863, %v2865
      %v2867 = vsel %vm1211, %v2861, %v2863
      %v2868 = vsel %vm1211, %v2859, %v2861
      %v2869 = vsel %vm1211, %v2857, %v2859
      %v2870 = vsel %vm1211, %v2855, %v2857
      %v2871 = vsel %vm1211, %v2865, %v2855
      %v2872 = vld [vmem:[%s1218] ss:$8 sm:$0xf]
      %v2873 = vld [vmem:[%s1218] ss:$8 sm:$0x30]
      %v2874 = vor.u32 %v2872, %v2873
      %v2876 = vlaneseq
      %v2877 = vshrl.u32 %v2876, 7
      %v2878 = vsub.s32 0, %v2877
      %v2879 = vrot.slane %v2874, %v2878
      %v2880 = vlaneseq
      %v2881 = vshrl.u32 %v2880, 7
      %v2882 = vsub.s32 1, %v2881
      %v2883 = vrot.slane %v2874, %v2882
      %v2884 = vlaneseq
      %v2885 = vshrl.u32 %v2884, 7
      %v2886 = vsub.s32 2, %v2885
      %v2887 = vrot.slane %v2874, %v2886
      %v2888 = vlaneseq
      %v2889 = vshrl.u32 %v2888, 7
      %v2890 = vsub.s32 3, %v2889
      %v2891 = vrot.slane %v2874, %v2890
      %v2892 = vlaneseq
      %v2893 = vshrl.u32 %v2892, 7
      %v2894 = vsub.s32 4, %v2893
      %v2895 = vrot.slane %v2874, %v2894
      %v2896 = vlaneseq
      %v2897 = vshrl.u32 %v2896, 7
      %v2898 = vsub.s32 5, %v2897
      %v2899 = vrot.slane %v2874, %v2898
      %v2906 = vmul.f32 %v2871, %v2879
      %v2907 = vmul.f32 %v2870, %v2883
      %v2908 = vmul.f32 %v2869, %v2887
      %v2909 = vmul.f32 %v2868, %v2891
      %v2910 = vmul.f32 %v2867, %v2895
      %v2911 = vmul.f32 %v2866, %v2899
      %s2912 = scalar_lea.vmem %s3, 24
      %v2913 = vld [vmem:[%s2912] sm:$0xff]
      %v2915 = vsel %vm2067, %v2913, 0
      %2917 = vmatprep.subr.mxu0 %v2907
      %2918 = vmatpush1.msra.mxu0 %v2906
      %2919 = vmatprep.subr.mxu0 0.0
      %2920 = vmatpush1.msra.mxu0 0.0
      %2921 = vmatprep.subr.mxu0 0.0
      %2922 = vmatpush1.msra.mxu0 0.0
      %2923 = vmatprep.subr.mxu0 0.0
      %2924 = vmatpush1.msra.mxu0 0.0
      %2925 = vmatprep.subr.mxu0 0.0
      %2926 = vmatpush1.msra.mxu0 0.0
      %2927 = vmatprep.subr.mxu0 0.0
      %2928 = vmatpush1.msra.mxu0 0.0
      %2929 = vmatprep.subr.mxu0 0.0
      %2930 = vmatpush1.msra.mxu0 0.0
      %2931 = vmatprep.subr.mxu0 0.0
      %2932 = vmatpush1.msra.mxu0 0.0
      %2933 = vmatprep.subr.mxu0 0.0
      %2934 = vmatpush1.msra.mxu0 0.0
      %2935 = vmatprep.subr.mxu0 0.0
      %2936 = vmatpush1.msra.mxu0 0.0
      %2937 = vmatprep.subr.mxu0 0.0
      %2938 = vmatpush1.msra.mxu0 0.0
      %2939 = vmatprep.subr.mxu0 0.0
      %2940 = vmatpush1.msra.mxu0 0.0
      %2941 = vmatprep.subr.mxu0 0.0
      %2942 = vmatpush1.msra.mxu0 0.0
      %2943 = vmatprep.subr.mxu0 0.0
      %2944 = vmatpush1.msra.mxu0 0.0
      %2945 = vmatprep.subr.mxu0 0.0
      %2946 = vmatpush1.msra.mxu0 0.0
      %2947 = vmatprep.subr.mxu0 0.0
      %2948 = vmatpush1.msra.mxu0 0.0
      %2949 = vmatprep.subr.mxu0 0.0
      %2950 = vmatpush1.msra.mxu0 0.0
      %2951 = vmatprep.subr.mxu0 0.0
      %2952 = vmatpush1.msra.mxu0 0.0
      %2953 = vmatprep.subr.mxu0 0.0
      %2954 = vmatpush1.msra.mxu0 0.0
      %2955 = vmatprep.subr.mxu0 0.0
      %2956 = vmatpush1.msra.mxu0 0.0
      %2957 = vmatprep.subr.mxu0 0.0
      %2958 = vmatpush1.msra.mxu0 0.0
      %2959 = vmatprep.subr.mxu0 0.0
      %2960 = vmatpush1.msra.mxu0 0.0
      %2961 = vmatprep.subr.mxu0 0.0
      %2962 = vmatpush1.msra.mxu0 0.0
      %2963 = vmatprep.subr.mxu0 0.0
      %2964 = vmatpush1.msra.mxu0 0.0
      %2965 = vmatprep.subr.mxu0 0.0
      %2966 = vmatpush1.msra.mxu0 0.0
      %2967 = vmatprep.subr.mxu0 0.0
      %2968 = vmatpush1.msra.mxu0 0.0
      %2969 = vmatprep.subr.mxu0 0.0
      %2970 = vmatpush1.msra.mxu0 0.0
      %2971 = vmatprep.subr.mxu0 0.0
      %2972 = vmatpush1.msra.mxu0 0.0
      %2973 = vmatprep.subr.mxu0 0.0
      %2974 = vmatpush1.msra.mxu0 0.0
      %2975 = vmatprep.subr.mxu0 0.0
      %2976 = vmatpush1.msra.mxu0 0.0
      %2977 = vmatprep.subr.mxu0 0.0
      %2978 = vmatpush1.msra.mxu0 0.0
      %2979 = vmatprep.subr.mxu0 0.0
      %2980 = vmatpush1.msra.mxu0 0.0
      %2981 = vmatprep.mubr.f32.mxu0 0.0
      %2982 = vmatmul.mubr.f32.gmra.mrb[0].mxu0 %v2915
      %v2983 = vpop.f32.mrb[0].mxu0
      %v2984 = vadd.f32 0.0, %v2983
      %v2985 = vpop.f32.mrb[0].mxu0
      %v2986 = vadd.f32 0.0, %v2985
      %2987 = vdwg.mxu0
      %2988 = vmatprep.subr.mxu0 %v2909
      %2989 = vmatpush1.msra.mxu0 %v2908
      %2990 = vmatprep.subr.mxu0 0.0
      %2991 = vmatpush1.msra.mxu0 0.0
      %2992 = vmatprep.subr.mxu0 0.0
      %2993 = vmatpush1.msra.mxu0 0.0
      %2994 = vmatprep.subr.mxu0 0.0
      %2995 = vmatpush1.msra.mxu0 0.0
      %2996 = vmatprep.subr.mxu0 0.0
      %2997 = vmatpush1.msra.mxu0 0.0
      %2998 = vmatprep.subr.mxu0 0.0
      %2999 = vmatpush1.msra.mxu0 0.0
      %3000 = vmatprep.subr.mxu0 0.0
      %3001 = vmatpush1.msra.mxu0 0.0
      %3002 = vmatprep.subr.mxu0 0.0
      %3003 = vmatpush1.msra.mxu0 0.0
      %3004 = vmatprep.subr.mxu0 0.0
      %3005 = vmatpush1.msra.mxu0 0.0
      %3006 = vmatprep.subr.mxu0 0.0
      %3007 = vmatpush1.msra.mxu0 0.0
      %3008 = vmatprep.subr.mxu0 0.0
      %3009 = vmatpush1.msra.mxu0 0.0
      %3010 = vmatprep.subr.mxu0 0.0
      %3011 = vmatpush1.msra.mxu0 0.0
      %3012 = vmatprep.subr.mxu0 0.0
      %3013 = vmatpush1.msra.mxu0 0.0
      %3014 = vmatprep.subr.mxu0 0.0
      %3015 = vmatpush1.msra.mxu0 0.0
      %3016 = vmatprep.subr.mxu0 0.0
      %3017 = vmatpush1.msra.mxu0 0.0
      %3018 = vmatprep.subr.mxu0 0.0
      %3019 = vmatpush1.msra.mxu0 0.0
      %3020 = vmatprep.subr.mxu0 0.0
      %3021 = vmatpush1.msra.mxu0 0.0
      %3022 = vmatprep.subr.mxu0 0.0
      %3023 = vmatpush1.msra.mxu0 0.0
      %3024 = vmatprep.subr.mxu0 0.0
      %3025 = vmatpush1.msra.mxu0 0.0
      %3026 = vmatprep.subr.mxu0 0.0
      %3027 = vmatpush1.msra.mxu0 0.0
      %3028 = vmatprep.subr.mxu0 0.0
      %3029 = vmatpush1.msra.mxu0 0.0
      %3030 = vmatprep.subr.mxu0 0.0
      %3031 = vmatpush1.msra.mxu0 0.0
      %3032 = vmatprep.subr.mxu0 0.0
      %3033 = vmatpush1.msra.mxu0 0.0
      %3034 = vmatprep.subr.mxu0 0.0
      %3035 = vmatpush1.msra.mxu0 0.0
      %3036 = vmatprep.subr.mxu0 0.0
      %3037 = vmatpush1.msra.mxu0 0.0
      %3038 = vmatprep.subr.mxu0 0.0
      %3039 = vmatpush1.msra.mxu0 0.0
      %3040 = vmatprep.subr.mxu0 0.0
      %3041 = vmatpush1.msra.mxu0 0.0
      %3042 = vmatprep.subr.mxu0 0.0
      %3043 = vmatpush1.msra.mxu0 0.0
      %3044 = vmatprep.subr.mxu0 0.0
      %3045 = vmatpush1.msra.mxu0 0.0
      %3046 = vmatprep.subr.mxu0 0.0
      %3047 = vmatpush1.msra.mxu0 0.0
      %3048 = vmatprep.subr.mxu0 0.0
      %3049 = vmatpush1.msra.mxu0 0.0
      %3050 = vmatprep.subr.mxu0 0.0
      %3051 = vmatpush1.msra.mxu0 0.0
      %3052 = vmatprep.mubr.f32.mxu0 0.0
      %3053 = vmatmul.mubr.f32.gmra.mrb[0].mxu0 %v2915
      %v3054 = vpop.f32.mrb[0].mxu0
      %v3055 = vadd.f32 0.0, %v3054
      %v3056 = vpop.f32.mrb[0].mxu0
      %v3057 = vadd.f32 0.0, %v3056
      %3058 = vdwg.mxu0
      %3059 = vmatprep.subr.mxu0 %v2911
      %3060 = vmatpush1.msra.mxu0 %v2910
      %3061 = vmatprep.subr.mxu0 0.0
      %3062 = vmatpush1.msra.mxu0 0.0
      %3063 = vmatprep.subr.mxu0 0.0
      %3064 = vmatpush1.msra.mxu0 0.0
      %3065 = vmatprep.subr.mxu0 0.0
      %3066 = vmatpush1.msra.mxu0 0.0
      %3067 = vmatprep.subr.mxu0 0.0
      %3068 = vmatpush1.msra.mxu0 0.0
      %3069 = vmatprep.subr.mxu0 0.0
      %3070 = vmatpush1.msra.mxu0 0.0
      %3071 = vmatprep.subr.mxu0 0.0
      %3072 = vmatpush1.msra.mxu0 0.0
      %3073 = vmatprep.subr.mxu0 0.0
      %3074 = vmatpush1.msra.mxu0 0.0
      %3075 = vmatprep.subr.mxu0 0.0
      %3076 = vmatpush1.msra.mxu0 0.0
      %3077 = vmatprep.subr.mxu0 0.0
      %3078 = vmatpush1.msra.mxu0 0.0
      %3079 = vmatprep.subr.mxu0 0.0
      %3080 = vmatpush1.msra.mxu0 0.0
      %3081 = vmatprep.subr.mxu0 0.0
      %3082 = vmatpush1.msra.mxu0 0.0
      %3083 = vmatprep.subr.mxu0 0.0
      %3084 = vmatpush1.msra.mxu0 0.0
      %3085 = vmatprep.subr.mxu0 0.0
      %3086 = vmatpush1.msra.mxu0 0.0
      %3087 = vmatprep.subr.mxu0 0.0
      %3088 = vmatpush1.msra.mxu0 0.0
      %3089 = vmatprep.subr.mxu0 0.0
      %3090 = vmatpush1.msra.mxu0 0.0
      %3091 = vmatprep.subr.mxu0 0.0
      %3092 = vmatpush1.msra.mxu0 0.0
      %3093 = vmatprep.subr.mxu0 0.0
      %3094 = vmatpush1.msra.mxu0 0.0
      %3095 = vmatprep.subr.mxu0 0.0
      %3096 = vmatpush1.msra.mxu0 0.0
      %3097 = vmatprep.subr.mxu0 0.0
      %3098 = vmatpush1.msra.mxu0 0.0
      %3099 = vmatprep.subr.mxu0 0.0
      %3100 = vmatpush1.msra.mxu0 0.0
      %3101 = vmatprep.subr.mxu0 0.0
      %3102 = vmatpush1.msra.mxu0 0.0
      %3103 = vmatprep.subr.mxu0 0.0
      %3104 = vmatpush1.msra.mxu0 0.0
      %3105 = vmatprep.subr.mxu0 0.0
      %3106 = vmatpush1.msra.mxu0 0.0
      %3107 = vmatprep.subr.mxu0 0.0
      %3108 = vmatpush1.msra.mxu0 0.0
      %3109 = vmatprep.subr.mxu0 0.0
      %3110 = vmatpush1.msra.mxu0 0.0
      %3111 = vmatprep.subr.mxu0 0.0
      %3112 = vmatpush1.msra.mxu0 0.0
      %3113 = vmatprep.subr.mxu0 0.0
      %3114 = vmatpush1.msra.mxu0 0.0
      %3115 = vmatprep.subr.mxu0 0.0
      %3116 = vmatpush1.msra.mxu0 0.0
      %3117 = vmatprep.subr.mxu0 0.0
      %3118 = vmatpush1.msra.mxu0 0.0
      %3119 = vmatprep.subr.mxu0 0.0
      %3120 = vmatpush1.msra.mxu0 0.0
      %3121 = vmatprep.subr.mxu0 0.0
      %3122 = vmatpush1.msra.mxu0 0.0
      %3123 = vmatprep.mubr.f32.mxu0 0.0
      %3124 = vmatmul.mubr.f32.gmra.mrb[0].mxu0 %v2915
      %v3125 = vpop.f32.mrb[0].mxu0
      %v3126 = vadd.f32 0.0, %v3125
      %v3127 = vpop.f32.mrb[0].mxu0
      %v3128 = vadd.f32 0.0, %v3127
      %3129 = vdwg.mxu0
      %v3130 = vadd.f32 %v2848, %v2984
      %v3131 = vadd.f32 %v2849, %v2986
      %v3132 = vadd.f32 %v2850, %v3055
      %v3133 = vadd.f32 %v2851, %v3057
      %v3134 = vadd.f32 %v2852, %v3126
      %v3135 = vadd.f32 %v2853, %v3128
      %v3136 = vld [vmem:[%s1309] ss:$8 sm:$0xf]
      %v3137 = vld [vmem:[%s1309] ss:$8 sm:$0x30]
      %v3138 = vor.u32 %v3136, %v3137
      %v3140 = vlaneseq
      %v3141 = vshrl.u32 %v3140, 7
      %v3142 = vsub.s32 0, %v3141
      %v3143 = vrot.slane %v3138, %v3142
      %v3144 = vlaneseq
      %v3145 = vshrl.u32 %v3144, 7
      %v3146 = vsub.s32 1, %v3145
      %v3147 = vrot.slane %v3138, %v3146
      %v3148 = vlaneseq
      %v3149 = vshrl.u32 %v3148, 7
      %v3150 = vsub.s32 2, %v3149
      %v3151 = vrot.slane %v3138, %v3150
      %v3152 = vlaneseq
      %v3153 = vshrl.u32 %v3152, 7
      %v3154 = vsub.s32 3, %v3153
      %v3155 = vrot.slane %v3138, %v3154
      %v3156 = vlaneseq
      %v3157 = vshrl.u32 %v3156, 7
      %v3158 = vsub.s32 4, %v3157
      %v3159 = vrot.slane %v3138, %v3158
      %v3160 = vlaneseq
      %v3161 = vshrl.u32 %v3160, 7
      %v3162 = vsub.s32 5, %v3161
      %v3163 = vrot.slane %v3138, %v3162
      %v3170 = vmul.f32 %v1996, %v3143
      %v3171 = vmul.f32 %v1997, %v3147
      %v3172 = vmul.f32 %v1998, %v3151
      %v3173 = vmul.f32 %v1999, %v3155
      %v3174 = vmul.f32 %v2000, %v3159
      %v3175 = vmul.f32 %v2001, %v3163
      %s3176 = scalar_lea.vmem %s3, 32
      %v3177 = vld [vmem:[%s3176] sm:$0xff]
      %v3179 = vsel %vm2067, %v3177, 0
      %3181 = vmatprep.subr.mxu0 %v3171
      %3182 = vmatpush1.msra.mxu0 %v3170
      %3183 = vmatprep.subr.mxu0 0.0
      %3184 = vmatpush1.msra.mxu0 0.0
      %3185 = vmatprep.subr.mxu0 0.0
      %3186 = vmatpush1.msra.mxu0 0.0
      %3187 = vmatprep.subr.mxu0 0.0
      %3188 = vmatpush1.msra.mxu0 0.0
      %3189 = vmatprep.subr.mxu0 0.0
      %3190 = vmatpush1.msra.mxu0 0.0
      %3191 = vmatprep.subr.mxu0 0.0
      %3192 = vmatpush1.msra.mxu0 0.0
      %3193 = vmatprep.subr.mxu0 0.0
      %3194 = vmatpush1.msra.mxu0 0.0
      %3195 = vmatprep.subr.mxu0 0.0
      %3196 = vmatpush1.msra.mxu0 0.0
      %3197 = vmatprep.subr.mxu0 0.0
      %3198 = vmatpush1.msra.mxu0 0.0
      %3199 = vmatprep.subr.mxu0 0.0
      %3200 = vmatpush1.msra.mxu0 0.0
      %3201 = vmatprep.subr.mxu0 0.0
      %3202 = vmatpush1.msra.mxu0 0.0
      %3203 = vmatprep.subr.mxu0 0.0
      %3204 = vmatpush1.msra.mxu0 0.0
      %3205 = vmatprep.subr.mxu0 0.0
      %3206 = vmatpush1.msra.mxu0 0.0
      %3207 = vmatprep.subr.mxu0 0.0
      %3208 = vmatpush1.msra.mxu0 0.0
      %3209 = vmatprep.subr.mxu0 0.0
      %3210 = vmatpush1.msra.mxu0 0.0
      %3211 = vmatprep.subr.mxu0 0.0
      %3212 = vmatpush1.msra.mxu0 0.0
      %3213 = vmatprep.subr.mxu0 0.0
      %3214 = vmatpush1.msra.mxu0 0.0
      %3215 = vmatprep.subr.mxu0 0.0
      %3216 = vmatpush1.msra.mxu0 0.0
      %3217 = vmatprep.subr.mxu0 0.0
      %3218 = vmatpush1.msra.mxu0 0.0
      %3219 = vmatprep.subr.mxu0 0.0
      %3220 = vmatpush1.msra.mxu0 0.0
      %3221 = vmatprep.subr.mxu0 0.0
      %3222 = vmatpush1.msra.mxu0 0.0
      %3223 = vmatprep.subr.mxu0 0.0
      %3224 = vmatpush1.msra.mxu0 0.0
      %3225 = vmatprep.subr.mxu0 0.0
      %3226 = vmatpush1.msra.mxu0 0.0
      %3227 = vmatprep.subr.mxu0 0.0
      %3228 = vmatpush1.msra.mxu0 0.0
      %3229 = vmatprep.subr.mxu0 0.0
      %3230 = vmatpush1.msra.mxu0 0.0
      %3231 = vmatprep.subr.mxu0 0.0
      %3232 = vmatpush1.msra.mxu0 0.0
      %3233 = vmatprep.subr.mxu0 0.0
      %3234 = vmatpush1.msra.mxu0 0.0
      %3235 = vmatprep.subr.mxu0 0.0
      %3236 = vmatpush1.msra.mxu0 0.0
      %3237 = vmatprep.subr.mxu0 0.0
      %3238 = vmatpush1.msra.mxu0 0.0
      %3239 = vmatprep.subr.mxu0 0.0
      %3240 = vmatpush1.msra.mxu0 0.0
      %3241 = vmatprep.subr.mxu0 0.0
      %3242 = vmatpush1.msra.mxu0 0.0
      %3243 = vmatprep.subr.mxu0 0.0
      %3244 = vmatpush1.msra.mxu0 0.0
      %3245 = vmatprep.mubr.f32.mxu0 0.0
      %3246 = vmatmul.mubr.f32.gmra.mrb[0].mxu0 %v3179
      %v3247 = vpop.f32.mrb[0].mxu0
      %v3248 = vadd.f32 0.0, %v3247
      %v3249 = vpop.f32.mrb[0].mxu0
      %v3250 = vadd.f32 0.0, %v3249
      %3251 = vdwg.mxu0
      %3252 = vmatprep.subr.mxu0 %v3173
      %3253 = vmatpush1.msra.mxu0 %v3172
      %3254 = vmatprep.subr.mxu0 0.0
      %3255 = vmatpush1.msra.mxu0 0.0
      %3256 = vmatprep.subr.mxu0 0.0
      %3257 = vmatpush1.msra.mxu0 0.0
      %3258 = vmatprep.subr.mxu0 0.0
      %3259 = vmatpush1.msra.mxu0 0.0
      %3260 = vmatprep.subr.mxu0 0.0
      %3261 = vmatpush1.msra.mxu0 0.0
      %3262 = vmatprep.subr.mxu0 0.0
      %3263 = vmatpush1.msra.mxu0 0.0
      %3264 = vmatprep.subr.mxu0 0.0
      %3265 = vmatpush1.msra.mxu0 0.0
      %3266 = vmatprep.subr.mxu0 0.0
      %3267 = vmatpush1.msra.mxu0 0.0
      %3268 = vmatprep.subr.mxu0 0.0
      %3269 = vmatpush1.msra.mxu0 0.0
      %3270 = vmatprep.subr.mxu0 0.0
      %3271 = vmatpush1.msra.mxu0 0.0
      %3272 = vmatprep.subr.mxu0 0.0
      %3273 = vmatpush1.msra.mxu0 0.0
      %3274 = vmatprep.subr.mxu0 0.0
      %3275 = vmatpush1.msra.mxu0 0.0
      %3276 = vmatprep.subr.mxu0 0.0
      %3277 = vmatpush1.msra.mxu0 0.0
      %3278 = vmatprep.subr.mxu0 0.0
      %3279 = vmatpush1.msra.mxu0 0.0
      %3280 = vmatprep.subr.mxu0 0.0
      %3281 = vmatpush1.msra.mxu0 0.0
      %3282 = vmatprep.subr.mxu0 0.0
      %3283 = vmatpush1.msra.mxu0 0.0
      %3284 = vmatprep.subr.mxu0 0.0
      %3285 = vmatpush1.msra.mxu0 0.0
      %3286 = vmatprep.subr.mxu0 0.0
      %3287 = vmatpush1.msra.mxu0 0.0
      %3288 = vmatprep.subr.mxu0 0.0
      %3289 = vmatpush1.msra.mxu0 0.0
      %3290 = vmatprep.subr.mxu0 0.0
      %3291 = vmatpush1.msra.mxu0 0.0
      %3292 = vmatprep.subr.mxu0 0.0
      %3293 = vmatpush1.msra.mxu0 0.0
      %3294 = vmatprep.subr.mxu0 0.0
      %3295 = vmatpush1.msra.mxu0 0.0
      %3296 = vmatprep.subr.mxu0 0.0
      %3297 = vmatpush1.msra.mxu0 0.0
      %3298 = vmatprep.subr.mxu0 0.0
      %3299 = vmatpush1.msra.mxu0 0.0
      %3300 = vmatprep.subr.mxu0 0.0
      %3301 = vmatpush1.msra.mxu0 0.0
      %3302 = vmatprep.subr.mxu0 0.0
      %3303 = vmatpush1.msra.mxu0 0.0
      %3304 = vmatprep.subr.mxu0 0.0
      %3305 = vmatpush1.msra.mxu0 0.0
      %3306 = vmatprep.subr.mxu0 0.0
      %3307 = vmatpush1.msra.mxu0 0.0
      %3308 = vmatprep.subr.mxu0 0.0
      %3309 = vmatpush1.msra.mxu0 0.0
      %3310 = vmatprep.subr.mxu0 0.0
      %3311 = vmatpush1.msra.mxu0 0.0
      %3312 = vmatprep.subr.mxu0 0.0
      %3313 = vmatpush1.msra.mxu0 0.0
      %3314 = vmatprep.subr.mxu0 0.0
      %3315 = vmatpush1.msra.mxu0 0.0
      %3316 = vmatprep.mubr.f32.mxu0 0.0
      %3317 = vmatmul.mubr.f32.gmra.mrb[0].mxu0 %v3179
      %v3318 = vpop.f32.mrb[0].mxu0
      %v3319 = vadd.f32 0.0, %v3318
      %v3320 = vpop.f32.mrb[0].mxu0
      %v3321 = vadd.f32 0.0, %v3320
      %3322 = vdwg.mxu0
      %3323 = vmatprep.subr.mxu0 %v3175
      %3324 = vmatpush1.msra.mxu0 %v3174
      %3325 = vmatprep.subr.mxu0 0.0
      %3326 = vmatpush1.msra.mxu0 0.0
      %3327 = vmatprep.subr.mxu0 0.0
      %3328 = vmatpush1.msra.mxu0 0.0
      %3329 = vmatprep.subr.mxu0 0.0
      %3330 = vmatpush1.msra.mxu0 0.0
      %3331 = vmatprep.subr.mxu0 0.0
      %3332 = vmatpush1.msra.mxu0 0.0
      %3333 = vmatprep.subr.mxu0 0.0
      %3334 = vmatpush1.msra.mxu0 0.0
      %3335 = vmatprep.subr.mxu0 0.0
      %3336 = vmatpush1.msra.mxu0 0.0
      %3337 = vmatprep.subr.mxu0 0.0
      %3338 = vmatpush1.msra.mxu0 0.0
      %3339 = vmatprep.subr.mxu0 0.0
      %3340 = vmatpush1.msra.mxu0 0.0
      %3341 = vmatprep.subr.mxu0 0.0
      %3342 = vmatpush1.msra.mxu0 0.0
      %3343 = vmatprep.subr.mxu0 0.0
      %3344 = vmatpush1.msra.mxu0 0.0
      %3345 = vmatprep.subr.mxu0 0.0
      %3346 = vmatpush1.msra.mxu0 0.0
      %3347 = vmatprep.subr.mxu0 0.0
      %3348 = vmatpush1.msra.mxu0 0.0
      %3349 = vmatprep.subr.mxu0 0.0
      %3350 = vmatpush1.msra.mxu0 0.0
      %3351 = vmatprep.subr.mxu0 0.0
      %3352 = vmatpush1.msra.mxu0 0.0
      %3353 = vmatprep.subr.mxu0 0.0
      %3354 = vmatpush1.msra.mxu0 0.0
      %3355 = vmatprep.subr.mxu0 0.0
      %3356 = vmatpush1.msra.mxu0 0.0
      %3357 = vmatprep.subr.mxu0 0.0
      %3358 = vmatpush1.msra.mxu0 0.0
      %3359 = vmatprep.subr.mxu0 0.0
      %3360 = vmatpush1.msra.mxu0 0.0
      %3361 = vmatprep.subr.mxu0 0.0
      %3362 = vmatpush1.msra.mxu0 0.0
      %3363 = vmatprep.subr.mxu0 0.0
      %3364 = vmatpush1.msra.mxu0 0.0
      %3365 = vmatprep.subr.mxu0 0.0
      %3366 = vmatpush1.msra.mxu0 0.0
      %3367 = vmatprep.subr.mxu0 0.0
      %3368 = vmatpush1.msra.mxu0 0.0
      %3369 = vmatprep.subr.mxu0 0.0
      %3370 = vmatpush1.msra.mxu0 0.0
      %3371 = vmatprep.subr.mxu0 0.0
      %3372 = vmatpush1.msra.mxu0 0.0
      %3373 = vmatprep.subr.mxu0 0.0
      %3374 = vmatpush1.msra.mxu0 0.0
      %3375 = vmatprep.subr.mxu0 0.0
      %3376 = vmatpush1.msra.mxu0 0.0
      %3377 = vmatprep.subr.mxu0 0.0
      %3378 = vmatpush1.msra.mxu0 0.0
      %3379 = vmatprep.subr.mxu0 0.0
      %3380 = vmatpush1.msra.mxu0 0.0
      %3381 = vmatprep.subr.mxu0 0.0
      %3382 = vmatpush1.msra.mxu0 0.0
      %3383 = vmatprep.subr.mxu0 0.0
      %3384 = vmatpush1.msra.mxu0 0.0
      %3385 = vmatprep.subr.mxu0 0.0
      %3386 = vmatpush1.msra.mxu0 0.0
      %3387 = vmatprep.mubr.f32.mxu0 0.0
      %3388 = vmatmul.mubr.f32.gmra.mrb[0].mxu0 %v3179
      %v3389 = vpop.f32.mrb[0].mxu0
      %v3390 = vadd.f32 0.0, %v3389
      %v3391 = vpop.f32.mrb[0].mxu0
      %v3392 = vadd.f32 0.0, %v3391
      %3393 = vdwg.mxu0
      %v3394 = vadd.f32 %v3130, %v3248
      %v3395 = vadd.f32 %v3131, %v3250
      %v3396 = vadd.f32 %v3132, %v3319
      %v3397 = vadd.f32 %v3133, %v3321
      %v3398 = vadd.f32 %v3134, %v3390
      %v3399 = vadd.f32 %v3135, %v3392
      %3400 = vrot.lane.b32.xlu0 %v1996, 127
      %v3401 = vpop.permute.xlu0 %3400
      %3402 = vrot.lane.b32.xlu0 %v1997, 127
      %v3403 = vpop.permute.xlu0 %3402
      %3404 = vrot.lane.b32.xlu0 %v1998, 127
      %v3405 = vpop.permute.xlu0 %3404
      %3406 = vrot.lane.b32.xlu0 %v1999, 127
      %v3407 = vpop.permute.xlu0 %3406
      %3408 = vrot.lane.b32.xlu0 %v2000, 127
      %v3409 = vpop.permute.xlu0 %3408
      %3410 = vrot.lane.b32.xlu0 %v2001, 127
      %v3411 = vpop.permute.xlu0 %3410
      %v3412 = vsel %vm1329, %v3409, %v3411
      %v3413 = vsel %vm1329, %v3407, %v3409
      %v3414 = vsel %vm1329, %v3405, %v3407
      %v3415 = vsel %vm1329, %v3403, %v3405
      %v3416 = vsel %vm1329, %v3401, %v3403
      %v3417 = vsel %vm1329, %v3411, %v3401
      %v3418 = vld [vmem:[%s1336] ss:$8 sm:$0xf]
      %v3419 = vld [vmem:[%s1336] ss:$8 sm:$0x30]
      %v3420 = vor.u32 %v3418, %v3419
      %v3422 = vlaneseq
      %v3423 = vshrl.u32 %v3422, 7
      %v3424 = vsub.s32 0, %v3423
      %v3425 = vrot.slane %v3420, %v3424
      %v3426 = vlaneseq
      %v3427 = vshrl.u32 %v3426, 7
      %v3428 = vsub.s32 1, %v3427
      %v3429 = vrot.slane %v3420, %v3428
      %v3430 = vlaneseq
      %v3431 = vshrl.u32 %v3430, 7
      %v3432 = vsub.s32 2, %v3431
      %v3433 = vrot.slane %v3420, %v3432
      %v3434 = vlaneseq
      %v3435 = vshrl.u32 %v3434, 7
      %v3436 = vsub.s32 3, %v3435
      %v3437 = vrot.slane %v3420, %v3436
      %v3438 = vlaneseq
      %v3439 = vshrl.u32 %v3438, 7
      %v3440 = vsub.s32 4, %v3439
      %v3441 = vrot.slane %v3420, %v3440
      %v3442 = vlaneseq
      %v3443 = vshrl.u32 %v3442, 7
      %v3444 = vsub.s32 5, %v3443
      %v3445 = vrot.slane %v3420, %v3444
      %v3452 = vmul.f32 %v3416, %v3425
      %v3453 = vmul.f32 %v3415, %v3429
      %v3454 = vmul.f32 %v3414, %v3433
      %v3455 = vmul.f32 %v3413, %v3437
      %v3456 = vmul.f32 %v3412, %v3441
      %v3457 = vmul.f32 %v3417, %v3445
      %s3458 = scalar_lea.vmem %s3, 40
      %v3459 = vld [vmem:[%s3458] sm:$0xff]
      %v3461 = vsel %vm2067, %v3459, 0
      %3463 = vmatprep.subr.mxu0 %v3453
      %3464 = vmatpush1.msra.mxu0 %v3452
      %3465 = vmatprep.subr.mxu0 0.0
      %3466 = vmatpush1.msra.mxu0 0.0
      %3467 = vmatprep.subr.mxu0 0.0
      %3468 = vmatpush1.msra.mxu0 0.0
      %3469 = vmatprep.subr.mxu0 0.0
      %3470 = vmatpush1.msra.mxu0 0.0
      %3471 = vmatprep.subr.mxu0 0.0
      %3472 = vmatpush1.msra.mxu0 0.0
      %3473 = vmatprep.subr.mxu0 0.0
      %3474 = vmatpush1.msra.mxu0 0.0
      %3475 = vmatprep.subr.mxu0 0.0
      %3476 = vmatpush1.msra.mxu0 0.0
      %3477 = vmatprep.subr.mxu0 0.0
      %3478 = vmatpush1.msra.mxu0 0.0
      %3479 = vmatprep.subr.mxu0 0.0
      %3480 = vmatpush1.msra.mxu0 0.0
      %3481 = vmatprep.subr.mxu0 0.0
      %3482 = vmatpush1.msra.mxu0 0.0
      %3483 = vmatprep.subr.mxu0 0.0
      %3484 = vmatpush1.msra.mxu0 0.0
      %3485 = vmatprep.subr.mxu0 0.0
      %3486 = vmatpush1.msra.mxu0 0.0
      %3487 = vmatprep.subr.mxu0 0.0
      %3488 = vmatpush1.msra.mxu0 0.0
      %3489 = vmatprep.subr.mxu0 0.0
      %3490 = vmatpush1.msra.mxu0 0.0
      %3491 = vmatprep.subr.mxu0 0.0
      %3492 = vmatpush1.msra.mxu0 0.0
      %3493 = vmatprep.subr.mxu0 0.0
      %3494 = vmatpush1.msra.mxu0 0.0
      %3495 = vmatprep.subr.mxu0 0.0
      %3496 = vmatpush1.msra.mxu0 0.0
      %3497 = vmatprep.subr.mxu0 0.0
      %3498 = vmatpush1.msra.mxu0 0.0
      %3499 = vmatprep.subr.mxu0 0.0
      %3500 = vmatpush1.msra.mxu0 0.0
      %3501 = vmatprep.subr.mxu0 0.0
      %3502 = vmatpush1.msra.mxu0 0.0
      %3503 = vmatprep.subr.mxu0 0.0
      %3504 = vmatpush1.msra.mxu0 0.0
      %3505 = vmatprep.subr.mxu0 0.0
      %3506 = vmatpush1.msra.mxu0 0.0
      %3507 = vmatprep.subr.mxu0 0.0
      %3508 = vmatpush1.msra.mxu0 0.0
      %3509 = vmatprep.subr.mxu0 0.0
      %3510 = vmatpush1.msra.mxu0 0.0
      %3511 = vmatprep.subr.mxu0 0.0
      %3512 = vmatpush1.msra.mxu0 0.0
      %3513 = vmatprep.subr.mxu0 0.0
      %3514 = vmatpush1.msra.mxu0 0.0
      %3515 = vmatprep.subr.mxu0 0.0
      %3516 = vmatpush1.msra.mxu0 0.0
      %3517 = vmatprep.subr.mxu0 0.0
      %3518 = vmatpush1.msra.mxu0 0.0
      %3519 = vmatprep.subr.mxu0 0.0
      %3520 = vmatpush1.msra.mxu0 0.0
      %3521 = vmatprep.subr.mxu0 0.0
      %3522 = vmatpush1.msra.mxu0 0.0
      %3523 = vmatprep.subr.mxu0 0.0
      %3524 = vmatpush1.msra.mxu0 0.0
      %3525 = vmatprep.subr.mxu0 0.0
      %3526 = vmatpush1.msra.mxu0 0.0
      %3527 = vmatprep.mubr.f32.mxu0 0.0
      %3528 = vmatmul.mubr.f32.gmra.mrb[0].mxu0 %v3461
      %v3529 = vpop.f32.mrb[0].mxu0
      %v3530 = vadd.f32 0.0, %v3529
      %v3531 = vpop.f32.mrb[0].mxu0
      %v3532 = vadd.f32 0.0, %v3531
      %3533 = vdwg.mxu0
      %3534 = vmatprep.subr.mxu0 %v3455
      %3535 = vmatpush1.msra.mxu0 %v3454
      %3536 = vmatprep.subr.mxu0 0.0
      %3537 = vmatpush1.msra.mxu0 0.0
      %3538 = vmatprep.subr.mxu0 0.0
      %3539 = vmatpush1.msra.mxu0 0.0
      %3540 = vmatprep.subr.mxu0 0.0
      %3541 = vmatpush1.msra.mxu0 0.0
      %3542 = vmatprep.subr.mxu0 0.0
      %3543 = vmatpush1.msra.mxu0 0.0
      %3544 = vmatprep.subr.mxu0 0.0
      %3545 = vmatpush1.msra.mxu0 0.0
      %3546 = vmatprep.subr.mxu0 0.0
      %3547 = vmatpush1.msra.mxu0 0.0
      %3548 = vmatprep.subr.mxu0 0.0
      %3549 = vmatpush1.msra.mxu0 0.0
      %3550 = vmatprep.subr.mxu0 0.0
      %3551 = vmatpush1.msra.mxu0 0.0
      %3552 = vmatprep.subr.mxu0 0.0
      %3553 = vmatpush1.msra.mxu0 0.0
      %3554 = vmatprep.subr.mxu0 0.0
      %3555 = vmatpush1.msra.mxu0 0.0
      %3556 = vmatprep.subr.mxu0 0.0
      %3557 = vmatpush1.msra.mxu0 0.0
      %3558 = vmatprep.subr.mxu0 0.0
      %3559 = vmatpush1.msra.mxu0 0.0
      %3560 = vmatprep.subr.mxu0 0.0
      %3561 = vmatpush1.msra.mxu0 0.0
      %3562 = vmatprep.subr.mxu0 0.0
      %3563 = vmatpush1.msra.mxu0 0.0
      %3564 = vmatprep.subr.mxu0 0.0
      %3565 = vmatpush1.msra.mxu0 0.0
      %3566 = vmatprep.subr.mxu0 0.0
      %3567 = vmatpush1.msra.mxu0 0.0
      %3568 = vmatprep.subr.mxu0 0.0
      %3569 = vmatpush1.msra.mxu0 0.0
      %3570 = vmatprep.subr.mxu0 0.0
      %3571 = vmatpush1.msra.mxu0 0.0
      %3572 = vmatprep.subr.mxu0 0.0
      %3573 = vmatpush1.msra.mxu0 0.0
      %3574 = vmatprep.subr.mxu0 0.0
      %3575 = vmatpush1.msra.mxu0 0.0
      %3576 = vmatprep.subr.mxu0 0.0
      %3577 = vmatpush1.msra.mxu0 0.0
      %3578 = vmatprep.subr.mxu0 0.0
      %3579 = vmatpush1.msra.mxu0 0.0
      %3580 = vmatprep.subr.mxu0 0.0
      %3581 = vmatpush1.msra.mxu0 0.0
      %3582 = vmatprep.subr.mxu0 0.0
      %3583 = vmatpush1.msra.mxu0 0.0
      %3584 = vmatprep.subr.mxu0 0.0
      %3585 = vmatpush1.msra.mxu0 0.0
      %3586 = vmatprep.subr.mxu0 0.0
      %3587 = vmatpush1.msra.mxu0 0.0
      %3588 = vmatprep.subr.mxu0 0.0
      %3589 = vmatpush1.msra.mxu0 0.0
      %3590 = vmatprep.subr.mxu0 0.0
      %3591 = vmatpush1.msra.mxu0 0.0
      %3592 = vmatprep.subr.mxu0 0.0
      %3593 = vmatpush1.msra.mxu0 0.0
      %3594 = vmatprep.subr.mxu0 0.0
      %3595 = vmatpush1.msra.mxu0 0.0
      %3596 = vmatprep.subr.mxu0 0.0
      %3597 = vmatpush1.msra.mxu0 0.0
      %3598 = vmatprep.mubr.f32.mxu0 0.0
      %3599 = vmatmul.mubr.f32.gmra.mrb[0].mxu0 %v3461
      %v3600 = vpop.f32.mrb[0].mxu0
      %v3601 = vadd.f32 0.0, %v3600
      %v3602 = vpop.f32.mrb[0].mxu0
      %v3603 = vadd.f32 0.0, %v3602
      %3604 = vdwg.mxu0
      %3605 = vmatprep.subr.mxu0 %v3457
      %3606 = vmatpush1.msra.mxu0 %v3456
      %3607 = vmatprep.subr.mxu0 0.0
      %3608 = vmatpush1.msra.mxu0 0.0
      %3609 = vmatprep.subr.mxu0 0.0
      %3610 = vmatpush1.msra.mxu0 0.0
      %3611 = vmatprep.subr.mxu0 0.0
      %3612 = vmatpush1.msra.mxu0 0.0
      %3613 = vmatprep.subr.mxu0 0.0
      %3614 = vmatpush1.msra.mxu0 0.0
      %3615 = vmatprep.subr.mxu0 0.0
      %3616 = vmatpush1.msra.mxu0 0.0
      %3617 = vmatprep.subr.mxu0 0.0
      %3618 = vmatpush1.msra.mxu0 0.0
      %3619 = vmatprep.subr.mxu0 0.0
      %3620 = vmatpush1.msra.mxu0 0.0
      %3621 = vmatprep.subr.mxu0 0.0
      %3622 = vmatpush1.msra.mxu0 0.0
      %3623 = vmatprep.subr.mxu0 0.0
      %3624 = vmatpush1.msra.mxu0 0.0
      %3625 = vmatprep.subr.mxu0 0.0
      %3626 = vmatpush1.msra.mxu0 0.0
      %3627 = vmatprep.subr.mxu0 0.0
      %3628 = vmatpush1.msra.mxu0 0.0
      %3629 = vmatprep.subr.mxu0 0.0
      %3630 = vmatpush1.msra.mxu0 0.0
      %3631 = vmatprep.subr.mxu0 0.0
      %3632 = vmatpush1.msra.mxu0 0.0
      %3633 = vmatprep.subr.mxu0 0.0
      %3634 = vmatpush1.msra.mxu0 0.0
      %3635 = vmatprep.subr.mxu0 0.0
      %3636 = vmatpush1.msra.mxu0 0.0
      %3637 = vmatprep.subr.mxu0 0.0
      %3638 = vmatpush1.msra.mxu0 0.0
      %3639 = vmatprep.subr.mxu0 0.0
      %3640 = vmatpush1.msra.mxu0 0.0
      %3641 = vmatprep.subr.mxu0 0.0
      %3642 = vmatpush1.msra.mxu0 0.0
      %3643 = vmatprep.subr.mxu0 0.0
      %3644 = vmatpush1.msra.mxu0 0.0
      %3645 = vmatprep.subr.mxu0 0.0
      %3646 = vmatpush1.msra.mxu0 0.0
      %3647 = vmatprep.subr.mxu0 0.0
      %3648 = vmatpush1.msra.mxu0 0.0
      %3649 = vmatprep.subr.mxu0 0.0
      %3650 = vmatpush1.msra.mxu0 0.0
      %3651 = vmatprep.subr.mxu0 0.0
      %3652 = vmatpush1.msra.mxu0 0.0
      %3653 = vmatprep.subr.mxu0 0.0
      %3654 = vmatpush1.msra.mxu0 0.0
      %3655 = vmatprep.subr.mxu0 0.0
      %3656 = vmatpush1.msra.mxu0 0.0
      %3657 = vmatprep.subr.mxu0 0.0
      %3658 = vmatpush1.msra.mxu0 0.0
      %3659 = vmatprep.subr.mxu0 0.0
      %3660 = vmatpush1.msra.mxu0 0.0
      %3661 = vmatprep.subr.mxu0 0.0
      %3662 = vmatpush1.msra.mxu0 0.0
      %3663 = vmatprep.subr.mxu0 0.0
      %3664 = vmatpush1.msra.mxu0 0.0
      %3665 = vmatprep.subr.mxu0 0.0
      %3666 = vmatpush1.msra.mxu0 0.0
      %3667 = vmatprep.subr.mxu0 0.0
      %3668 = vmatpush1.msra.mxu0 0.0
      %3669 = vmatprep.mubr.f32.mxu0 0.0
      %3670 = vmatmul.mubr.f32.gmra.mrb[0].mxu0 %v3461
      %v3671 = vpop.f32.mrb[0].mxu0
      %v3672 = vadd.f32 0.0, %v3671
      %v3673 = vpop.f32.mrb[0].mxu0
      %v3674 = vadd.f32 0.0, %v3673
      %3675 = vdwg.mxu0
      %v3676 = vadd.f32 %v3394, %v3530
      %v3677 = vadd.f32 %v3395, %v3532
      %v3678 = vadd.f32 %v3396, %v3601
      %v3679 = vadd.f32 %v3397, %v3603
      %v3680 = vadd.f32 %v3398, %v3672
      %v3681 = vadd.f32 %v3399, %v3674
      %3682 = vrot.lane.b32.xlu0 %v1996, 113
      %v3683 = vpop.permute.xlu0 %3682
      %3684 = vrot.lane.b32.xlu0 %v1997, 113
      %v3685 = vpop.permute.xlu0 %3684
      %3686 = vrot.lane.b32.xlu0 %v1998, 113
      %v3687 = vpop.permute.xlu0 %3686
      %3688 = vrot.lane.b32.xlu0 %v1999, 113
      %v3689 = vpop.permute.xlu0 %3688
      %3690 = vrot.lane.b32.xlu0 %v2000, 113
      %v3691 = vpop.permute.xlu0 %3690
      %3692 = vrot.lane.b32.xlu0 %v2001, 113
      %v3693 = vpop.permute.xlu0 %3692
      %v3694 = vsel %vm1439, %v3691, %v3693
      %v3695 = vsel %vm1439, %v3689, %v3691
      %v3696 = vsel %vm1439, %v3687, %v3689
      %v3697 = vsel %vm1439, %v3685, %v3687
      %v3698 = vsel %vm1439, %v3683, %v3685
      %v3699 = vsel %vm1439, %v3693, %v3683
      %v3700 = vld [vmem:[%s1446] ss:$8 sm:$0xf]
      %v3701 = vld [vmem:[%s1446] ss:$8 sm:$0x30]
      %v3702 = vor.u32 %v3700, %v3701
      %v3704 = vlaneseq
      %v3705 = vshrl.u32 %v3704, 7
      %v3706 = vsub.s32 0, %v3705
      %v3707 = vrot.slane %v3702, %v3706
      %v3708 = vlaneseq
      %v3709 = vshrl.u32 %v3708, 7
      %v3710 = vsub.s32 1, %v3709
      %v3711 = vrot.slane %v3702, %v3710
      %v3712 = vlaneseq
      %v3713 = vshrl.u32 %v3712, 7
      %v3714 = vsub.s32 2, %v3713
      %v3715 = vrot.slane %v3702, %v3714
      %v3716 = vlaneseq
      %v3717 = vshrl.u32 %v3716, 7
      %v3718 = vsub.s32 3, %v3717
      %v3719 = vrot.slane %v3702, %v3718
      %v3720 = vlaneseq
      %v3721 = vshrl.u32 %v3720, 7
      %v3722 = vsub.s32 4, %v3721
      %v3723 = vrot.slane %v3702, %v3722
      %v3724 = vlaneseq
      %v3725 = vshrl.u32 %v3724, 7
      %v3726 = vsub.s32 5, %v3725
      %v3727 = vrot.slane %v3702, %v3726
      %v3734 = vmul.f32 %v3698, %v3707
      %v3735 = vmul.f32 %v3697, %v3711
      %v3736 = vmul.f32 %v3696, %v3715
      %v3737 = vmul.f32 %v3695, %v3719
      %v3738 = vmul.f32 %v3694, %v3723
      %v3739 = vmul.f32 %v3699, %v3727
      %s3740 = scalar_lea.vmem %s3, 48
      %v3741 = vld [vmem:[%s3740] sm:$0xff]
      %v3743 = vsel %vm2067, %v3741, 0
      %3745 = vmatprep.subr.mxu0 %v3735
      %3746 = vmatpush1.msra.mxu0 %v3734
      %3747 = vmatprep.subr.mxu0 0.0
      %3748 = vmatpush1.msra.mxu0 0.0
      %3749 = vmatprep.subr.mxu0 0.0
      %3750 = vmatpush1.msra.mxu0 0.0
      %3751 = vmatprep.subr.mxu0 0.0
      %3752 = vmatpush1.msra.mxu0 0.0
      %3753 = vmatprep.subr.mxu0 0.0
      %3754 = vmatpush1.msra.mxu0 0.0
      %3755 = vmatprep.subr.mxu0 0.0
      %3756 = vmatpush1.msra.mxu0 0.0
      %3757 = vmatprep.subr.mxu0 0.0
      %3758 = vmatpush1.msra.mxu0 0.0
      %3759 = vmatprep.subr.mxu0 0.0
      %3760 = vmatpush1.msra.mxu0 0.0
      %3761 = vmatprep.subr.mxu0 0.0
      %3762 = vmatpush1.msra.mxu0 0.0
      %3763 = vmatprep.subr.mxu0 0.0
      %3764 = vmatpush1.msra.mxu0 0.0
      %3765 = vmatprep.subr.mxu0 0.0
      %3766 = vmatpush1.msra.mxu0 0.0
      %3767 = vmatprep.subr.mxu0 0.0
      %3768 = vmatpush1.msra.mxu0 0.0
      %3769 = vmatprep.subr.mxu0 0.0
      %3770 = vmatpush1.msra.mxu0 0.0
      %3771 = vmatprep.subr.mxu0 0.0
      %3772 = vmatpush1.msra.mxu0 0.0
      %3773 = vmatprep.subr.mxu0 0.0
      %3774 = vmatpush1.msra.mxu0 0.0
      %3775 = vmatprep.subr.mxu0 0.0
      %3776 = vmatpush1.msra.mxu0 0.0
      %3777 = vmatprep.subr.mxu0 0.0
      %3778 = vmatpush1.msra.mxu0 0.0
      %3779 = vmatprep.subr.mxu0 0.0
      %3780 = vmatpush1.msra.mxu0 0.0
      %3781 = vmatprep.subr.mxu0 0.0
      %3782 = vmatpush1.msra.mxu0 0.0
      %3783 = vmatprep.subr.mxu0 0.0
      %3784 = vmatpush1.msra.mxu0 0.0
      %3785 = vmatprep.subr.mxu0 0.0
      %3786 = vmatpush1.msra.mxu0 0.0
      %3787 = vmatprep.subr.mxu0 0.0
      %3788 = vmatpush1.msra.mxu0 0.0
      %3789 = vmatprep.subr.mxu0 0.0
      %3790 = vmatpush1.msra.mxu0 0.0
      %3791 = vmatprep.subr.mxu0 0.0
      %3792 = vmatpush1.msra.mxu0 0.0
      %3793 = vmatprep.subr.mxu0 0.0
      %3794 = vmatpush1.msra.mxu0 0.0
      %3795 = vmatprep.subr.mxu0 0.0
      %3796 = vmatpush1.msra.mxu0 0.0
      %3797 = vmatprep.subr.mxu0 0.0
      %3798 = vmatpush1.msra.mxu0 0.0
      %3799 = vmatprep.subr.mxu0 0.0
      %3800 = vmatpush1.msra.mxu0 0.0
      %3801 = vmatprep.subr.mxu0 0.0
      %3802 = vmatpush1.msra.mxu0 0.0
      %3803 = vmatprep.subr.mxu0 0.0
      %3804 = vmatpush1.msra.mxu0 0.0
      %3805 = vmatprep.subr.mxu0 0.0
      %3806 = vmatpush1.msra.mxu0 0.0
      %3807 = vmatprep.subr.mxu0 0.0
      %3808 = vmatpush1.msra.mxu0 0.0
      %3809 = vmatprep.mubr.f32.mxu0 0.0
      %3810 = vmatmul.mubr.f32.gmra.mrb[0].mxu0 %v3743
      %v3811 = vpop.f32.mrb[0].mxu0
      %v3812 = vadd.f32 0.0, %v3811
      %v3813 = vpop.f32.mrb[0].mxu0
      %v3814 = vadd.f32 0.0, %v3813
      %3815 = vdwg.mxu0
      %3816 = vmatprep.subr.mxu0 %v3737
      %3817 = vmatpush1.msra.mxu0 %v3736
      %3818 = vmatprep.subr.mxu0 0.0
      %3819 = vmatpush1.msra.mxu0 0.0
      %3820 = vmatprep.subr.mxu0 0.0
      %3821 = vmatpush1.msra.mxu0 0.0
      %3822 = vmatprep.subr.mxu0 0.0
      %3823 = vmatpush1.msra.mxu0 0.0
      %3824 = vmatprep.subr.mxu0 0.0
      %3825 = vmatpush1.msra.mxu0 0.0
      %3826 = vmatprep.subr.mxu0 0.0
      %3827 = vmatpush1.msra.mxu0 0.0
      %3828 = vmatprep.subr.mxu0 0.0
      %3829 = vmatpush1.msra.mxu0 0.0
      %3830 = vmatprep.subr.mxu0 0.0
      %3831 = vmatpush1.msra.mxu0 0.0
      %3832 = vmatprep.subr.mxu0 0.0
      %3833 = vmatpush1.msra.mxu0 0.0
      %3834 = vmatprep.subr.mxu0 0.0
      %3835 = vmatpush1.msra.mxu0 0.0
      %3836 = vmatprep.subr.mxu0 0.0
      %3837 = vmatpush1.msra.mxu0 0.0
      %3838 = vmatprep.subr.mxu0 0.0
      %3839 = vmatpush1.msra.mxu0 0.0
      %3840 = vmatprep.subr.mxu0 0.0
      %3841 = vmatpush1.msra.mxu0 0.0
      %3842 = vmatprep.subr.mxu0 0.0
      %3843 = vmatpush1.msra.mxu0 0.0
      %3844 = vmatprep.subr.mxu0 0.0
      %3845 = vmatpush1.msra.mxu0 0.0
      %3846 = vmatprep.subr.mxu0 0.0
      %3847 = vmatpush1.msra.mxu0 0.0
      %3848 = vmatprep.subr.mxu0 0.0
      %3849 = vmatpush1.msra.mxu0 0.0
      %3850 = vmatprep.subr.mxu0 0.0
      %3851 = vmatpush1.msra.mxu0 0.0
      %3852 = vmatprep.subr.mxu0 0.0
      %3853 = vmatpush1.msra.mxu0 0.0
      %3854 = vmatprep.subr.mxu0 0.0
      %3855 = vmatpush1.msra.mxu0 0.0
      %3856 = vmatprep.subr.mxu0 0.0
      %3857 = vmatpush1.msra.mxu0 0.0
      %3858 = vmatprep.subr.mxu0 0.0
      %3859 = vmatpush1.msra.mxu0 0.0
      %3860 = vmatprep.subr.mxu0 0.0
      %3861 = vmatpush1.msra.mxu0 0.0
      %3862 = vmatprep.subr.mxu0 0.0
      %3863 = vmatpush1.msra.mxu0 0.0
      %3864 = vmatprep.subr.mxu0 0.0
      %3865 = vmatpush1.msra.mxu0 0.0
      %3866 = vmatprep.subr.mxu0 0.0
      %3867 = vmatpush1.msra.mxu0 0.0
      %3868 = vmatprep.subr.mxu0 0.0
      %3869 = vmatpush1.msra.mxu0 0.0
      %3870 = vmatprep.subr.mxu0 0.0
      %3871 = vmatpush1.msra.mxu0 0.0
      %3872 = vmatprep.subr.mxu0 0.0
      %3873 = vmatpush1.msra.mxu0 0.0
      %3874 = vmatprep.subr.mxu0 0.0
      %3875 = vmatpush1.msra.mxu0 0.0
      %3876 = vmatprep.subr.mxu0 0.0
      %3877 = vmatpush1.msra.mxu0 0.0
      %3878 = vmatprep.subr.mxu0 0.0
      %3879 = vmatpush1.msra.mxu0 0.0
      %3880 = vmatprep.mubr.f32.mxu0 0.0
      %3881 = vmatmul.mubr.f32.gmra.mrb[0].mxu0 %v3743
      %v3882 = vpop.f32.mrb[0].mxu0
      %v3883 = vadd.f32 0.0, %v3882
      %v3884 = vpop.f32.mrb[0].mxu0
      %v3885 = vadd.f32 0.0, %v3884
      %3886 = vdwg.mxu0
      %3887 = vmatprep.subr.mxu0 %v3739
      %3888 = vmatpush1.msra.mxu0 %v3738
      %3889 = vmatprep.subr.mxu0 0.0
      %3890 = vmatpush1.msra.mxu0 0.0
      %3891 = vmatprep.subr.mxu0 0.0
      %3892 = vmatpush1.msra.mxu0 0.0
      %3893 = vmatprep.subr.mxu0 0.0
      %3894 = vmatpush1.msra.mxu0 0.0
      %3895 = vmatprep.subr.mxu0 0.0
      %3896 = vmatpush1.msra.mxu0 0.0
      %3897 = vmatprep.subr.mxu0 0.0
      %3898 = vmatpush1.msra.mxu0 0.0
      %3899 = vmatprep.subr.mxu0 0.0
      %3900 = vmatpush1.msra.mxu0 0.0
      %3901 = vmatprep.subr.mxu0 0.0
      %3902 = vmatpush1.msra.mxu0 0.0
      %3903 = vmatprep.subr.mxu0 0.0
      %3904 = vmatpush1.msra.mxu0 0.0
      %3905 = vmatprep.subr.mxu0 0.0
      %3906 = vmatpush1.msra.mxu0 0.0
      %3907 = vmatprep.subr.mxu0 0.0
      %3908 = vmatpush1.msra.mxu0 0.0
      %3909 = vmatprep.subr.mxu0 0.0
      %3910 = vmatpush1.msra.mxu0 0.0
      %3911 = vmatprep.subr.mxu0 0.0
      %3912 = vmatpush1.msra.mxu0 0.0
      %3913 = vmatprep.subr.mxu0 0.0
      %3914 = vmatpush1.msra.mxu0 0.0
      %3915 = vmatprep.subr.mxu0 0.0
      %3916 = vmatpush1.msra.mxu0 0.0
      %3917 = vmatprep.subr.mxu0 0.0
      %3918 = vmatpush1.msra.mxu0 0.0
      %3919 = vmatprep.subr.mxu0 0.0
      %3920 = vmatpush1.msra.mxu0 0.0
      %3921 = vmatprep.subr.mxu0 0.0
      %3922 = vmatpush1.msra.mxu0 0.0
      %3923 = vmatprep.subr.mxu0 0.0
      %3924 = vmatpush1.msra.mxu0 0.0
      %3925 = vmatprep.subr.mxu0 0.0
      %3926 = vmatpush1.msra.mxu0 0.0
      %3927 = vmatprep.subr.mxu0 0.0
      %3928 = vmatpush1.msra.mxu0 0.0
      %3929 = vmatprep.subr.mxu0 0.0
      %3930 = vmatpush1.msra.mxu0 0.0
      %3931 = vmatprep.subr.mxu0 0.0
      %3932 = vmatpush1.msra.mxu0 0.0
      %3933 = vmatprep.subr.mxu0 0.0
      %3934 = vmatpush1.msra.mxu0 0.0
      %3935 = vmatprep.subr.mxu0 0.0
      %3936 = vmatpush1.msra.mxu0 0.0
      %3937 = vmatprep.subr.mxu0 0.0
      %3938 = vmatpush1.msra.mxu0 0.0
      %3939 = vmatprep.subr.mxu0 0.0
      %3940 = vmatpush1.msra.mxu0 0.0
      %3941 = vmatprep.subr.mxu0 0.0
      %3942 = vmatpush1.msra.mxu0 0.0
      %3943 = vmatprep.subr.mxu0 0.0
      %3944 = vmatpush1.msra.mxu0 0.0
      %3945 = vmatprep.subr.mxu0 0.0
      %3946 = vmatpush1.msra.mxu0 0.0
      %3947 = vmatprep.subr.mxu0 0.0
      %3948 = vmatpush1.msra.mxu0 0.0
      %3949 = vmatprep.subr.mxu0 0.0
      %3950 = vmatpush1.msra.mxu0 0.0
      %3951 = vmatprep.mubr.f32.mxu0 0.0
      %3952 = vmatmul.mubr.f32.gmra.mrb[0].mxu0 %v3743
      %v3953 = vpop.f32.mrb[0].mxu0
      %v3954 = vadd.f32 0.0, %v3953
      %v3955 = vpop.f32.mrb[0].mxu0
      %v3956 = vadd.f32 0.0, %v3955
      %3957 = vdwg.mxu0
      %v3958 = vadd.f32 %v3676, %v3812
      %v3959 = vadd.f32 %v3677, %v3814
      %v3960 = vadd.f32 %v3678, %v3883
      %v3961 = vadd.f32 %v3679, %v3885
      %v3962 = vadd.f32 %v3680, %v3954
      %v3963 = vadd.f32 %v3681, %v3956
      %3964 = vrot.lane.b32.xlu0 %v1996, 112
      %v3965 = vpop.permute.xlu0 %3964
      %3966 = vrot.lane.b32.xlu0 %v1997, 112
      %v3967 = vpop.permute.xlu0 %3966
      %3968 = vrot.lane.b32.xlu0 %v1998, 112
      %v3969 = vpop.permute.xlu0 %3968
      %3970 = vrot.lane.b32.xlu0 %v1999, 112
      %v3971 = vpop.permute.xlu0 %3970
      %3972 = vrot.lane.b32.xlu0 %v2000, 112
      %v3973 = vpop.permute.xlu0 %3972
      %3974 = vrot.lane.b32.xlu0 %v2001, 112
      %v3975 = vpop.permute.xlu0 %3974
      %v3976 = vsel %vm1549, %v3973, %v3975
      %v3977 = vsel %vm1549, %v3971, %v3973
      %v3978 = vsel %vm1549, %v3969, %v3971
      %v3979 = vsel %vm1549, %v3967, %v3969
      %v3980 = vsel %vm1549, %v3965, %v3967
      %v3981 = vsel %vm1549, %v3975, %v3965
      %v3982 = vld [vmem:[%s1556] ss:$8 sm:$0xf]
      %v3983 = vld [vmem:[%s1556] ss:$8 sm:$0x30]
      %v3984 = vor.u32 %v3982, %v3983
      %v3986 = vlaneseq
      %v3987 = vshrl.u32 %v3986, 7
      %v3988 = vsub.s32 0, %v3987
      %v3989 = vrot.slane %v3984, %v3988
      %v3990 = vlaneseq
      %v3991 = vshrl.u32 %v3990, 7
      %v3992 = vsub.s32 1, %v3991
      %v3993 = vrot.slane %v3984, %v3992
      %v3994 = vlaneseq
      %v3995 = vshrl.u32 %v3994, 7
      %v3996 = vsub.s32 2, %v3995
      %v3997 = vrot.slane %v3984, %v3996
      %v3998 = vlaneseq
      %v3999 = vshrl.u32 %v3998, 7
      %v4000 = vsub.s32 3, %v3999
      %v4001 = vrot.slane %v3984, %v4000
      %v4002 = vlaneseq
      %v4003 = vshrl.u32 %v4002, 7
      %v4004 = vsub.s32 4, %v4003
      %v4005 = vrot.slane %v3984, %v4004
      %v4006 = vlaneseq
      %v4007 = vshrl.u32 %v4006, 7
      %v4008 = vsub.s32 5, %v4007
      %v4009 = vrot.slane %v3984, %v4008
      %v4016 = vmul.f32 %v3980, %v3989
      %v4017 = vmul.f32 %v3979, %v3993
      %v4018 = vmul.f32 %v3978, %v3997
      %v4019 = vmul.f32 %v3977, %v4001
      %v4020 = vmul.f32 %v3976, %v4005
      %v4021 = vmul.f32 %v3981, %v4009
      %s4022 = scalar_lea.vmem %s3, 56
      %v4023 = vld [vmem:[%s4022] sm:$0xff]
      %v4025 = vsel %vm2067, %v4023, 0
      %4027 = vmatprep.subr.mxu0 %v4017
      %4028 = vmatpush1.msra.mxu0 %v4016
      %4029 = vmatprep.subr.mxu0 0.0
      %4030 = vmatpush1.msra.mxu0 0.0
      %4031 = vmatprep.subr.mxu0 0.0
      %4032 = vmatpush1.msra.mxu0 0.0
      %4033 = vmatprep.subr.mxu0 0.0
      %4034 = vmatpush1.msra.mxu0 0.0
      %4035 = vmatprep.subr.mxu0 0.0
      %4036 = vmatpush1.msra.mxu0 0.0
      %4037 = vmatprep.subr.mxu0 0.0
      %4038 = vmatpush1.msra.mxu0 0.0
      %4039 = vmatprep.subr.mxu0 0.0
      %4040 = vmatpush1.msra.mxu0 0.0
      %4041 = vmatprep.subr.mxu0 0.0
      %4042 = vmatpush1.msra.mxu0 0.0
      %4043 = vmatprep.subr.mxu0 0.0
      %4044 = vmatpush1.msra.mxu0 0.0
      %4045 = vmatprep.subr.mxu0 0.0
      %4046 = vmatpush1.msra.mxu0 0.0
      %4047 = vmatprep.subr.mxu0 0.0
      %4048 = vmatpush1.msra.mxu0 0.0
      %4049 = vmatprep.subr.mxu0 0.0
      %4050 = vmatpush1.msra.mxu0 0.0
      %4051 = vmatprep.subr.mxu0 0.0
      %4052 = vmatpush1.msra.mxu0 0.0
      %4053 = vmatprep.subr.mxu0 0.0
      %4054 = vmatpush1.msra.mxu0 0.0
      %4055 = vmatprep.subr.mxu0 0.0
      %4056 = vmatpush1.msra.mxu0 0.0
      %4057 = vmatprep.subr.mxu0 0.0
      %4058 = vmatpush1.msra.mxu0 0.0
      %4059 = vmatprep.subr.mxu0 0.0
      %4060 = vmatpush1.msra.mxu0 0.0
      %4061 = vmatprep.subr.mxu0 0.0
      %4062 = vmatpush1.msra.mxu0 0.0
      %4063 = vmatprep.subr.mxu0 0.0
      %4064 = vmatpush1.msra.mxu0 0.0
      %4065 = vmatprep.subr.mxu0 0.0
      %4066 = vmatpush1.msra.mxu0 0.0
      %4067 = vmatprep.subr.mxu0 0.0
      %4068 = vmatpush1.msra.mxu0 0.0
      %4069 = vmatprep.subr.mxu0 0.0
      %4070 = vmatpush1.msra.mxu0 0.0
      %4071 = vmatprep.subr.mxu0 0.0
      %4072 = vmatpush1.msra.mxu0 0.0
      %4073 = vmatprep.subr.mxu0 0.0
      %4074 = vmatpush1.msra.mxu0 0.0
      %4075 = vmatprep.subr.mxu0 0.0
      %4076 = vmatpush1.msra.mxu0 0.0
      %4077 = vmatprep.subr.mxu0 0.0
      %4078 = vmatpush1.msra.mxu0 0.0
      %4079 = vmatprep.subr.mxu0 0.0
      %4080 = vmatpush1.msra.mxu0 0.0
      %4081 = vmatprep.subr.mxu0 0.0
      %4082 = vmatpush1.msra.mxu0 0.0
      %4083 = vmatprep.subr.mxu0 0.0
      %4084 = vmatpush1.msra.mxu0 0.0
      %4085 = vmatprep.subr.mxu0 0.0
      %4086 = vmatpush1.msra.mxu0 0.0
      %4087 = vmatprep.subr.mxu0 0.0
      %4088 = vmatpush1.msra.mxu0 0.0
      %4089 = vmatprep.subr.mxu0 0.0
      %4090 = vmatpush1.msra.mxu0 0.0
      %4091 = vmatprep.mubr.f32.mxu0 0.0
      %4092 = vmatmul.mubr.f32.gmra.mrb[0].mxu0 %v4025
      %v4093 = vpop.f32.mrb[0].mxu0
      %v4094 = vadd.f32 0.0, %v4093
      %v4095 = vpop.f32.mrb[0].mxu0
      %v4096 = vadd.f32 0.0, %v4095
      %4097 = vdwg.mxu0
      %4098 = vmatprep.subr.mxu0 %v4019
      %4099 = vmatpush1.msra.mxu0 %v4018
      %4100 = vmatprep.subr.mxu0 0.0
      %4101 = vmatpush1.msra.mxu0 0.0
      %4102 = vmatprep.subr.mxu0 0.0
      %4103 = vmatpush1.msra.mxu0 0.0
      %4104 = vmatprep.subr.mxu0 0.0
      %4105 = vmatpush1.msra.mxu0 0.0
      %4106 = vmatprep.subr.mxu0 0.0
      %4107 = vmatpush1.msra.mxu0 0.0
      %4108 = vmatprep.subr.mxu0 0.0
      %4109 = vmatpush1.msra.mxu0 0.0
      %4110 = vmatprep.subr.mxu0 0.0
      %4111 = vmatpush1.msra.mxu0 0.0
      %4112 = vmatprep.subr.mxu0 0.0
      %4113 = vmatpush1.msra.mxu0 0.0
      %4114 = vmatprep.subr.mxu0 0.0
      %4115 = vmatpush1.msra.mxu0 0.0
      %4116 = vmatprep.subr.mxu0 0.0
      %4117 = vmatpush1.msra.mxu0 0.0
      %4118 = vmatprep.subr.mxu0 0.0
      %4119 = vmatpush1.msra.mxu0 0.0
      %4120 = vmatprep.subr.mxu0 0.0
      %4121 = vmatpush1.msra.mxu0 0.0
      %4122 = vmatprep.subr.mxu0 0.0
      %4123 = vmatpush1.msra.mxu0 0.0
      %4124 = vmatprep.subr.mxu0 0.0
      %4125 = vmatpush1.msra.mxu0 0.0
      %4126 = vmatprep.subr.mxu0 0.0
      %4127 = vmatpush1.msra.mxu0 0.0
      %4128 = vmatprep.subr.mxu0 0.0
      %4129 = vmatpush1.msra.mxu0 0.0
      %4130 = vmatprep.subr.mxu0 0.0
      %4131 = vmatpush1.msra.mxu0 0.0
      %4132 = vmatprep.subr.mxu0 0.0
      %4133 = vmatpush1.msra.mxu0 0.0
      %4134 = vmatprep.subr.mxu0 0.0
      %4135 = vmatpush1.msra.mxu0 0.0
      %4136 = vmatprep.subr.mxu0 0.0
      %4137 = vmatpush1.msra.mxu0 0.0
      %4138 = vmatprep.subr.mxu0 0.0
      %4139 = vmatpush1.msra.mxu0 0.0
      %4140 = vmatprep.subr.mxu0 0.0
      %4141 = vmatpush1.msra.mxu0 0.0
      %4142 = vmatprep.subr.mxu0 0.0
      %4143 = vmatpush1.msra.mxu0 0.0
      %4144 = vmatprep.subr.mxu0 0.0
      %4145 = vmatpush1.msra.mxu0 0.0
      %4146 = vmatprep.subr.mxu0 0.0
      %4147 = vmatpush1.msra.mxu0 0.0
      %4148 = vmatprep.subr.mxu0 0.0
      %4149 = vmatpush1.msra.mxu0 0.0
      %4150 = vmatprep.subr.mxu0 0.0
      %4151 = vmatpush1.msra.mxu0 0.0
      %4152 = vmatprep.subr.mxu0 0.0
      %4153 = vmatpush1.msra.mxu0 0.0
      %4154 = vmatprep.subr.mxu0 0.0
      %4155 = vmatpush1.msra.mxu0 0.0
      %4156 = vmatprep.subr.mxu0 0.0
      %4157 = vmatpush1.msra.mxu0 0.0
      %4158 = vmatprep.subr.mxu0 0.0
      %4159 = vmatpush1.msra.mxu0 0.0
      %4160 = vmatprep.subr.mxu0 0.0
      %4161 = vmatpush1.msra.mxu0 0.0
      %4162 = vmatprep.mubr.f32.mxu0 0.0
      %4163 = vmatmul.mubr.f32.gmra.mrb[0].mxu0 %v4025
      %v4164 = vpop.f32.mrb[0].mxu0
      %v4165 = vadd.f32 0.0, %v4164
      %v4166 = vpop.f32.mrb[0].mxu0
      %v4167 = vadd.f32 0.0, %v4166
      %4168 = vdwg.mxu0
      %4169 = vmatprep.subr.mxu0 %v4021
      %4170 = vmatpush1.msra.mxu0 %v4020
      %4171 = vmatprep.subr.mxu0 0.0
      %4172 = vmatpush1.msra.mxu0 0.0
      %4173 = vmatprep.subr.mxu0 0.0
      %4174 = vmatpush1.msra.mxu0 0.0
      %4175 = vmatprep.subr.mxu0 0.0
      %4176 = vmatpush1.msra.mxu0 0.0
      %4177 = vmatprep.subr.mxu0 0.0
      %4178 = vmatpush1.msra.mxu0 0.0
      %4179 = vmatprep.subr.mxu0 0.0
      %4180 = vmatpush1.msra.mxu0 0.0
      %4181 = vmatprep.subr.mxu0 0.0
      %4182 = vmatpush1.msra.mxu0 0.0
      %4183 = vmatprep.subr.mxu0 0.0
      %4184 = vmatpush1.msra.mxu0 0.0
      %4185 = vmatprep.subr.mxu0 0.0
      %4186 = vmatpush1.msra.mxu0 0.0
      %4187 = vmatprep.subr.mxu0 0.0
      %4188 = vmatpush1.msra.mxu0 0.0
      %4189 = vmatprep.subr.mxu0 0.0
      %4190 = vmatpush1.msra.mxu0 0.0
      %4191 = vmatprep.subr.mxu0 0.0
      %4192 = vmatpush1.msra.mxu0 0.0
      %4193 = vmatprep.subr.mxu0 0.0
      %4194 = vmatpush1.msra.mxu0 0.0
      %4195 = vmatprep.subr.mxu0 0.0
      %4196 = vmatpush1.msra.mxu0 0.0
      %4197 = vmatprep.subr.mxu0 0.0
      %4198 = vmatpush1.msra.mxu0 0.0
      %4199 = vmatprep.subr.mxu0 0.0
      %4200 = vmatpush1.msra.mxu0 0.0
      %4201 = vmatprep.subr.mxu0 0.0
      %4202 = vmatpush1.msra.mxu0 0.0
      %4203 = vmatprep.subr.mxu0 0.0
      %4204 = vmatpush1.msra.mxu0 0.0
      %4205 = vmatprep.subr.mxu0 0.0
      %4206 = vmatpush1.msra.mxu0 0.0
      %4207 = vmatprep.subr.mxu0 0.0
      %4208 = vmatpush1.msra.mxu0 0.0
      %4209 = vmatprep.subr.mxu0 0.0
      %4210 = vmatpush1.msra.mxu0 0.0
      %4211 = vmatprep.subr.mxu0 0.0
      %4212 = vmatpush1.msra.mxu0 0.0
      %4213 = vmatprep.subr.mxu0 0.0
      %4214 = vmatpush1.msra.mxu0 0.0
      %4215 = vmatprep.subr.mxu0 0.0
      %4216 = vmatpush1.msra.mxu0 0.0
      %4217 = vmatprep.subr.mxu0 0.0
      %4218 = vmatpush1.msra.mxu0 0.0
      %4219 = vmatprep.subr.mxu0 0.0
      %4220 = vmatpush1.msra.mxu0 0.0
      %4221 = vmatprep.subr.mxu0 0.0
      %4222 = vmatpush1.msra.mxu0 0.0
      %4223 = vmatprep.subr.mxu0 0.0
      %4224 = vmatpush1.msra.mxu0 0.0
      %4225 = vmatprep.subr.mxu0 0.0
      %4226 = vmatpush1.msra.mxu0 0.0
      %4227 = vmatprep.subr.mxu0 0.0
      %4228 = vmatpush1.msra.mxu0 0.0
      %4229 = vmatprep.subr.mxu0 0.0
      %4230 = vmatpush1.msra.mxu0 0.0
      %4231 = vmatprep.subr.mxu0 0.0
      %4232 = vmatpush1.msra.mxu0 0.0
      %4233 = vmatprep.mubr.f32.mxu0 0.0
      %4234 = vmatmul.mubr.f32.gmra.mrb[0].mxu0 %v4025
      %v4235 = vpop.f32.mrb[0].mxu0
      %v4236 = vadd.f32 0.0, %v4235
      %v4237 = vpop.f32.mrb[0].mxu0
      %v4238 = vadd.f32 0.0, %v4237
      %4239 = vdwg.mxu0
      %v4240 = vadd.f32 %v3958, %v4094
      %v4241 = vadd.f32 %v3959, %v4096
      %v4242 = vadd.f32 %v3960, %v4165
      %v4243 = vadd.f32 %v3961, %v4167
      %v4244 = vadd.f32 %v3962, %v4236
      %v4245 = vadd.f32 %v3963, %v4238
      %4246 = vrot.lane.b32.xlu0 %v1996, 111
      %v4247 = vpop.permute.xlu0 %4246
      %4248 = vrot.lane.b32.xlu0 %v1997, 111
      %v4249 = vpop.permute.xlu0 %4248
      %4250 = vrot.lane.b32.xlu0 %v1998, 111
      %v4251 = vpop.permute.xlu0 %4250
      %4252 = vrot.lane.b32.xlu0 %v1999, 111
      %v4253 = vpop.permute.xlu0 %4252
      %4254 = vrot.lane.b32.xlu0 %v2000, 111
      %v4255 = vpop.permute.xlu0 %4254
      %4256 = vrot.lane.b32.xlu0 %v2001, 111
      %v4257 = vpop.permute.xlu0 %4256
      %v4258 = vsel %vm1659, %v4255, %v4257
      %v4259 = vsel %vm1659, %v4253, %v4255
      %v4260 = vsel %vm1659, %v4251, %v4253
      %v4261 = vsel %vm1659, %v4249, %v4251
      %v4262 = vsel %vm1659, %v4247, %v4249
      %v4263 = vsel %vm1659, %v4257, %v4247
      %v4264 = vld [vmem:[%s1666] ss:$8 sm:$0xf]
      %v4265 = vld [vmem:[%s1666] ss:$8 sm:$0x30]
      %v4266 = vor.u32 %v4264, %v4265
      %v4268 = vlaneseq
      %v4269 = vshrl.u32 %v4268, 7
      %v4270 = vsub.s32 0, %v4269
      %v4271 = vrot.slane %v4266, %v4270
      %v4272 = vlaneseq
      %v4273 = vshrl.u32 %v4272, 7
      %v4274 = vsub.s32 1, %v4273
      %v4275 = vrot.slane %v4266, %v4274
      %v4276 = vlaneseq
      %v4277 = vshrl.u32 %v4276, 7
      %v4278 = vsub.s32 2, %v4277
      %v4279 = vrot.slane %v4266, %v4278
      %v4280 = vlaneseq
      %v4281 = vshrl.u32 %v4280, 7
      %v4282 = vsub.s32 3, %v4281
      %v4283 = vrot.slane %v4266, %v4282
      %v4284 = vlaneseq
      %v4285 = vshrl.u32 %v4284, 7
      %v4286 = vsub.s32 4, %v4285
      %v4287 = vrot.slane %v4266, %v4286
      %v4288 = vlaneseq
      %v4289 = vshrl.u32 %v4288, 7
      %v4290 = vsub.s32 5, %v4289
      %v4291 = vrot.slane %v4266, %v4290
      %v4298 = vmul.f32 %v4262, %v4271
      %v4299 = vmul.f32 %v4261, %v4275
      %v4300 = vmul.f32 %v4260, %v4279
      %v4301 = vmul.f32 %v4259, %v4283
      %v4302 = vmul.f32 %v4258, %v4287
      %v4303 = vmul.f32 %v4263, %v4291
      %s4304 = scalar_lea.vmem %s3, 64
      %v4305 = vld [vmem:[%s4304] sm:$0xff]
      %v4307 = vsel %vm2067, %v4305, 0
      %4309 = vmatprep.subr.mxu0 %v4299
      %4310 = vmatpush1.msra.mxu0 %v4298
      %4311 = vmatprep.subr.mxu0 0.0
      %4312 = vmatpush1.msra.mxu0 0.0
      %4313 = vmatprep.subr.mxu0 0.0
      %4314 = vmatpush1.msra.mxu0 0.0
      %4315 = vmatprep.subr.mxu0 0.0
      %4316 = vmatpush1.msra.mxu0 0.0
      %4317 = vmatprep.subr.mxu0 0.0
      %4318 = vmatpush1.msra.mxu0 0.0
      %4319 = vmatprep.subr.mxu0 0.0
      %4320 = vmatpush1.msra.mxu0 0.0
      %4321 = vmatprep.subr.mxu0 0.0
      %4322 = vmatpush1.msra.mxu0 0.0
      %4323 = vmatprep.subr.mxu0 0.0
      %4324 = vmatpush1.msra.mxu0 0.0
      %4325 = vmatprep.subr.mxu0 0.0
      %4326 = vmatpush1.msra.mxu0 0.0
      %4327 = vmatprep.subr.mxu0 0.0
      %4328 = vmatpush1.msra.mxu0 0.0
      %4329 = vmatprep.subr.mxu0 0.0
      %4330 = vmatpush1.msra.mxu0 0.0
      %4331 = vmatprep.subr.mxu0 0.0
      %4332 = vmatpush1.msra.mxu0 0.0
      %4333 = vmatprep.subr.mxu0 0.0
      %4334 = vmatpush1.msra.mxu0 0.0
      %4335 = vmatprep.subr.mxu0 0.0
      %4336 = vmatpush1.msra.mxu0 0.0
      %4337 = vmatprep.subr.mxu0 0.0
      %4338 = vmatpush1.msra.mxu0 0.0
      %4339 = vmatprep.subr.mxu0 0.0
      %4340 = vmatpush1.msra.mxu0 0.0
      %4341 = vmatprep.subr.mxu0 0.0
      %4342 = vmatpush1.msra.mxu0 0.0
      %4343 = vmatprep.subr.mxu0 0.0
      %4344 = vmatpush1.msra.mxu0 0.0
      %4345 = vmatprep.subr.mxu0 0.0
      %4346 = vmatpush1.msra.mxu0 0.0
      %4347 = vmatprep.subr.mxu0 0.0
      %4348 = vmatpush1.msra.mxu0 0.0
      %4349 = vmatprep.subr.mxu0 0.0
      %4350 = vmatpush1.msra.mxu0 0.0
      %4351 = vmatprep.subr.mxu0 0.0
      %4352 = vmatpush1.msra.mxu0 0.0
      %4353 = vmatprep.subr.mxu0 0.0
      %4354 = vmatpush1.msra.mxu0 0.0
      %4355 = vmatprep.subr.mxu0 0.0
      %4356 = vmatpush1.msra.mxu0 0.0
      %4357 = vmatprep.subr.mxu0 0.0
      %4358 = vmatpush1.msra.mxu0 0.0
      %4359 = vmatprep.subr.mxu0 0.0
      %4360 = vmatpush1.msra.mxu0 0.0
      %4361 = vmatprep.subr.mxu0 0.0
      %4362 = vmatpush1.msra.mxu0 0.0
      %4363 = vmatprep.subr.mxu0 0.0
      %4364 = vmatpush1.msra.mxu0 0.0
      %4365 = vmatprep.subr.mxu0 0.0
      %4366 = vmatpush1.msra.mxu0 0.0
      %4367 = vmatprep.subr.mxu0 0.0
      %4368 = vmatpush1.msra.mxu0 0.0
      %4369 = vmatprep.subr.mxu0 0.0
      %4370 = vmatpush1.msra.mxu0 0.0
      %4371 = vmatprep.subr.mxu0 0.0
      %4372 = vmatpush1.msra.mxu0 0.0
      %4373 = vmatprep.mubr.f32.mxu0 0.0
      %4374 = vmatmul.mubr.f32.gmra.mrb[0].mxu0 %v4307
      %v4375 = vpop.f32.mrb[0].mxu0
      %v4376 = vadd.f32 0.0, %v4375
      %v4377 = vpop.f32.mrb[0].mxu0
      %v4378 = vadd.f32 0.0, %v4377
      %4379 = vdwg.mxu0
      %4380 = vmatprep.subr.mxu0 %v4301
      %4381 = vmatpush1.msra.mxu0 %v4300
      %4382 = vmatprep.subr.mxu0 0.0
      %4383 = vmatpush1.msra.mxu0 0.0
      %4384 = vmatprep.subr.mxu0 0.0
      %4385 = vmatpush1.msra.mxu0 0.0
      %4386 = vmatprep.subr.mxu0 0.0
      %4387 = vmatpush1.msra.mxu0 0.0
      %4388 = vmatprep.subr.mxu0 0.0
      %4389 = vmatpush1.msra.mxu0 0.0
      %4390 = vmatprep.subr.mxu0 0.0
      %4391 = vmatpush1.msra.mxu0 0.0
      %4392 = vmatprep.subr.mxu0 0.0
      %4393 = vmatpush1.msra.mxu0 0.0
      %4394 = vmatprep.subr.mxu0 0.0
      %4395 = vmatpush1.msra.mxu0 0.0
      %4396 = vmatprep.subr.mxu0 0.0
      %4397 = vmatpush1.msra.mxu0 0.0
      %4398 = vmatprep.subr.mxu0 0.0
      %4399 = vmatpush1.msra.mxu0 0.0
      %4400 = vmatprep.subr.mxu0 0.0
      %4401 = vmatpush1.msra.mxu0 0.0
      %4402 = vmatprep.subr.mxu0 0.0
      %4403 = vmatpush1.msra.mxu0 0.0
      %4404 = vmatprep.subr.mxu0 0.0
      %4405 = vmatpush1.msra.mxu0 0.0
      %4406 = vmatprep.subr.mxu0 0.0
      %4407 = vmatpush1.msra.mxu0 0.0
      %4408 = vmatprep.subr.mxu0 0.0
      %4409 = vmatpush1.msra.mxu0 0.0
      %4410 = vmatprep.subr.mxu0 0.0
      %4411 = vmatpush1.msra.mxu0 0.0
      %4412 = vmatprep.subr.mxu0 0.0
      %4413 = vmatpush1.msra.mxu0 0.0
      %4414 = vmatprep.subr.mxu0 0.0
      %4415 = vmatpush1.msra.mxu0 0.0
      %4416 = vmatprep.subr.mxu0 0.0
      %4417 = vmatpush1.msra.mxu0 0.0
      %4418 = vmatprep.subr.mxu0 0.0
      %4419 = vmatpush1.msra.mxu0 0.0
      %4420 = vmatprep.subr.mxu0 0.0
      %4421 = vmatpush1.msra.mxu0 0.0
      %4422 = vmatprep.subr.mxu0 0.0
      %4423 = vmatpush1.msra.mxu0 0.0
      %4424 = vmatprep.subr.mxu0 0.0
      %4425 = vmatpush1.msra.mxu0 0.0
      %4426 = vmatprep.subr.mxu0 0.0
      %4427 = vmatpush1.msra.mxu0 0.0
      %4428 = vmatprep.subr.mxu0 0.0
      %4429 = vmatpush1.msra.mxu0 0.0
      %4430 = vmatprep.subr.mxu0 0.0
      %4431 = vmatpush1.msra.mxu0 0.0
      %4432 = vmatprep.subr.mxu0 0.0
      %4433 = vmatpush1.msra.mxu0 0.0
      %4434 = vmatprep.subr.mxu0 0.0
      %4435 = vmatpush1.msra.mxu0 0.0
      %4436 = vmatprep.subr.mxu0 0.0
      %4437 = vmatpush1.msra.mxu0 0.0
      %4438 = vmatprep.subr.mxu0 0.0
      %4439 = vmatpush1.msra.mxu0 0.0
      %4440 = vmatprep.subr.mxu0 0.0
      %4441 = vmatpush1.msra.mxu0 0.0
      %4442 = vmatprep.subr.mxu0 0.0
      %4443 = vmatpush1.msra.mxu0 0.0
      %4444 = vmatprep.mubr.f32.mxu0 0.0
      %4445 = vmatmul.mubr.f32.gmra.mrb[0].mxu0 %v4307
      %v4446 = vpop.f32.mrb[0].mxu0
      %v4447 = vadd.f32 0.0, %v4446
      %v4448 = vpop.f32.mrb[0].mxu0
      %v4449 = vadd.f32 0.0, %v4448
      %4450 = vdwg.mxu0
      %4451 = vmatprep.subr.mxu0 %v4303
      %4452 = vmatpush1.msra.mxu0 %v4302
      %4453 = vmatprep.subr.mxu0 0.0
      %4454 = vmatpush1.msra.mxu0 0.0
      %4455 = vmatprep.subr.mxu0 0.0
      %4456 = vmatpush1.msra.mxu0 0.0
      %4457 = vmatprep.subr.mxu0 0.0
      %4458 = vmatpush1.msra.mxu0 0.0
      %4459 = vmatprep.subr.mxu0 0.0
      %4460 = vmatpush1.msra.mxu0 0.0
      %4461 = vmatprep.subr.mxu0 0.0
      %4462 = vmatpush1.msra.mxu0 0.0
      %4463 = vmatprep.subr.mxu0 0.0
      %4464 = vmatpush1.msra.mxu0 0.0
      %4465 = vmatprep.subr.mxu0 0.0
      %4466 = vmatpush1.msra.mxu0 0.0
      %4467 = vmatprep.subr.mxu0 0.0
      %4468 = vmatpush1.msra.mxu0 0.0
      %4469 = vmatprep.subr.mxu0 0.0
      %4470 = vmatpush1.msra.mxu0 0.0
      %4471 = vmatprep.subr.mxu0 0.0
      %4472 = vmatpush1.msra.mxu0 0.0
      %4473 = vmatprep.subr.mxu0 0.0
      %4474 = vmatpush1.msra.mxu0 0.0
      %4475 = vmatprep.subr.mxu0 0.0
      %4476 = vmatpush1.msra.mxu0 0.0
      %4477 = vmatprep.subr.mxu0 0.0
      %4478 = vmatpush1.msra.mxu0 0.0
      %4479 = vmatprep.subr.mxu0 0.0
      %4480 = vmatpush1.msra.mxu0 0.0
      %4481 = vmatprep.subr.mxu0 0.0
      %4482 = vmatpush1.msra.mxu0 0.0
      %4483 = vmatprep.subr.mxu0 0.0
      %4484 = vmatpush1.msra.mxu0 0.0
      %4485 = vmatprep.subr.mxu0 0.0
      %4486 = vmatpush1.msra.mxu0 0.0
      %4487 = vmatprep.subr.mxu0 0.0
      %4488 = vmatpush1.msra.mxu0 0.0
      %4489 = vmatprep.subr.mxu0 0.0
      %4490 = vmatpush1.msra.mxu0 0.0
      %4491 = vmatprep.subr.mxu0 0.0
      %4492 = vmatpush1.msra.mxu0 0.0
      %4493 = vmatprep.subr.mxu0 0.0
      %4494 = vmatpush1.msra.mxu0 0.0
      %4495 = vmatprep.subr.mxu0 0.0
      %4496 = vmatpush1.msra.mxu0 0.0
      %4497 = vmatprep.subr.mxu0 0.0
      %4498 = vmatpush1.msra.mxu0 0.0
      %4499 = vmatprep.subr.mxu0 0.0
      %4500 = vmatpush1.msra.mxu0 0.0
      %4501 = vmatprep.subr.mxu0 0.0
      %4502 = vmatpush1.msra.mxu0 0.0
      %4503 = vmatprep.subr.mxu0 0.0
      %4504 = vmatpush1.msra.mxu0 0.0
      %4505 = vmatprep.subr.mxu0 0.0
      %4506 = vmatpush1.msra.mxu0 0.0
      %4507 = vmatprep.subr.mxu0 0.0
      %4508 = vmatpush1.msra.mxu0 0.0
      %4509 = vmatprep.subr.mxu0 0.0
      %4510 = vmatpush1.msra.mxu0 0.0
      %4511 = vmatprep.subr.mxu0 0.0
      %4512 = vmatpush1.msra.mxu0 0.0
      %4513 = vmatprep.subr.mxu0 0.0
      %4514 = vmatpush1.msra.mxu0 0.0
      %4515 = vmatprep.mubr.f32.mxu0 0.0
      %4516 = vmatmul.mubr.f32.gmra.mrb[0].mxu0 %v4307
      %v4517 = vpop.f32.mrb[0].mxu0
      %v4518 = vadd.f32 0.0, %v4517
      %v4519 = vpop.f32.mrb[0].mxu0
      %v4520 = vadd.f32 0.0, %v4519
      %4521 = vdwg.mxu0
      %v4522 = vadd.f32 %v4240, %v4376
      %v4523 = vadd.f32 %v4241, %v4378
      %v4524 = vadd.f32 %v4242, %v4447
      %v4525 = vadd.f32 %v4243, %v4449
      %v4526 = vadd.f32 %v4244, %v4518
      %v4527 = vadd.f32 %v4245, %v4520
      %v4528 = vadd.f32 %v4522, %v4526
      %v4529 = vadd.f32 %v4523, %v4527
      %v4530 = vadd.f32 %v4524, %v4522
      %v4531 = vadd.f32 %v4525, %v4523
      %v4532 = vadd.f32 %v4526, %v4524
      %v4533 = vadd.f32 %v4527, %v4525
      %v4534 = vadd.f32 %v4528, %v4524
      %v4535 = vadd.f32 %v4529, %v4525
      %v4536 = vadd.f32 %v4530, %v4526
      %v4537 = vadd.f32 %v4531, %v4527
      %v4538 = vadd.f32 %v4532, %v4522
      %v4539 = vadd.f32 %v4533, %v4523
      %v4540 = vmul.f32 %v4534, 0.33333334
      %v4541 = vmul.f32 %v4535, 0.33333334
      %v4542 = vmul.f32 %v4536, 0.33333334
      %v4543 = vmul.f32 %v4537, 0.33333334
      %v4544 = vmul.f32 %v4538, 0.33333334
      %v4545 = vmul.f32 %v4539, 0.33333334
      %v4546 = vsub.f32 %v4522, %v4540
      %v4547 = vsub.f32 %v4523, %v4541
      %v4548 = vsub.f32 %v4524, %v4542
      %v4549 = vsub.f32 %v4525, %v4543
      %v4550 = vsub.f32 %v4526, %v4544
      %v4551 = vsub.f32 %v4527, %v4545
      %v4558 = vcombine.low %v4546, %v4547
      %v4559 = vcombine.low %v4548, %v4549
      %v4561 = vunpack.c.l.s4 1983009808
      %v4562 = vunpack.c.0.s8 %v4561
      %v4563 = vlaneseq
      %v4564 = vshrl.u32 %v4563, 7
      %v4565 = vsub.s32 %v4562, %v4564
      %v4566 = vrot.slane %v4558, %v4565
      %v4568 = vunpack.c.l.s4 1983009808
      %v4569 = vunpack.c.0.s8 %v4568
      %v4570 = vlaneseq
      %v4571 = vshrl.u32 %v4570, 7
      %v4572 = vsub.s32 %v4569, %v4571
      %v4573 = vrot.slane %v4559, %v4572
      %v4574 = vcombine.low %v4566, %v4573
      %v4575 = vcombine.low %v4550, %v4551
      %v4577 = vunpack.c.l.s4 1983009808
      %v4578 = vunpack.c.0.s8 %v4577
      %v4579 = vlaneseq
      %v4580 = vshrl.u32 %v4579, 7
      %v4581 = vsub.s32 %v4578, %v4580
      %v4582 = vrot.slane %v4575, %v4581
      %4585 = vst [vmem:[%s256] sm:$0xff] %v4574
      %4586 = vst [vmem:[%s256 + $0x8] sm:$0xf] %v4582
      %vm4587 = vcmask 1045506
      %v4588 = vsel %vm4587, %v4522, -inf
      %v4589 = vrot.slane %v4588, 4
      %v4590 = vmax.f32 %v4588, %v4589
      %v4591 = vrot.slane %v4590, 2
      %v4592 = vmax.f32 %v4590, %v4591
      %v4593 = vrot.slane %v4592, 1
      %v4594 = vmax.f32 %v4592, %v4593
      %v4595 = vsel %vm4587, %v4523, -inf
      %v4596 = vrot.slane %v4595, 4
      %v4597 = vmax.f32 %v4595, %v4596
      %v4598 = vrot.slane %v4597, 2
      %v4599 = vmax.f32 %v4597, %v4598
      %v4600 = vrot.slane %v4599, 1
      %v4601 = vmax.f32 %v4599, %v4600
      %v4602 = vsel %vm4587, %v4524, -inf
      %v4603 = vrot.slane %v4602, 4
      %v4604 = vmax.f32 %v4602, %v4603
      %v4605 = vrot.slane %v4604, 2
      %v4606 = vmax.f32 %v4604, %v4605
      %v4607 = vrot.slane %v4606, 1
      %v4608 = vmax.f32 %v4606, %v4607
      %v4609 = vsel %vm4587, %v4525, -inf
      %v4610 = vrot.slane %v4609, 4
      %v4611 = vmax.f32 %v4609, %v4610
      %v4612 = vrot.slane %v4611, 2
      %v4613 = vmax.f32 %v4611, %v4612
      %v4614 = vrot.slane %v4613, 1
      %v4615 = vmax.f32 %v4613, %v4614
      %v4616 = vsel %vm4587, %v4526, -inf
      %v4617 = vrot.slane %v4616, 4
      %v4618 = vmax.f32 %v4616, %v4617
      %v4619 = vrot.slane %v4618, 2
      %v4620 = vmax.f32 %v4618, %v4619
      %v4621 = vrot.slane %v4620, 1
      %v4622 = vmax.f32 %v4620, %v4621
      %v4623 = vsel %vm4587, %v4527, -inf
      %v4624 = vrot.slane %v4623, 4
      %v4625 = vmax.f32 %v4623, %v4624
      %v4626 = vrot.slane %v4625, 2
      %v4627 = vmax.f32 %v4625, %v4626
      %v4628 = vrot.slane %v4627, 1
      %v4629 = vmax.f32 %v4627, %v4628
      %v4630 = vsub.f32 %v4522, %v4594
      %v4631 = vsub.f32 %v4523, %v4601
      %v4632 = vsub.f32 %v4524, %v4608
      %v4633 = vsub.f32 %v4525, %v4615
      %v4634 = vsub.f32 %v4526, %v4622
      %v4635 = vsub.f32 %v4527, %v4629
      %v4636 = vmul.f32 %v4630, 1.442695
      %v4637 = vpow.pop %v4636
      %v4638 = vmul.f32 %v4631, 1.442695
      %v4639 = vpow.pop %v4638
      %v4640 = vmul.f32 %v4632, 1.442695
      %v4641 = vpow.pop %v4640
      %v4642 = vmul.f32 %v4633, 1.442695
      %v4643 = vpow.pop %v4642
      %v4644 = vmul.f32 %v4634, 1.442695
      %v4645 = vpow.pop %v4644
      %v4646 = vmul.f32 %v4635, 1.442695
      %v4647 = vpow.pop %v4646
      %v4654 = vrot.slane %v4637, 2
      %v4655 = vrot.slane %v4639, 2
      %v4656 = vrot.slane %v4641, 2
      %v4657 = vrot.slane %v4643, 2
      %v4658 = vrot.slane %v4645, 2
      %v4659 = vrot.slane %v4647, 2
      %vm4666 = vcmask 1043456
      %v4667 = vsel %vm4666, %v4654, 0.0
      %v4668 = vrot.slane %v4667, 4
      %v4669 = vadd.f32 %v4667, %v4668
      %v4670 = vrot.slane %v4669, 2
      %v4671 = vadd.f32 %v4669, %v4670
      %v4672 = vrot.slane %v4671, 1
      %v4673 = vadd.f32 %v4671, %v4672
      %v4674 = vsel %vm4666, %v4655, 0.0
      %v4675 = vrot.slane %v4674, 4
      %v4676 = vadd.f32 %v4674, %v4675
      %v4677 = vrot.slane %v4676, 2
      %v4678 = vadd.f32 %v4676, %v4677
      %v4679 = vrot.slane %v4678, 1
      %v4680 = vadd.f32 %v4678, %v4679
      %v4681 = vsel %vm4666, %v4656, 0.0
      %v4682 = vrot.slane %v4681, 4
      %v4683 = vadd.f32 %v4681, %v4682
      %v4684 = vrot.slane %v4683, 2
      %v4685 = vadd.f32 %v4683, %v4684
      %v4686 = vrot.slane %v4685, 1
      %v4687 = vadd.f32 %v4685, %v4686
      %v4688 = vsel %vm4666, %v4657, 0.0
      %v4689 = vrot.slane %v4688, 4
      %v4690 = vadd.f32 %v4688, %v4689
      %v4691 = vrot.slane %v4690, 2
      %v4692 = vadd.f32 %v4690, %v4691
      %v4693 = vrot.slane %v4692, 1
      %v4694 = vadd.f32 %v4692, %v4693
      %v4695 = vsel %vm4666, %v4658, 0.0
      %v4696 = vrot.slane %v4695, 4
      %v4697 = vadd.f32 %v4695, %v4696
      %v4698 = vrot.slane %v4697, 2
      %v4699 = vadd.f32 %v4697, %v4698
      %v4700 = vrot.slane %v4699, 1
      %v4701 = vadd.f32 %v4699, %v4700
      %v4702 = vsel %vm4666, %v4659, 0.0
      %v4703 = vrot.slane %v4702, 4
      %v4704 = vadd.f32 %v4702, %v4703
      %v4705 = vrot.slane %v4704, 2
      %v4706 = vadd.f32 %v4704, %v4705
      %v4707 = vrot.slane %v4706, 1
      %v4708 = vadd.f32 %v4706, %v4707
      %v4709 = vrcp.pop %v4673
      %v4710 = vmul.f32 %v4637, %v4709
      %v4711 = vrcp.pop %v4680
      %v4712 = vmul.f32 %v4639, %v4711
      %v4713 = vrcp.pop %v4687
      %v4714 = vmul.f32 %v4641, %v4713
      %v4715 = vrcp.pop %v4694
      %v4716 = vmul.f32 %v4643, %v4715
      %v4717 = vrcp.pop %v4701
      %v4718 = vmul.f32 %v4645, %v4717
      %v4719 = vrcp.pop %v4708
      %v4720 = vmul.f32 %v4647, %v4719
      %v4727 = vcombine.low %v4710, %v4712
      %v4728 = vcombine.high %v4710, %v4712
      %v4729 = vcombine.low %v4714, %v4716
      %v4730 = vcombine.high %v4714, %v4716
      %v4731 = vcombine.low %v4718, %v4720
      %v4732 = vcombine.high %v4718, %v4720
      %vm4733 = vcmask 1041408
      %vm4734 = vcmask 1045508
      %vm4735 = vmor %vm4733, %vm4734
      %v4736 = vrot.slane %v4727, 6
      %v4737 = vrot.slane %v4736, 4
      %v4738 = vrot.slane %v4728, 6
      %v4739 = vsel %vm4735, %v4737, %v4738
      %v4740 = vrot.slane %v4729, 6
      %v4741 = vrot.slane %v4740, 4
      %v4742 = vrot.slane %v4730, 6
      %v4743 = vsel %vm4735, %v4741, %v4742
      %v4744 = vrot.slane %v4731, 6
      %v4745 = vrot.slane %v4744, 4
      %v4746 = vrot.slane %v4732, 6
      %v4747 = vsel %vm4735, %v4745, %v4746
      %4751 = vst [vmem:[%s261] sm:$0xff] %v4739
      %4752 = vst [vmem:[%s261 + $0x8] sm:$0xff] %v4743
      %4753 = vst [vmem:[%s261 + $0x10] sm:$0xff] %v4747
      %p4754 = scmp.lt.s32.totalorder %s18, 1
      %s4755 = scalar_select %p4754, %s18, 1
      %s4756 = smul.addr %s4755, 6
      %s4757 = smul.addr %s4756, 2
      %s4758 = scalar_lea.vmem %s5, %s4757
      %p4759 = scmp.lt.s32.totalorder %s18, 1
      %s4760 = scalar_select %p4759, %s18, 1
      %s4761 = smul.addr %s4760, 6
      %s4762 = smul.addr %s4761, 4
      %s4763 = scalar_lea.vmem %s6, %s4762
      // Predicated region
      $region41: #{fwd.1} parent=39 // pred_check
        %p4764 = pneg %p146
      $region42: #{fwd.1} parent=39 // pred_check_branch
        %4766 = sbr.rel (%p4764) target = $region44
      $region43: #{fwd.1} parent=39 // pred_region
        _
      $region44: #{fwd.1} parent=39 // pred_fallthru
        _
      // Predicated region
      $region45: #{fwd.1} parent=39 // pred_check
        %p4767 = pneg %p172
      $region46: #{fwd.1} parent=39 // pred_check_branch
        %4769 = sbr.rel (%p4767) target = $region48
      $region47: #{fwd.1} parent=39 // pred_region
        _
      $region48: #{fwd.1} parent=39 // pred_fallthru
        _
    $region40: #{fwd.1} parent=5 // pred_fallthru
      _
    %p4770 = scmp.le.s32.totalorder 2, %s13
    // Predicated region
    $region49: #{fwd.1} parent=5 // pred_check
      %p4771 = pneg %p4770
    $region50: #{fwd.1} parent=5 // pred_check_branch
      %4773 = sbr.rel (%p4771) target = $region52
    $region51: #{fwd.1} parent=5 // pred_region
      %s4774 = ssub.s32 %s13, 2
      // Predicated region
      $region53: #{fwd.1} parent=51 // pred_check
        %p4775 = pneg %p152
      $region54: #{fwd.1} parent=51 // pred_check_branch
        %4777 = sbr.rel (%p4775) target = $region56
      $region55: #{fwd.1} parent=51 // pred_region
        %p4778 = scmp.lt.s32.totalorder %s19, 1
        %s4779 = scalar_select %p4778, %s19, 1
        %s4780 = smul.addr %s4779, 6
        %s4781 = smul.addr %s4780, 2
        %s4782 = scalar_lea.vmem %s5, %s4781
      $region56: #{fwd.1} parent=51 // pred_fallthru
        _
      // Predicated region
      $region57: #{fwd.1} parent=51 // pred_check
        %p4783 = pneg %p178
      $region58: #{fwd.1} parent=51 // pred_check_branch
        %4785 = sbr.rel (%p4783) target = $region60
      $region59: #{fwd.1} parent=51 // pred_region
        %p4786 = scmp.lt.s32.totalorder %s19, 1
        %s4787 = scalar_select %p4786, %s19, 1
        %s4788 = smul.addr %s4787, 6
        %s4789 = smul.addr %s4788, 4
        %s4790 = scalar_lea.vmem %s6, %s4789
      $region60: #{fwd.1} parent=51 // pred_fallthru
        _
    $region52: #{fwd.1} parent=5 // pred_fallthru
      _
  $region6: #{fwd.1} parent=0 // loop_footer
    %s17 = sadd.s32 1, %s13
  $region7: #{fwd.1} parent=0 // loop_footer_branch
    %12 = sbr.rel target = $region3
  $region8: #{fwd.1} parent=0 // loop_exit
    _

</llo_original>
